<compile_context>
chip_gen: v6e
topology: v6e:2x2x1
jax: 0.10.0
libtpu: 0.0.40
codegen_flags: <defaults>
</compile_context>

<pallas_src>
import math

import numpy as np
import jax
import jax.numpy as jnp
from jax.experimental import pallas as pl
from jax.experimental.pallas import tpu as pltpu

# Small synthetic shapes, lane-dense hidden (roberta-base would be H=768, S=512).
H = 128            # roberta_hidden_size (multiple of 128 -> lane-dense)
S = 16             # max_seq_length
VOCAB = 64
FFN = 4 * H
H1 = H // 2        # mlp_hidden_size_1
H2 = H1 // 2       # mlp_hidden_size_2
T_MAX = 4          # max dialog turns handled by the single compiled kernel
NEG = -1e30

# ---- bf16 weight-slab row offsets (every block stored at lane width H=128) ----
R_WQ, R_WK, R_WV, R_WO = 0 * H, 1 * H, 2 * H, 3 * H
R_W1 = 4 * H        # 4 chunks: W1[:, c*128:(c+1)*128]
R_W2 = 8 * H        # 4 chunks: W2[c*128:(c+1)*128, :]
R_WP = 12 * H
R_WTM = 13 * H      # turn_mlp weight, mean half
R_WTX = 14 * H      # turn_mlp weight, max half
R_WD1M = 15 * H     # diag_mlp L1 weight, mean half (cols >= H1 zero)
R_WD1X = 16 * H     # diag_mlp L1 weight, max half  (cols >= H1 zero)
R_WD2 = 17 * H      # diag_mlp L2 weight (real block [0:H1, 0:H2])
RW_ROWS = 18 * H

# ---- f32 param-slab rows ----
F_BQ, F_BK, F_BV, F_BO = 0, 1, 2, 3
F_G1, F_BE1 = 4, 5
F_B1 = 6            # 4 rows (FFN bias chunks)
F_B2, F_G2, F_BE2 = 10, 11, 12
F_BP, F_BT = 13, 14
F_BD1, F_BD2 = 15, 16
F_WD3, F_BD3 = 17, 18
NF_ROWS = 24        # padded to a multiple of 8 sublanes


# ----------------------------- in-kernel helpers --------------------------------

def _elu(x):
    # ELU(alpha=1): x if x > 0 else exp(x) - 1   (f32 elementwise)
    return jnp.where(x > 0, x, jnp.exp(jnp.minimum(x, 0.0)) - 1.0)


def _layer_norm(x, g, b, eps=1e-5):
    mu = jnp.mean(x, axis=-1, keepdims=True)
    var = jnp.mean((x - mu) ** 2, axis=-1, keepdims=True)
    return (x - mu) * jax.lax.rsqrt(var + eps) * g + b


def _gelu(x):
    # tanh-approx GELU (f32)
    return 0.5 * x * (1.0 + jnp.tanh(0.7978845608028654 * (x + 0.044715 * x * x * x)))


def _dotb(a_f32, w_bf16):
    # bf16 MXU operands, f32 accumulation; elementwise math stays f32.
    return jnp.dot(a_f32.astype(jnp.bfloat16), w_bf16,
                   preferred_element_type=jnp.float32)


# ------------------------------- fused kernel -----------------------------------

def _fused_kernel(x_ref, dial_ref, maxb_ref, w_ref, f_ref, out_ref):
    frow = lambda r: f_ref[r:r + 1, :]           # (1, H) f32 param row (static slice)
    x = x_ref[...]                               # (S, H) f32: emb[ids] + pos

    # ---------- synthetic single-layer single-head encoder ----------
    q = _dotb(x, w_ref[R_WQ:R_WQ + H, :]) + frow(F_BQ)   # Wq/bq pre-scaled 1/sqrt(H)
    k = _dotb(x, w_ref[R_WK:R_WK + H, :]) + frow(F_BK)
    v = _dotb(x, w_ref[R_WV:R_WV + H, :]) + frow(F_BV)

    # q @ k^T without materializing a transposed K
    scores = jax.lax.dot_general(
        q.astype(jnp.bfloat16), k.astype(jnp.bfloat16),
        (((1,), (1,)), ((), ())), preferred_element_type=jnp.float32)   # (S, S)
    scores = scores + dial_ref[0:1, :]                   # attention-mask bias row
    scores = scores - jnp.max(scores, axis=-1, keepdims=True)
    p = jnp.exp(scores)
    p = p * pl.reciprocal(jnp.sum(p, axis=-1, keepdims=True), approx=True)
    ctx = jnp.dot(p.astype(jnp.bfloat16), v.astype(jnp.bfloat16),
                  preferred_element_type=jnp.float32)                   # (S, H)

    attn_out = _dotb(ctx, w_ref[R_WO:R_WO + H, :]) + frow(F_BO)
    h_mid = _layer_norm(x + attn_out, frow(F_G1), frow(F_BE1))

    # FFN in width-128 chunks (no (S, 4H) temp; dense width-128 weight blocks)
    h_mid_b = h_mid.astype(jnp.bfloat16)
    ffn = jnp.zeros((S, H), jnp.float32)
    for c in range(FFN // H):
        fc = jnp.dot(h_mid_b, w_ref[R_W1 + c * H:R_W1 + (c + 1) * H, :],
                     preferred_element_type=jnp.float32) + frow(F_B1 + c)
        fc = _gelu(fc)
        ffn = ffn + jnp.dot(fc.astype(jnp.bfloat16),
                            w_ref[R_W2 + c * H:R_W2 + (c + 1) * H, :],
                            preferred_element_type=jnp.float32)
    ffn = ffn + frow(F_B2)
    h_last = _layer_norm(h_mid + ffn, frow(F_G2), frow(F_BE2))           # (S, H)

    out_ref[0:S, :] = h_last                                             # last_hidden_state
    cls = h_last[0:1, :]
    pooled = jnp.tanh(_dotb(cls, w_ref[R_WP:R_WP + H, :]) + frow(F_BP))
    out_ref[S:S + 1, :] = pooled                                         # pooler_output

    # ---------- dialog head: turn pooling + turn_mlp + diag_mlp ----------
    seg_scaled = dial_ref[1:1 + T_MAX, :]              # (T_MAX, S): 1/count rows, 0 = padded
    valid = (jnp.sum(seg_scaled, axis=-1, keepdims=True) > 0.5
             ).astype(jnp.float32)                     # (T_MAX, 1)

    # all segment means in one MXU matmul (1/count baked into the host mask)
    seg_means = jnp.dot(seg_scaled.astype(jnp.bfloat16),
                        h_last.astype(jnp.bfloat16),
                        preferred_element_type=jnp.float32)              # (T_MAX, H)
    # turn_mlp applied to concat(mean, max) == mean-half matmul + max-half matmul
    pre_mean = _dotb(seg_means, w_ref[R_WTM:R_WTM + H, :]) + frow(F_BT)  # (T_MAX, H)

    wtx = w_ref[R_WTX:R_WTX + H, :]
    diag_sum = cls                                   # running sum of diag_rep rows
    diag_max = cls                                   # running max of diag_rep rows
    for t in range(T_MAX):
        # segment max via host-built (S,1) 0/-1e30 bias column (no (T,S,H) temp)
        seg_max_t = jnp.max(h_last + maxb_ref[:, t:t + 1],
                            axis=0, keepdims=True)                       # (1, H)
        turn_t = _elu(pre_mean[t:t + 1, :] + _dotb(seg_max_t, wtx))      # (1, H)
        v_t = valid[t:t + 1, :]                                          # (1, 1)
        diag_sum = diag_sum + turn_t * v_t
        diag_max = jnp.maximum(diag_max, jnp.where(v_t > 0.5, turn_t, NEG))

    cnt = 1.0 + jnp.sum(valid, axis=0, keepdims=True)    # (1, 1) = num_turns + 1
    diag1 = diag_sum / cnt
    # diag_mlp layer 1: concat(diag1, diag_max) @ Wd1 as two half matmuls (no concat copy)
    d1 = _elu(_dotb(diag1, w_ref[R_WD1M:R_WD1M + H, :])
              + _dotb(diag_max, w_ref[R_WD1X:R_WD1X + H, :]) + frow(F_BD1))  # (1,H)
    d2 = _elu(_dotb(d1, w_ref[R_WD2:R_WD2 + H, :]) + frow(F_BD2))            # (1,H)
    z = jnp.sum(d2 * frow(F_WD3), axis=-1, keepdims=True) \
        + f_ref[F_BD3:F_BD3 + 1, 0:1]                                        # (1,1)
    score = 1.0 / (1.0 + jnp.exp(-z))                                        # Sigmoid
    out_ref[S + 1:S + 2, :] = score * jnp.ones((1, H), jnp.float32)
    out_ref[S + 2:S + 8, :] = jnp.zeros((6, H), jnp.float32)


# ------------------------------ pallas_call wrapper -------------------------------

def _fused_call_impl(x0, dial, maxb, wslab, fslab):
    B = x0.shape[0]
    return pl.pallas_call(
        _fused_kernel,
        out_shape=jax.ShapeDtypeStruct((B, S + 8, H), jnp.float32),
        grid=(B,),
        in_specs=[
            pl.BlockSpec((None, S, H), lambda b: (b, 0, 0)),           # per-dialog tokens
            pl.BlockSpec((None, 1 + T_MAX, S), lambda b: (b, 0, 0)),   # mask + seg rows
            pl.BlockSpec((None, S, T_MAX), lambda b: (b, 0, 0)),       # max-bias columns
            pl.BlockSpec((RW_ROWS, H), lambda b: (0, 0)),              # bf16 weight slab
            pl.BlockSpec((NF_ROWS, H), lambda b: (0, 0)),              # f32 param slab
        ],
        out_specs=pl.BlockSpec((None, S + 8, H), lambda b: (b, 0, 0)),
        compiler_params=pltpu.CompilerParams(
            dimension_semantics=("parallel",)),
    )(x0, dial, maxb, wslab, fslab)


_fused_call = jax.jit(_fused_call_impl)   # one executable for every dialog / turn layout


# ------------------------------ host-side helpers ----------------------------------

def _build_dialog_tensors(attention_mask_np, indice):
    """Replicates the python loop over `indice` and builds fixed-T_MAX masks."""
    left = 0
    segments = []
    for i in indice:
        right = int(i)
        if right == 1:
            break
        if right == left + 1:
            left = right
            continue
        segments.append((left + 1, right))            # tokens [left+1, right)
        left = right
    assert len(segments) <= T_MAX, "increase T_MAX"

    dial = np.zeros((1 + T_MAX, S), np.float32)
    dial[0, :] = (attention_mask_np[0].astype(np.float32) - 1.0) * 1e9  # mask bias
    maxb = np.zeros((S, T_MAX), np.float32)           # padded turns stay all-zero
    for t, (lo, hi) in enumerate(segments):
        dial[1 + t, lo:hi] = 1.0 / float(hi - lo)     # 1/count baked into the mean mask
        maxb[:, t] = NEG
        maxb[lo:hi, t] = 0.0                          # 0 inside segment, -1e30 outside
    return dial, maxb


def roberta_metric_forward(input_ids, attention_mask, indice, params):
    """Mirrors RoBERTaMetric.forward for batch=1; one fused pallas_call."""
    emb_table, pos_table, wslab, fslab = params

    ids = jnp.asarray(input_ids[0], jnp.int32)
    x0 = (jnp.take(emb_table, ids, axis=0) + pos_table).reshape(1, S, H)  # host gather

    dial_np, maxb_np = _build_dialog_tensors(np.asarray(attention_mask), indice)
    dial = jnp.asarray(dial_np)[None]     # (1, 1+T_MAX, S)
    maxb = jnp.asarray(maxb_np)[None]     # (1, S, T_MAX)

    out = _fused_call(x0, dial, maxb, wslab, fslab)   # (1, S+8, H)
    last_hidden = out[0, 0:S, :]
    pooled = out[0, S:S + 1, :]
    diag_score = out[0, S + 1, 0:1]

    score = jnp.array([0], dtype=jnp.int32)           # score = torch.tensor([0])
    output_dict = {"last_hidden_state": last_hidden, "pooler_output": pooled}
    return output_dict, score, diag_score


# ------------------------------ parameter init -----------------------------------

def init_params(key):
    def nrm(k, shape):
        return 0.02 * jax.random.normal(k, shape, jnp.float32)

    ks = jax.random.split(key, 16)

    emb_table = nrm(ks[0], (VOCAB, H))
    pos_table = nrm(ks[1], (S, H))

    # synthetic-encoder weights
    wq, wk, wv = nrm(ks[2], (H, H)), nrm(ks[3], (H, H)), nrm(ks[4], (H, H))
    wo = nrm(ks[5], (H, H))
    w1 = nrm(ks[6], (H, FFN))
    w2 = nrm(ks[7], (FFN, H))
    wp = nrm(ks[8], (H, H))
    # head weights: turn_mlp Linear(2H,H)+ELU; diag_mlp Linear(2H,H1)+ELU,
    #               Linear(H1,H2)+ELU, Linear(H2,1)+Sigmoid
    wt = nrm(ks[9], (2 * H, H))
    wd1 = nrm(ks[10], (2 * H, H1))
    wd2 = nrm(ks[11], (H1, H2))
    wd3 = nrm(ks[12], (H2, 1))
    bt = nrm(ks[13], (H,))
    bd1 = nrm(ks[14], (H1,))
    bd2 = nrm(ks[15], (H2,))
    bd3 = 0.01

    inv_sqrt_h = 1.0 / math.sqrt(H)                    # fold 1/sqrt(H) into Wq

    # ---- pack the bf16 weight slab (RW_ROWS, 128) ----
    wrows = np.zeros((RW_ROWS, H), np.float32)

    def put(r0, m):
        m = np.asarray(m, np.float32)
        wrows[r0:r0 + m.shape[0], 0:m.shape[1]] = m

    put(R_WQ, np.asarray(wq) * inv_sqrt_h)
    put(R_WK, wk)
    put(R_WV, wv)
    put(R_WO, wo)
    w1_np, w2_np = np.asarray(w1), np.asarray(w2)
    for c in range(FFN // H):
        put(R_W1 + c * H, w1_np[:, c * H:(c + 1) * H])
        put(R_W2 + c * H, w2_np[c * H:(c + 1) * H, :])
    put(R_WP, wp)
    wt_np, wd1_np = np.asarray(wt), np.asarray(wd1)
    put(R_WTM, wt_np[:H, :])
    put(R_WTX, wt_np[H:, :])
    put(R_WD1M, wd1_np[:H, :])        # cols >= H1 stay zero
    put(R_WD1X, wd1_np[H:, :])
    put(R_WD2, wd2)                   # real block [0:H1, 0:H2], rest zero
    wslab = jnp.asarray(wrows, jnp.bfloat16)

    # ---- pack the f32 bias/LN/vector slab (NF_ROWS, 128) ----
    frows = np.zeros((NF_ROWS, H), np.float32)
    frows[F_G1, :] = 1.0              # LayerNorm gammas; all biases zero at init
    frows[F_G2, :] = 1.0
    frows[F_BT, :] = np.asarray(bt)
    frows[F_BD1, 0:H1] = np.asarray(bd1)
    frows[F_BD2, 0:H2] = np.asarray(bd2)
    frows[F_WD3, 0:H2] = np.asarray(wd3)[:, 0]
    frows[F_BD3, 0] = bd3
    fslab = jnp.asarray(frows, jnp.float32)

    return emb_table, pos_table, wslab, fslab


# ----------------------------------- main -----------------------------------------

if __name__ == "__main__":
    key = jax.random.PRNGKey(0)
    k_ids, k_params = jax.random.split(key)

    params = init_params(k_params)

    # inputs: tokenized dialog, batch=1, seq=S
    input_ids = jax.random.randint(k_ids, (1, S), 0, VOCAB, dtype=jnp.int32)
    attention_mask = jnp.ones((1, S), jnp.int32)
    # SEP-token positions (ts_sep from encode_dialog); trailing 1.0 terminates the loop.
    indice = [4.0, 9.0, 14.0, 1.0]

    output_dict, score, diag_score = roberta_metric_forward(
        input_ids, attention_mask, indice, params)

    jax.block_until_ready((output_dict["last_hidden_state"],
                           output_dict["pooler_output"], score, diag_score))
    assert output_dict["last_hidden_state"].shape == (S, H)
    assert output_dict["pooler_output"].shape == (1, H)
    assert diag_score.shape == (1,)
    assert bool(jnp.all(jnp.isfinite(output_dict["last_hidden_state"])))
    assert bool(jnp.all((diag_score > 0.0) & (diag_score < 1.0)))
    print("KERNEL_OK")
</pallas_src>

<mosaic_0001>
module attributes {stable_mosaic.version = 11 : i64} {
  func.func @_fused_kernel(%arg0: i32, %arg1: memref<1x16x128xf32, #tpu.memory_space<vmem>>, %arg2: memref<1x5x16xf32, #tpu.memory_space<vmem>>, %arg3: memref<1x16x4xf32, #tpu.memory_space<vmem>>, %arg4: memref<2304x128xbf16, #tpu.memory_space<vmem>>, %arg5: memref<24x128xf32, #tpu.memory_space<vmem>>, %arg6: memref<1x24x128xf32, #tpu.memory_space<vmem>>) attributes {dimension_semantics = [#tpu.dimension_semantics<parallel>], iteration_bounds = array<i64: 1>, scalar_prefetch = 0 : i64, scratch_operands = 0 : i64, tpu.core_type = #tpu.core_type<tc>, window_params = [{transform_indices = @transform_0, window_bounds = array<i64: 1, 16, 128>}, {transform_indices = @transform_1, window_bounds = array<i64: 1, 5, 16>}, {transform_indices = @transform_2, window_bounds = array<i64: 1, 16, 4>}, {pipeline_mode = #tpu.pipeline_mode<synchronous>, transform_indices = @transform_3, window_bounds = array<i64: 2304, 128>}, {pipeline_mode = #tpu.pipeline_mode<synchronous>, transform_indices = @transform_4, window_bounds = array<i64: 24, 128>}, {transform_indices = @transform_5, window_bounds = array<i64: 1, 24, 128>}]} {
    %c0 = arith.constant 0 : index
    %c0_0 = arith.constant 0 : index
    %c0_1 = arith.constant 0 : index
    %0 = vector.load %arg1[%c0, %c0_0, %c0_1] : memref<1x16x128xf32, #tpu.memory_space<vmem>>, vector<1x16x128xf32>
    %1 = vector.shape_cast %0 : vector<1x16x128xf32> to vector<16x128xf32>
    %c0_2 = arith.constant 0 : index
    %c0_3 = arith.constant 0 : index
    %2 = vector.load %arg4[%c0_2, %c0_3] : memref<2304x128xbf16, #tpu.memory_space<vmem>>, vector<128x128xbf16>
    %3 = arith.truncf %1 : vector<16x128xf32> to vector<16x128xbf16>
    %cst = arith.constant dense<0.000000e+00> : vector<16x128xf32>
    %4 = tpu.matmul %3, %2, %cst {dimension_numbers = #tpu.dot_dimension_numbers<[1], [0], [0], [1], [0, 0, 1, 1], [], []>} : vector<16x128xbf16>, vector<128x128xbf16>, vector<16x128xf32> -> vector<16x128xf32>
    %c0_4 = arith.constant 0 : index
    %c0_5 = arith.constant 0 : index
    %5 = vector.load %arg5[%c0_4, %c0_5] : memref<24x128xf32, #tpu.memory_space<vmem>>, vector<1x128xf32>
    %6 = vector.broadcast %5 : vector<1x128xf32> to vector<16x128xf32>
    %7 = arith.addf %4, %6 : vector<16x128xf32>
    %c128 = arith.constant 128 : index
    %c0_6 = arith.constant 0 : index
    %8 = vector.load %arg4[%c128, %c0_6] : memref<2304x128xbf16, #tpu.memory_space<vmem>>, vector<128x128xbf16>
    %9 = arith.truncf %1 : vector<16x128xf32> to vector<16x128xbf16>
    %cst_7 = arith.constant dense<0.000000e+00> : vector<16x128xf32>
    %10 = tpu.matmul %9, %8, %cst_7 {dimension_numbers = #tpu.dot_dimension_numbers<[1], [0], [0], [1], [0, 0, 1, 1], [], []>} : vector<16x128xbf16>, vector<128x128xbf16>, vector<16x128xf32> -> vector<16x128xf32>
    %c1 = arith.constant 1 : index
    %c0_8 = arith.constant 0 : index
    %11 = vector.load %arg5[%c1, %c0_8] : memref<24x128xf32, #tpu.memory_space<vmem>>, vector<1x128xf32>
    %12 = vector.broadcast %11 : vector<1x128xf32> to vector<16x128xf32>
    %13 = arith.addf %10, %12 : vector<16x128xf32>
    %c256 = arith.constant 256 : index
    %c0_9 = arith.constant 0 : index
    %14 = vector.load %arg4[%c256, %c0_9] : memref<2304x128xbf16, #tpu.memory_space<vmem>>, vector<128x128xbf16>
    %15 = arith.truncf %1 : vector<16x128xf32> to vector<16x128xbf16>
    %cst_10 = arith.constant dense<0.000000e+00> : vector<16x128xf32>
    %16 = tpu.matmul %15, %14, %cst_10 {dimension_numbers = #tpu.dot_dimension_numbers<[1], [0], [0], [1], [0, 0, 1, 1], [], []>} : vector<16x128xbf16>, vector<128x128xbf16>, vector<16x128xf32> -> vector<16x128xf32>
    %c2 = arith.constant 2 : index
    %c0_11 = arith.constant 0 : index
    %17 = vector.load %arg5[%c2, %c0_11] : memref<24x128xf32, #tpu.memory_space<vmem>>, vector<1x128xf32>
    %18 = vector.broadcast %17 : vector<1x128xf32> to vector<16x128xf32>
    %19 = arith.addf %16, %18 : vector<16x128xf32>
    %20 = arith.truncf %7 : vector<16x128xf32> to vector<16x128xbf16>
    %21 = arith.truncf %13 : vector<16x128xf32> to vector<16x128xbf16>
    %cst_12 = arith.constant dense<0.000000e+00> : vector<16x16xf32>
    %22 = tpu.matmul %20, %21, %cst_12 {dimension_numbers = #tpu.dot_dimension_numbers<[1], [1], [0], [0], [0, 0, 1, 0], [], []>} : vector<16x128xbf16>, vector<16x128xbf16>, vector<16x16xf32> -> vector<16x16xf32>
    %c0_13 = arith.constant 0 : index
    %c0_14 = arith.constant 0 : index
    %c0_15 = arith.constant 0 : index
    %23 = vector.load %arg2[%c0_13, %c0_14, %c0_15] : memref<1x5x16xf32, #tpu.memory_space<vmem>>, vector<1x1x16xf32>
    %24 = vector.shape_cast %23 : vector<1x1x16xf32> to vector<1x16xf32>
    %25 = vector.broadcast %24 : vector<1x16xf32> to vector<16x16xf32>
    %26 = arith.addf %22, %25 : vector<16x16xf32>
    %cst_16 = arith.constant dense<0xFF800000> : vector<16xf32>
    %27 = vector.multi_reduction <maximumf>, %26, %cst_16 [1] : vector<16x16xf32> to vector<16xf32>
    %28 = vector.shape_cast %27 : vector<16xf32> to vector<16x1xf32>
    %29 = vector.broadcast %28 : vector<16x1xf32> to vector<16x16xf32>
    %30 = arith.subf %26, %29 : vector<16x16xf32>
    %31 = math.exp %30 : vector<16x16xf32>
    %cst_17 = arith.constant dense<0.000000e+00> : vector<16xf32>
    %32 = vector.multi_reduction <add>, %31, %cst_17 [1] : vector<16x16xf32> to vector<16xf32>
    %33 = vector.shape_cast %32 : vector<16xf32> to vector<16x1xf32>
    %34 = tpu.reciprocal %33 {approx = true} : vector<16x1xf32> -> vector<16x1xf32>
    %35 = vector.broadcast %34 : vector<16x1xf32> to vector<16x16xf32>
    %36 = arith.mulf %31, %35 : vector<16x16xf32>
    %37 = arith.truncf %36 : vector<16x16xf32> to vector<16x16xbf16>
    %38 = arith.truncf %19 : vector<16x128xf32> to vector<16x128xbf16>
    %cst_18 = arith.constant dense<0.000000e+00> : vector<16x128xf32>
    %39 = tpu.matmul %37, %38, %cst_18 {dimension_numbers = #tpu.dot_dimension_numbers<[1], [0], [0], [1], [0, 0, 1, 1], [], []>} : vector<16x16xbf16>, vector<16x128xbf16>, vector<16x128xf32> -> vector<16x128xf32>
    %c384 = arith.constant 384 : index
    %c0_19 = arith.constant 0 : index
    %40 = vector.load %arg4[%c384, %c0_19] : memref<2304x128xbf16, #tpu.memory_space<vmem>>, vector<128x128xbf16>
    %41 = arith.truncf %39 : vector<16x128xf32> to vector<16x128xbf16>
    %cst_20 = arith.constant dense<0.000000e+00> : vector<16x128xf32>
    %42 = tpu.matmul %41, %40, %cst_20 {dimension_numbers = #tpu.dot_dimension_numbers<[1], [0], [0], [1], [0, 0, 1, 1], [], []>} : vector<16x128xbf16>, vector<128x128xbf16>, vector<16x128xf32> -> vector<16x128xf32>
    %c3 = arith.constant 3 : index
    %c0_21 = arith.constant 0 : index
    %43 = vector.load %arg5[%c3, %c0_21] : memref<24x128xf32, #tpu.memory_space<vmem>>, vector<1x128xf32>
    %44 = vector.broadcast %43 : vector<1x128xf32> to vector<16x128xf32>
    %45 = arith.addf %42, %44 : vector<16x128xf32>
    %46 = arith.addf %1, %45 : vector<16x128xf32>
    %c4 = arith.constant 4 : index
    %c0_22 = arith.constant 0 : index
    %47 = vector.load %arg5[%c4, %c0_22] : memref<24x128xf32, #tpu.memory_space<vmem>>, vector<1x128xf32>
    %c5 = arith.constant 5 : index
    %c0_23 = arith.constant 0 : index
    %48 = vector.load %arg5[%c5, %c0_23] : memref<24x128xf32, #tpu.memory_space<vmem>>, vector<1x128xf32>
    %cst_24 = arith.constant dense<0.000000e+00> : vector<16xf32>
    %49 = vector.multi_reduction <add>, %46, %cst_24 [1] : vector<16x128xf32> to vector<16xf32>
    %50 = vector.shape_cast %49 : vector<16xf32> to vector<16x1xf32>
    %cst_25 = arith.constant 1.280000e+02 : f32
    %51 = vector.broadcast %cst_25 : f32 to vector<16x1xf32>
    %52 = arith.divf %50, %51 : vector<16x1xf32>
    %53 = vector.broadcast %52 : vector<16x1xf32> to vector<16x128xf32>
    %54 = arith.subf %46, %53 : vector<16x128xf32>
    %55 = arith.mulf %54, %54 : vector<16x128xf32>
    %cst_26 = arith.constant dense<0.000000e+00> : vector<16xf32>
    %56 = vector.multi_reduction <add>, %55, %cst_26 [1] : vector<16x128xf32> to vector<16xf32>
    %57 = vector.shape_cast %56 : vector<16xf32> to vector<16x1xf32>
    %cst_27 = arith.constant 1.280000e+02 : f32
    %58 = vector.broadcast %cst_27 : f32 to vector<16x1xf32>
    %59 = arith.divf %57, %58 : vector<16x1xf32>
    %60 = vector.broadcast %52 : vector<16x1xf32> to vector<16x128xf32>
    %61 = arith.subf %46, %60 : vector<16x128xf32>
    %cst_28 = arith.constant 9.99999974E-6 : f32
    %62 = vector.broadcast %cst_28 : f32 to vector<16x1xf32>
    %63 = arith.addf %59, %62 : vector<16x1xf32>
    %64 = math.rsqrt %63 : vector<16x1xf32>
    %65 = vector.broadcast %64 : vector<16x1xf32> to vector<16x128xf32>
    %66 = arith.mulf %61, %65 : vector<16x128xf32>
    %67 = vector.broadcast %47 : vector<1x128xf32> to vector<16x128xf32>
    %68 = arith.mulf %66, %67 : vector<16x128xf32>
    %69 = vector.broadcast %48 : vector<1x128xf32> to vector<16x128xf32>
    %70 = arith.addf %68, %69 : vector<16x128xf32>
    %71 = arith.truncf %70 : vector<16x128xf32> to vector<16x128xbf16>
    %cst_29 = arith.constant 0.000000e+00 : f32
    %72 = vector.broadcast %cst_29 : f32 to vector<16x128xf32>
    %c512 = arith.constant 512 : index
    %c0_30 = arith.constant 0 : index
    %73 = vector.load %arg4[%c512, %c0_30] : memref<2304x128xbf16, #tpu.memory_space<vmem>>, vector<128x128xbf16>
    %cst_31 = arith.constant dense<0.000000e+00> : vector<16x128xf32>
    %74 = tpu.matmul %71, %73, %cst_31 {dimension_numbers = #tpu.dot_dimension_numbers<[1], [0], [0], [1], [0, 0, 1, 1], [], []>} : vector<16x128xbf16>, vector<128x128xbf16>, vector<16x128xf32> -> vector<16x128xf32>
    %c6 = arith.constant 6 : index
    %c0_32 = arith.constant 0 : index
    %75 = vector.load %arg5[%c6, %c0_32] : memref<24x128xf32, #tpu.memory_space<vmem>>, vector<1x128xf32>
    %76 = vector.broadcast %75 : vector<1x128xf32> to vector<16x128xf32>
    %77 = arith.addf %74, %76 : vector<16x128xf32>
    %cst_33 = arith.constant 5.000000e-01 : f32
    %78 = vector.broadcast %cst_33 : f32 to vector<16x128xf32>
    %79 = arith.mulf %78, %77 : vector<16x128xf32>
    %cst_34 = arith.constant 4.471500e-02 : f32
    %80 = vector.broadcast %cst_34 : f32 to vector<16x128xf32>
    %81 = arith.mulf %80, %77 : vector<16x128xf32>
    %82 = arith.mulf %81, %77 : vector<16x128xf32>
    %83 = arith.mulf %82, %77 : vector<16x128xf32>
    %84 = arith.addf %77, %83 : vector<16x128xf32>
    %cst_35 = arith.constant 0.797884583 : f32
    %85 = vector.broadcast %cst_35 : f32 to vector<16x128xf32>
    %86 = arith.mulf %85, %84 : vector<16x128xf32>
    %87 = math.tanh %86 : vector<16x128xf32>
    %cst_36 = arith.constant 1.000000e+00 : f32
    %88 = vector.broadcast %cst_36 : f32 to vector<16x128xf32>
    %89 = arith.addf %88, %87 : vector<16x128xf32>
    %90 = arith.mulf %79, %89 : vector<16x128xf32>
    %91 = arith.truncf %90 : vector<16x128xf32> to vector<16x128xbf16>
    %c1024 = arith.constant 1024 : index
    %c0_37 = arith.constant 0 : index
    %92 = vector.load %arg4[%c1024, %c0_37] : memref<2304x128xbf16, #tpu.memory_space<vmem>>, vector<128x128xbf16>
    %cst_38 = arith.constant dense<0.000000e+00> : vector<16x128xf32>
    %93 = tpu.matmul %91, %92, %cst_38 {dimension_numbers = #tpu.dot_dimension_numbers<[1], [0], [0], [1], [0, 0, 1, 1], [], []>} : vector<16x128xbf16>, vector<128x128xbf16>, vector<16x128xf32> -> vector<16x128xf32>
    %94 = arith.addf %72, %93 : vector<16x128xf32>
    %c640 = arith.constant 640 : index
    %c0_39 = arith.constant 0 : index
    %95 = vector.load %arg4[%c640, %c0_39] : memref<2304x128xbf16, #tpu.memory_space<vmem>>, vector<128x128xbf16>
    %cst_40 = arith.constant dense<0.000000e+00> : vector<16x128xf32>
    %96 = tpu.matmul %71, %95, %cst_40 {dimension_numbers = #tpu.dot_dimension_numbers<[1], [0], [0], [1], [0, 0, 1, 1], [], []>} : vector<16x128xbf16>, vector<128x128xbf16>, vector<16x128xf32> -> vector<16x128xf32>
    %c7 = arith.constant 7 : index
    %c0_41 = arith.constant 0 : index
    %97 = vector.load %arg5[%c7, %c0_41] : memref<24x128xf32, #tpu.memory_space<vmem>>, vector<1x128xf32>
    %98 = vector.broadcast %97 : vector<1x128xf32> to vector<16x128xf32>
    %99 = arith.addf %96, %98 : vector<16x128xf32>
    %cst_42 = arith.constant 5.000000e-01 : f32
    %100 = vector.broadcast %cst_42 : f32 to vector<16x128xf32>
    %101 = arith.mulf %100, %99 : vector<16x128xf32>
    %cst_43 = arith.constant 4.471500e-02 : f32
    %102 = vector.broadcast %cst_43 : f32 to vector<16x128xf32>
    %103 = arith.mulf %102, %99 : vector<16x128xf32>
    %104 = arith.mulf %103, %99 : vector<16x128xf32>
    %105 = arith.mulf %104, %99 : vector<16x128xf32>
    %106 = arith.addf %99, %105 : vector<16x128xf32>
    %cst_44 = arith.constant 0.797884583 : f32
    %107 = vector.broadcast %cst_44 : f32 to vector<16x128xf32>
    %108 = arith.mulf %107, %106 : vector<16x128xf32>
    %109 = math.tanh %108 : vector<16x128xf32>
    %cst_45 = arith.constant 1.000000e+00 : f32
    %110 = vector.broadcast %cst_45 : f32 to vector<16x128xf32>
    %111 = arith.addf %110, %109 : vector<16x128xf32>
    %112 = arith.mulf %101, %111 : vector<16x128xf32>
    %113 = arith.truncf %112 : vector<16x128xf32> to vector<16x128xbf16>
    %c1152 = arith.constant 1152 : index
    %c0_46 = arith.constant 0 : index
    %114 = vector.load %arg4[%c1152, %c0_46] : memref<2304x128xbf16, #tpu.memory_space<vmem>>, vector<128x128xbf16>
    %cst_47 = arith.constant dense<0.000000e+00> : vector<16x128xf32>
    %115 = tpu.matmul %113, %114, %cst_47 {dimension_numbers = #tpu.dot_dimension_numbers<[1], [0], [0], [1], [0, 0, 1, 1], [], []>} : vector<16x128xbf16>, vector<128x128xbf16>, vector<16x128xf32> -> vector<16x128xf32>
    %116 = arith.addf %94, %115 : vector<16x128xf32>
    %c768 = arith.constant 768 : index
    %c0_48 = arith.constant 0 : index
    %117 = vector.load %arg4[%c768, %c0_48] : memref<2304x128xbf16, #tpu.memory_space<vmem>>, vector<128x128xbf16>
    %cst_49 = arith.constant dense<0.000000e+00> : vector<16x128xf32>
    %118 = tpu.matmul %71, %117, %cst_49 {dimension_numbers = #tpu.dot_dimension_numbers<[1], [0], [0], [1], [0, 0, 1, 1], [], []>} : vector<16x128xbf16>, vector<128x128xbf16>, vector<16x128xf32> -> vector<16x128xf32>
    %c8 = arith.constant 8 : index
    %c0_50 = arith.constant 0 : index
    %119 = vector.load %arg5[%c8, %c0_50] : memref<24x128xf32, #tpu.memory_space<vmem>>, vector<1x128xf32>
    %120 = vector.broadcast %119 : vector<1x128xf32> to vector<16x128xf32>
    %121 = arith.addf %118, %120 : vector<16x128xf32>
    %cst_51 = arith.constant 5.000000e-01 : f32
    %122 = vector.broadcast %cst_51 : f32 to vector<16x128xf32>
    %123 = arith.mulf %122, %121 : vector<16x128xf32>
    %cst_52 = arith.constant 4.471500e-02 : f32
    %124 = vector.broadcast %cst_52 : f32 to vector<16x128xf32>
    %125 = arith.mulf %124, %121 : vector<16x128xf32>
    %126 = arith.mulf %125, %121 : vector<16x128xf32>
    %127 = arith.mulf %126, %121 : vector<16x128xf32>
    %128 = arith.addf %121, %127 : vector<16x128xf32>
    %cst_53 = arith.constant 0.797884583 : f32
    %129 = vector.broadcast %cst_53 : f32 to vector<16x128xf32>
    %130 = arith.mulf %129, %128 : vector<16x128xf32>
    %131 = math.tanh %130 : vector<16x128xf32>
    %cst_54 = arith.constant 1.000000e+00 : f32
    %132 = vector.broadcast %cst_54 : f32 to vector<16x128xf32>
    %133 = arith.addf %132, %131 : vector<16x128xf32>
    %134 = arith.mulf %123, %133 : vector<16x128xf32>
    %135 = arith.truncf %134 : vector<16x128xf32> to vector<16x128xbf16>
    %c1280 = arith.constant 1280 : index
    %c0_55 = arith.constant 0 : index
    %136 = vector.load %arg4[%c1280, %c0_55] : memref<2304x128xbf16, #tpu.memory_space<vmem>>, vector<128x128xbf16>
    %cst_56 = arith.constant dense<0.000000e+00> : vector<16x128xf32>
    %137 = tpu.matmul %135, %136, %cst_56 {dimension_numbers = #tpu.dot_dimension_numbers<[1], [0], [0], [1], [0, 0, 1, 1], [], []>} : vector<16x128xbf16>, vector<128x128xbf16>, vector<16x128xf32> -> vector<16x128xf32>
    %138 = arith.addf %116, %137 : vector<16x128xf32>
    %c896 = arith.constant 896 : index
    %c0_57 = arith.constant 0 : index
    %139 = vector.load %arg4[%c896, %c0_57] : memref<2304x128xbf16, #tpu.memory_space<vmem>>, vector<128x128xbf16>
    %cst_58 = arith.constant dense<0.000000e+00> : vector<16x128xf32>
    %140 = tpu.matmul %71, %139, %cst_58 {dimension_numbers = #tpu.dot_dimension_numbers<[1], [0], [0], [1], [0, 0, 1, 1], [], []>} : vector<16x128xbf16>, vector<128x128xbf16>, vector<16x128xf32> -> vector<16x128xf32>
    %c9 = arith.constant 9 : index
    %c0_59 = arith.constant 0 : index
    %141 = vector.load %arg5[%c9, %c0_59] : memref<24x128xf32, #tpu.memory_space<vmem>>, vector<1x128xf32>
    %142 = vector.broadcast %141 : vector<1x128xf32> to vector<16x128xf32>
    %143 = arith.addf %140, %142 : vector<16x128xf32>
    %cst_60 = arith.constant 5.000000e-01 : f32
    %144 = vector.broadcast %cst_60 : f32 to vector<16x128xf32>
    %145 = arith.mulf %144, %143 : vector<16x128xf32>
    %cst_61 = arith.constant 4.471500e-02 : f32
    %146 = vector.broadcast %cst_61 : f32 to vector<16x128xf32>
    %147 = arith.mulf %146, %143 : vector<16x128xf32>
    %148 = arith.mulf %147, %143 : vector<16x128xf32>
    %149 = arith.mulf %148, %143 : vector<16x128xf32>
    %150 = arith.addf %143, %149 : vector<16x128xf32>
    %cst_62 = arith.constant 0.797884583 : f32
    %151 = vector.broadcast %cst_62 : f32 to vector<16x128xf32>
    %152 = arith.mulf %151, %150 : vector<16x128xf32>
    %153 = math.tanh %152 : vector<16x128xf32>
    %cst_63 = arith.constant 1.000000e+00 : f32
    %154 = vector.broadcast %cst_63 : f32 to vector<16x128xf32>
    %155 = arith.addf %154, %153 : vector<16x128xf32>
    %156 = arith.mulf %145, %155 : vector<16x128xf32>
    %157 = arith.truncf %156 : vector<16x128xf32> to vector<16x128xbf16>
    %c1408 = arith.constant 1408 : index
    %c0_64 = arith.constant 0 : index
    %158 = vector.load %arg4[%c1408, %c0_64] : memref<2304x128xbf16, #tpu.memory_space<vmem>>, vector<128x128xbf16>
    %cst_65 = arith.constant dense<0.000000e+00> : vector<16x128xf32>
    %159 = tpu.matmul %157, %158, %cst_65 {dimension_numbers = #tpu.dot_dimension_numbers<[1], [0], [0], [1], [0, 0, 1, 1], [], []>} : vector<16x128xbf16>, vector<128x128xbf16>, vector<16x128xf32> -> vector<16x128xf32>
    %160 = arith.addf %138, %159 : vector<16x128xf32>
    %c10 = arith.constant 10 : index
    %c0_66 = arith.constant 0 : index
    %161 = vector.load %arg5[%c10, %c0_66] : memref<24x128xf32, #tpu.memory_space<vmem>>, vector<1x128xf32>
    %162 = vector.broadcast %161 : vector<1x128xf32> to vector<16x128xf32>
    %163 = arith.addf %160, %162 : vector<16x128xf32>
    %164 = arith.addf %70, %163 : vector<16x128xf32>
    %c11 = arith.constant 11 : index
    %c0_67 = arith.constant 0 : index
    %165 = vector.load %arg5[%c11, %c0_67] : memref<24x128xf32, #tpu.memory_space<vmem>>, vector<1x128xf32>
    %c12 = arith.constant 12 : index
    %c0_68 = arith.constant 0 : index
    %166 = vector.load %arg5[%c12, %c0_68] : memref<24x128xf32, #tpu.memory_space<vmem>>, vector<1x128xf32>
    %cst_69 = arith.constant dense<0.000000e+00> : vector<16xf32>
    %167 = vector.multi_reduction <add>, %164, %cst_69 [1] : vector<16x128xf32> to vector<16xf32>
    %168 = vector.shape_cast %167 : vector<16xf32> to vector<16x1xf32>
    %cst_70 = arith.constant 1.280000e+02 : f32
    %169 = vector.broadcast %cst_70 : f32 to vector<16x1xf32>
    %170 = arith.divf %168, %169 : vector<16x1xf32>
    %171 = vector.broadcast %170 : vector<16x1xf32> to vector<16x128xf32>
    %172 = arith.subf %164, %171 : vector<16x128xf32>
    %173 = arith.mulf %172, %172 : vector<16x128xf32>
    %cst_71 = arith.constant dense<0.000000e+00> : vector<16xf32>
    %174 = vector.multi_reduction <add>, %173, %cst_71 [1] : vector<16x128xf32> to vector<16xf32>
    %175 = vector.shape_cast %174 : vector<16xf32> to vector<16x1xf32>
    %cst_72 = arith.constant 1.280000e+02 : f32
    %176 = vector.broadcast %cst_72 : f32 to vector<16x1xf32>
    %177 = arith.divf %175, %176 : vector<16x1xf32>
    %178 = vector.broadcast %170 : vector<16x1xf32> to vector<16x128xf32>
    %179 = arith.subf %164, %178 : vector<16x128xf32>
    %cst_73 = arith.constant 9.99999974E-6 : f32
    %180 = vector.broadcast %cst_73 : f32 to vector<16x1xf32>
    %181 = arith.addf %177, %180 : vector<16x1xf32>
    %182 = math.rsqrt %181 : vector<16x1xf32>
    %183 = vector.broadcast %182 : vector<16x1xf32> to vector<16x128xf32>
    %184 = arith.mulf %179, %183 : vector<16x128xf32>
    %185 = vector.broadcast %165 : vector<1x128xf32> to vector<16x128xf32>
    %186 = arith.mulf %184, %185 : vector<16x128xf32>
    %187 = vector.broadcast %166 : vector<1x128xf32> to vector<16x128xf32>
    %188 = arith.addf %186, %187 : vector<16x128xf32>
    %c0_74 = arith.constant 0 : index
    %c0_75 = arith.constant 0 : index
    %c0_76 = arith.constant 0 : index
    %189 = vector.load %arg6[%c0_74, %c0_75, %c0_76] : memref<1x24x128xf32, #tpu.memory_space<vmem>>, vector<1x16x128xf32>
    %190 = vector.shape_cast %189 : vector<1x16x128xf32> to vector<16x128xf32>
    %191 = vector.shape_cast %188 : vector<16x128xf32> to vector<1x16x128xf32>
    tpu.vector_store %arg6[%c0_74, %c0_75, %c0_76], %191 {strides = array<i32>} : memref<1x24x128xf32, #tpu.memory_space<vmem>>, vector<1x16x128xf32>,
    %192 = vector.extract_strided_slice %188 {offsets = [0, 0], sizes = [1, 128], strides = [1, 1]} : vector<16x128xf32> to vector<1x128xf32>
    %c1536 = arith.constant 1536 : index
    %c0_77 = arith.constant 0 : index
    %193 = vector.load %arg4[%c1536, %c0_77] : memref<2304x128xbf16, #tpu.memory_space<vmem>>, vector<128x128xbf16>
    %194 = arith.truncf %192 : vector<1x128xf32> to vector<1x128xbf16>
    %cst_78 = arith.constant dense<0.000000e+00> : vector<1x128xf32>
    %195 = tpu.matmul %194, %193, %cst_78 {dimension_numbers = #tpu.dot_dimension_numbers<[1], [0], [0], [1], [0, 0, 1, 1], [], []>} : vector<1x128xbf16>, vector<128x128xbf16>, vector<1x128xf32> -> vector<1x128xf32>
    %c13 = arith.constant 13 : index
    %c0_79 = arith.constant 0 : index
    %196 = vector.load %arg5[%c13, %c0_79] : memref<24x128xf32, #tpu.memory_space<vmem>>, vector<1x128xf32>
    %197 = arith.addf %195, %196 : vector<1x128xf32>
    %198 = math.tanh %197 : vector<1x128xf32>
    %c0_80 = arith.constant 0 : index
    %c16 = arith.constant 16 : index
    %c0_81 = arith.constant 0 : index
    %199 = vector.load %arg6[%c0_80, %c16, %c0_81] : memref<1x24x128xf32, #tpu.memory_space<vmem>>, vector<1x1x128xf32>
    %200 = vector.shape_cast %199 : vector<1x1x128xf32> to vector<1x128xf32>
    %201 = vector.shape_cast %198 : vector<1x128xf32> to vector<1x1x128xf32>
    tpu.vector_store %arg6[%c0_80, %c16, %c0_81], %201 {strides = array<i32>} : memref<1x24x128xf32, #tpu.memory_space<vmem>>, vector<1x1x128xf32>,
    %c0_82 = arith.constant 0 : index
    %c1_83 = arith.constant 1 : index
    %c0_84 = arith.constant 0 : index
    %202 = vector.load %arg2[%c0_82, %c1_83, %c0_84] : memref<1x5x16xf32, #tpu.memory_space<vmem>>, vector<1x4x16xf32>
    %203 = vector.shape_cast %202 : vector<1x4x16xf32> to vector<4x16xf32>
    %cst_85 = arith.constant dense<0.000000e+00> : vector<4xf32>
    %204 = vector.multi_reduction <add>, %203, %cst_85 [1] : vector<4x16xf32> to vector<4xf32>
    %205 = vector.shape_cast %204 : vector<4xf32> to vector<4x1xf32>
    %cst_86 = arith.constant 5.000000e-01 : f32
    %206 = vector.broadcast %cst_86 : f32 to vector<4x1xf32>
    %207 = arith.cmpf ogt, %205, %206 : vector<4x1xf32>
    %208 = arith.extui %207 : vector<4x1xi1> to vector<4x1xi32>
    %209 = arith.sitofp %208 : vector<4x1xi32> to vector<4x1xf32>
    %210 = arith.truncf %203 : vector<4x16xf32> to vector<4x16xbf16>
    %211 = arith.truncf %188 : vector<16x128xf32> to vector<16x128xbf16>
    %cst_87 = arith.constant dense<0.000000e+00> : vector<4x128xf32>
    %212 = tpu.matmul %210, %211, %cst_87 {dimension_numbers = #tpu.dot_dimension_numbers<[1], [0], [0], [1], [0, 0, 1, 1], [], []>} : vector<4x16xbf16>, vector<16x128xbf16>, vector<4x128xf32> -> vector<4x128xf32>
    %c1664 = arith.constant 1664 : index
    %c0_88 = arith.constant 0 : index
    %213 = vector.load %arg4[%c1664, %c0_88] : memref<2304x128xbf16, #tpu.memory_space<vmem>>, vector<128x128xbf16>
    %214 = arith.truncf %212 : vector<4x128xf32> to vector<4x128xbf16>
    %cst_89 = arith.constant dense<0.000000e+00> : vector<4x128xf32>
    %215 = tpu.matmul %214, %213, %cst_89 {dimension_numbers = #tpu.dot_dimension_numbers<[1], [0], [0], [1], [0, 0, 1, 1], [], []>} : vector<4x128xbf16>, vector<128x128xbf16>, vector<4x128xf32> -> vector<4x128xf32>
    %c14 = arith.constant 14 : index
    %c0_90 = arith.constant 0 : index
    %216 = vector.load %arg5[%c14, %c0_90] : memref<24x128xf32, #tpu.memory_space<vmem>>, vector<1x128xf32>
    %217 = vector.broadcast %216 : vector<1x128xf32> to vector<4x128xf32>
    %218 = arith.addf %215, %217 : vector<4x128xf32>
    %c1792 = arith.constant 1792 : index
    %c0_91 = arith.constant 0 : index
    %219 = vector.load %arg4[%c1792, %c0_91] : memref<2304x128xbf16, #tpu.memory_space<vmem>>, vector<128x128xbf16>
    %c0_92 = arith.constant 0 : index
    %c0_93 = arith.constant 0 : index
    %c0_94 = arith.constant 0 : index
    %220 = vector.load %arg3[%c0_92, %c0_93, %c0_94] : memref<1x16x4xf32, #tpu.memory_space<vmem>>, vector<1x16x1xf32>
    %221 = vector.shape_cast %220 : vector<1x16x1xf32> to vector<16x1xf32>
    %222 = vector.broadcast %221 : vector<16x1xf32> to vector<16x128xf32>
    %223 = arith.addf %188, %222 : vector<16x128xf32>
    %cst_95 = arith.constant dense<0xFF800000> : vector<128xf32>
    %224 = vector.multi_reduction <maximumf>, %223, %cst_95 [0] : vector<16x128xf32> to vector<128xf32>
    %225 = vector.shape_cast %224 : vector<128xf32> to vector<1x128xf32>
    %226 = vector.extract_strided_slice %218 {offsets = [0, 0], sizes = [1, 128], strides = [1, 1]} : vector<4x128xf32> to vector<1x128xf32>
    %227 = arith.truncf %225 : vector<1x128xf32> to vector<1x128xbf16>
    %cst_96 = arith.constant dense<0.000000e+00> : vector<1x128xf32>
    %228 = tpu.matmul %227, %219, %cst_96 {dimension_numbers = #tpu.dot_dimension_numbers<[1], [0], [0], [1], [0, 0, 1, 1], [], []>} : vector<1x128xbf16>, vector<128x128xbf16>, vector<1x128xf32> -> vector<1x128xf32>
    %229 = arith.addf %226, %228 : vector<1x128xf32>
    %cst_97 = arith.constant 0.000000e+00 : f32
    %230 = vector.broadcast %cst_97 : f32 to vector<1x128xf32>
    %231 = arith.cmpf ogt, %229, %230 : vector<1x128xf32>
    %cst_98 = arith.constant 0.000000e+00 : f32
    %232 = vector.broadcast %cst_98 : f32 to vector<1x128xf32>
    %233 = arith.minimumf %229, %232 : vector<1x128xf32>
    %234 = math.exp %233 : vector<1x128xf32>
    %cst_99 = arith.constant 1.000000e+00 : f32
    %235 = vector.broadcast %cst_99 : f32 to vector<1x128xf32>
    %236 = arith.subf %234, %235 : vector<1x128xf32>
    %237 = arith.select %231, %229, %236 : vector<1x128xi1>, vector<1x128xf32>
    %238 = vector.extract_strided_slice %209 {offsets = [0, 0], sizes = [1, 1], strides = [1, 1]} : vector<4x1xf32> to vector<1x1xf32>
    %239 = vector.broadcast %238 : vector<1x1xf32> to vector<1x128xf32>
    %240 = arith.mulf %237, %239 : vector<1x128xf32>
    %241 = arith.addf %192, %240 : vector<1x128xf32>
    %cst_100 = arith.constant 5.000000e-01 : f32
    %242 = vector.broadcast %cst_100 : f32 to vector<1x1xf32>
    %243 = arith.cmpf ogt, %238, %242 : vector<1x1xf32>
    %cst_101 = arith.constant -1.000000e+30 : f32
    %244 = vector.shape_cast %243 : vector<1x1xi1> to vector<1x1xi1>
    %245 = vector.broadcast %244 : vector<1x1xi1> to vector<1x128xi1>
    %246 = vector.broadcast %cst_101 : f32 to vector<1x128xf32>
    %247 = arith.select %245, %237, %246 : vector<1x128xi1>, vector<1x128xf32>
    %248 = arith.maximumf %192, %247 : vector<1x128xf32>
    %c0_102 = arith.constant 0 : index
    %c0_103 = arith.constant 0 : index
    %c1_104 = arith.constant 1 : index
    %249 = vector.load %arg3[%c0_102, %c0_103, %c1_104] : memref<1x16x4xf32, #tpu.memory_space<vmem>>, vector<1x16x1xf32>
    %250 = vector.shape_cast %249 : vector<1x16x1xf32> to vector<16x1xf32>
    %251 = vector.broadcast %250 : vector<16x1xf32> to vector<16x128xf32>
    %252 = arith.addf %188, %251 : vector<16x128xf32>
    %cst_105 = arith.constant dense<0xFF800000> : vector<128xf32>
    %253 = vector.multi_reduction <maximumf>, %252, %cst_105 [0] : vector<16x128xf32> to vector<128xf32>
    %254 = vector.shape_cast %253 : vector<128xf32> to vector<1x128xf32>
    %255 = vector.extract_strided_slice %218 {offsets = [1, 0], sizes = [1, 128], strides = [1, 1]} : vector<4x128xf32> to vector<1x128xf32>
    %256 = arith.truncf %254 : vector<1x128xf32> to vector<1x128xbf16>
    %cst_106 = arith.constant dense<0.000000e+00> : vector<1x128xf32>
    %257 = tpu.matmul %256, %219, %cst_106 {dimension_numbers = #tpu.dot_dimension_numbers<[1], [0], [0], [1], [0, 0, 1, 1], [], []>} : vector<1x128xbf16>, vector<128x128xbf16>, vector<1x128xf32> -> vector<1x128xf32>
    %258 = arith.addf %255, %257 : vector<1x128xf32>
    %cst_107 = arith.constant 0.000000e+00 : f32
    %259 = vector.broadcast %cst_107 : f32 to vector<1x128xf32>
    %260 = arith.cmpf ogt, %258, %259 : vector<1x128xf32>
    %cst_108 = arith.constant 0.000000e+00 : f32
    %261 = vector.broadcast %cst_108 : f32 to vector<1x128xf32>
    %262 = arith.minimumf %258, %261 : vector<1x128xf32>
    %263 = math.exp %262 : vector<1x128xf32>
    %cst_109 = arith.constant 1.000000e+00 : f32
    %264 = vector.broadcast %cst_109 : f32 to vector<1x128xf32>
    %265 = arith.subf %263, %264 : vector<1x128xf32>
    %266 = arith.select %260, %258, %265 : vector<1x128xi1>, vector<1x128xf32>
    %267 = vector.extract_strided_slice %209 {offsets = [1, 0], sizes = [1, 1], strides = [1, 1]} : vector<4x1xf32> to vector<1x1xf32>
    %268 = vector.broadcast %267 : vector<1x1xf32> to vector<1x128xf32>
    %269 = arith.mulf %266, %268 : vector<1x128xf32>
    %270 = arith.addf %241, %269 : vector<1x128xf32>
    %cst_110 = arith.constant 5.000000e-01 : f32
    %271 = vector.broadcast %cst_110 : f32 to vector<1x1xf32>
    %272 = arith.cmpf ogt, %267, %271 : vector<1x1xf32>
    %cst_111 = arith.constant -1.000000e+30 : f32
    %273 = vector.shape_cast %272 : vector<1x1xi1> to vector<1x1xi1>
    %274 = vector.broadcast %273 : vector<1x1xi1> to vector<1x128xi1>
    %275 = vector.broadcast %cst_111 : f32 to vector<1x128xf32>
    %276 = arith.select %274, %266, %275 : vector<1x128xi1>, vector<1x128xf32>
    %277 = arith.maximumf %248, %276 : vector<1x128xf32>
    %c0_112 = arith.constant 0 : index
    %c0_113 = arith.constant 0 : index
    %c2_114 = arith.constant 2 : index
    %278 = vector.load %arg3[%c0_112, %c0_113, %c2_114] : memref<1x16x4xf32, #tpu.memory_space<vmem>>, vector<1x16x1xf32>
    %279 = vector.shape_cast %278 : vector<1x16x1xf32> to vector<16x1xf32>
    %280 = vector.broadcast %279 : vector<16x1xf32> to vector<16x128xf32>
    %281 = arith.addf %188, %280 : vector<16x128xf32>
    %cst_115 = arith.constant dense<0xFF800000> : vector<128xf32>
    %282 = vector.multi_reduction <maximumf>, %281, %cst_115 [0] : vector<16x128xf32> to vector<128xf32>
    %283 = vector.shape_cast %282 : vector<128xf32> to vector<1x128xf32>
    %284 = vector.extract_strided_slice %218 {offsets = [2, 0], sizes = [1, 128], strides = [1, 1]} : vector<4x128xf32> to vector<1x128xf32>
    %285 = arith.truncf %283 : vector<1x128xf32> to vector<1x128xbf16>
    %cst_116 = arith.constant dense<0.000000e+00> : vector<1x128xf32>
    %286 = tpu.matmul %285, %219, %cst_116 {dimension_numbers = #tpu.dot_dimension_numbers<[1], [0], [0], [1], [0, 0, 1, 1], [], []>} : vector<1x128xbf16>, vector<128x128xbf16>, vector<1x128xf32> -> vector<1x128xf32>
    %287 = arith.addf %284, %286 : vector<1x128xf32>
    %cst_117 = arith.constant 0.000000e+00 : f32
    %288 = vector.broadcast %cst_117 : f32 to vector<1x128xf32>
    %289 = arith.cmpf ogt, %287, %288 : vector<1x128xf32>
    %cst_118 = arith.constant 0.000000e+00 : f32
    %290 = vector.broadcast %cst_118 : f32 to vector<1x128xf32>
    %291 = arith.minimumf %287, %290 : vector<1x128xf32>
    %292 = math.exp %291 : vector<1x128xf32>
    %cst_119 = arith.constant 1.000000e+00 : f32
    %293 = vector.broadcast %cst_119 : f32 to vector<1x128xf32>
    %294 = arith.subf %292, %293 : vector<1x128xf32>
    %295 = arith.select %289, %287, %294 : vector<1x128xi1>, vector<1x128xf32>
    %296 = vector.extract_strided_slice %209 {offsets = [2, 0], sizes = [1, 1], strides = [1, 1]} : vector<4x1xf32> to vector<1x1xf32>
    %297 = vector.broadcast %296 : vector<1x1xf32> to vector<1x128xf32>
    %298 = arith.mulf %295, %297 : vector<1x128xf32>
    %299 = arith.addf %270, %298 : vector<1x128xf32>
    %cst_120 = arith.constant 5.000000e-01 : f32
    %300 = vector.broadcast %cst_120 : f32 to vector<1x1xf32>
    %301 = arith.cmpf ogt, %296, %300 : vector<1x1xf32>
    %cst_121 = arith.constant -1.000000e+30 : f32
    %302 = vector.shape_cast %301 : vector<1x1xi1> to vector<1x1xi1>
    %303 = vector.broadcast %302 : vector<1x1xi1> to vector<1x128xi1>
    %304 = vector.broadcast %cst_121 : f32 to vector<1x128xf32>
    %305 = arith.select %303, %295, %304 : vector<1x128xi1>, vector<1x128xf32>
    %306 = arith.maximumf %277, %305 : vector<1x128xf32>
    %c0_122 = arith.constant 0 : index
    %c0_123 = arith.constant 0 : index
    %c3_124 = arith.constant 3 : index
    %307 = vector.load %arg3[%c0_122, %c0_123, %c3_124] : memref<1x16x4xf32, #tpu.memory_space<vmem>>, vector<1x16x1xf32>
    %308 = vector.shape_cast %307 : vector<1x16x1xf32> to vector<16x1xf32>
    %309 = vector.broadcast %308 : vector<16x1xf32> to vector<16x128xf32>
    %310 = arith.addf %188, %309 : vector<16x128xf32>
    %cst_125 = arith.constant dense<0xFF800000> : vector<128xf32>
    %311 = vector.multi_reduction <maximumf>, %310, %cst_125 [0] : vector<16x128xf32> to vector<128xf32>
    %312 = vector.shape_cast %311 : vector<128xf32> to vector<1x128xf32>
    %313 = vector.extract_strided_slice %218 {offsets = [3, 0], sizes = [1, 128], strides = [1, 1]} : vector<4x128xf32> to vector<1x128xf32>
    %314 = arith.truncf %312 : vector<1x128xf32> to vector<1x128xbf16>
    %cst_126 = arith.constant dense<0.000000e+00> : vector<1x128xf32>
    %315 = tpu.matmul %314, %219, %cst_126 {dimension_numbers = #tpu.dot_dimension_numbers<[1], [0], [0], [1], [0, 0, 1, 1], [], []>} : vector<1x128xbf16>, vector<128x128xbf16>, vector<1x128xf32> -> vector<1x128xf32>
    %316 = arith.addf %313, %315 : vector<1x128xf32>
    %cst_127 = arith.constant 0.000000e+00 : f32
    %317 = vector.broadcast %cst_127 : f32 to vector<1x128xf32>
    %318 = arith.cmpf ogt, %316, %317 : vector<1x128xf32>
    %cst_128 = arith.constant 0.000000e+00 : f32
    %319 = vector.broadcast %cst_128 : f32 to vector<1x128xf32>
    %320 = arith.minimumf %316, %319 : vector<1x128xf32>
    %321 = math.exp %320 : vector<1x128xf32>
    %cst_129 = arith.constant 1.000000e+00 : f32
    %322 = vector.broadcast %cst_129 : f32 to vector<1x128xf32>
    %323 = arith.subf %321, %322 : vector<1x128xf32>
    %324 = arith.select %318, %316, %323 : vector<1x128xi1>, vector<1x128xf32>
    %325 = vector.extract_strided_slice %209 {offsets = [3, 0], sizes = [1, 1], strides = [1, 1]} : vector<4x1xf32> to vector<1x1xf32>
    %326 = vector.broadcast %325 : vector<1x1xf32> to vector<1x128xf32>
    %327 = arith.mulf %324, %326 : vector<1x128xf32>
    %328 = arith.addf %299, %327 : vector<1x128xf32>
    %cst_130 = arith.constant 5.000000e-01 : f32
    %329 = vector.broadcast %cst_130 : f32 to vector<1x1xf32>
    %330 = arith.cmpf ogt, %325, %329 : vector<1x1xf32>
    %cst_131 = arith.constant -1.000000e+30 : f32
    %331 = vector.shape_cast %330 : vector<1x1xi1> to vector<1x1xi1>
    %332 = vector.broadcast %331 : vector<1x1xi1> to vector<1x128xi1>
    %333 = vector.broadcast %cst_131 : f32 to vector<1x128xf32>
    %334 = arith.select %332, %324, %333 : vector<1x128xi1>, vector<1x128xf32>
    %335 = arith.maximumf %306, %334 : vector<1x128xf32>
    %cst_132 = arith.constant dense<0.000000e+00> : vector<1xf32>
    %336 = vector.multi_reduction <add>, %209, %cst_132 [0] : vector<4x1xf32> to vector<1xf32>
    %337 = vector.shape_cast %336 : vector<1xf32> to vector<1x1xf32>
    %cst_133 = arith.constant 1.000000e+00 : f32
    %338 = vector.broadcast %cst_133 : f32 to vector<1x1xf32>
    %339 = arith.addf %338, %337 : vector<1x1xf32>
    %340 = vector.broadcast %339 : vector<1x1xf32> to vector<1x128xf32>
    %341 = arith.divf %328, %340 : vector<1x128xf32>
    %c1920 = arith.constant 1920 : index
    %c0_134 = arith.constant 0 : index
    %342 = vector.load %arg4[%c1920, %c0_134] : memref<2304x128xbf16, #tpu.memory_space<vmem>>, vector<128x128xbf16>
    %343 = arith.truncf %341 : vector<1x128xf32> to vector<1x128xbf16>
    %cst_135 = arith.constant dense<0.000000e+00> : vector<1x128xf32>
    %344 = tpu.matmul %343, %342, %cst_135 {dimension_numbers = #tpu.dot_dimension_numbers<[1], [0], [0], [1], [0, 0, 1, 1], [], []>} : vector<1x128xbf16>, vector<128x128xbf16>, vector<1x128xf32> -> vector<1x128xf32>
    %c2048 = arith.constant 2048 : index
    %c0_136 = arith.constant 0 : index
    %345 = vector.load %arg4[%c2048, %c0_136] : memref<2304x128xbf16, #tpu.memory_space<vmem>>, vector<128x128xbf16>
    %346 = arith.truncf %335 : vector<1x128xf32> to vector<1x128xbf16>
    %cst_137 = arith.constant dense<0.000000e+00> : vector<1x128xf32>
    %347 = tpu.matmul %346, %345, %cst_137 {dimension_numbers = #tpu.dot_dimension_numbers<[1], [0], [0], [1], [0, 0, 1, 1], [], []>} : vector<1x128xbf16>, vector<128x128xbf16>, vector<1x128xf32> -> vector<1x128xf32>
    %348 = arith.addf %344, %347 : vector<1x128xf32>
    %c15 = arith.constant 15 : index
    %c0_138 = arith.constant 0 : index
    %349 = vector.load %arg5[%c15, %c0_138] : memref<24x128xf32, #tpu.memory_space<vmem>>, vector<1x128xf32>
    %350 = arith.addf %348, %349 : vector<1x128xf32>
    %cst_139 = arith.constant 0.000000e+00 : f32
    %351 = vector.broadcast %cst_139 : f32 to vector<1x128xf32>
    %352 = arith.cmpf ogt, %350, %351 : vector<1x128xf32>
    %cst_140 = arith.constant 0.000000e+00 : f32
    %353 = vector.broadcast %cst_140 : f32 to vector<1x128xf32>
    %354 = arith.minimumf %350, %353 : vector<1x128xf32>
    %355 = math.exp %354 : vector<1x128xf32>
    %cst_141 = arith.constant 1.000000e+00 : f32
    %356 = vector.broadcast %cst_141 : f32 to vector<1x128xf32>
    %357 = arith.subf %355, %356 : vector<1x128xf32>
    %358 = arith.select %352, %350, %357 : vector<1x128xi1>, vector<1x128xf32>
    %c2176 = arith.constant 2176 : index
    %c0_142 = arith.constant 0 : index
    %359 = vector.load %arg4[%c2176, %c0_142] : memref<2304x128xbf16, #tpu.memory_space<vmem>>, vector<128x128xbf16>
    %360 = arith.truncf %358 : vector<1x128xf32> to vector<1x128xbf16>
    %cst_143 = arith.constant dense<0.000000e+00> : vector<1x128xf32>
    %361 = tpu.matmul %360, %359, %cst_143 {dimension_numbers = #tpu.dot_dimension_numbers<[1], [0], [0], [1], [0, 0, 1, 1], [], []>} : vector<1x128xbf16>, vector<128x128xbf16>, vector<1x128xf32> -> vector<1x128xf32>
    %c16_144 = arith.constant 16 : index
    %c0_145 = arith.constant 0 : index
    %362 = vector.load %arg5[%c16_144, %c0_145] : memref<24x128xf32, #tpu.memory_space<vmem>>, vector<1x128xf32>
    %363 = arith.addf %361, %362 : vector<1x128xf32>
    %cst_146 = arith.constant 0.000000e+00 : f32
    %364 = vector.broadcast %cst_146 : f32 to vector<1x128xf32>
    %365 = arith.cmpf ogt, %363, %364 : vector<1x128xf32>
    %cst_147 = arith.constant 0.000000e+00 : f32
    %366 = vector.broadcast %cst_147 : f32 to vector<1x128xf32>
    %367 = arith.minimumf %363, %366 : vector<1x128xf32>
    %368 = math.exp %367 : vector<1x128xf32>
    %cst_148 = arith.constant 1.000000e+00 : f32
    %369 = vector.broadcast %cst_148 : f32 to vector<1x128xf32>
    %370 = arith.subf %368, %369 : vector<1x128xf32>
    %371 = arith.select %365, %363, %370 : vector<1x128xi1>, vector<1x128xf32>
    %c17 = arith.constant 17 : index
    %c0_149 = arith.constant 0 : index
    %372 = vector.load %arg5[%c17, %c0_149] : memref<24x128xf32, #tpu.memory_space<vmem>>, vector<1x128xf32>
    %373 = arith.mulf %371, %372 : vector<1x128xf32>
    %cst_150 = arith.constant dense<0.000000e+00> : vector<1xf32>
    %374 = vector.multi_reduction <add>, %373, %cst_150 [1] : vector<1x128xf32> to vector<1xf32>
    %375 = vector.shape_cast %374 : vector<1xf32> to vector<1x1xf32>
    %c18 = arith.constant 18 : index
    %c0_151 = arith.constant 0 : index
    %376 = vector.load %arg5[%c18, %c0_151] : memref<24x128xf32, #tpu.memory_space<vmem>>, vector<1x1xf32>
    %377 = arith.addf %375, %376 : vector<1x1xf32>
    %cst_152 = arith.constant 0.000000e+00 : f32
    %378 = vector.broadcast %cst_152 : f32 to vector<1x1xf32>
    %379 = arith.subf %378, %377 : vector<1x1xf32>
    %380 = math.exp %379 : vector<1x1xf32>
    %cst_153 = arith.constant 1.000000e+00 : f32
    %381 = vector.broadcast %cst_153 : f32 to vector<1x1xf32>
    %382 = arith.addf %381, %380 : vector<1x1xf32>
    %cst_154 = arith.constant 1.000000e+00 : f32
    %383 = vector.broadcast %cst_154 : f32 to vector<1x1xf32>
    %384 = arith.divf %383, %382 : vector<1x1xf32>
    %cst_155 = arith.constant 1.000000e+00 : f32
    %385 = vector.broadcast %cst_155 : f32 to vector<1x128xf32>
    %386 = vector.broadcast %384 : vector<1x1xf32> to vector<1x128xf32>
    %387 = arith.mulf %386, %385 : vector<1x128xf32>
    %c0_156 = arith.constant 0 : index
    %c17_157 = arith.constant 17 : index
    %c0_158 = arith.constant 0 : index
    %388 = vector.load %arg6[%c0_156, %c17_157, %c0_158] : memref<1x24x128xf32, #tpu.memory_space<vmem>>, vector<1x1x128xf32>
    %389 = vector.shape_cast %388 : vector<1x1x128xf32> to vector<1x128xf32>
    %390 = vector.shape_cast %387 : vector<1x128xf32> to vector<1x1x128xf32>
    tpu.vector_store %arg6[%c0_156, %c17_157, %c0_158], %390 {strides = array<i32>} : memref<1x24x128xf32, #tpu.memory_space<vmem>>, vector<1x1x128xf32>,
    %cst_159 = arith.constant 0.000000e+00 : f32
    %391 = vector.broadcast %cst_159 : f32 to vector<6x128xf32>
    %c0_160 = arith.constant 0 : index
    %c18_161 = arith.constant 18 : index
    %c0_162 = arith.constant 0 : index
    %392 = vector.load %arg6[%c0_160, %c18_161, %c0_162] : memref<1x24x128xf32, #tpu.memory_space<vmem>>, vector<1x6x128xf32>
    %393 = vector.shape_cast %392 : vector<1x6x128xf32> to vector<6x128xf32>
    %394 = vector.shape_cast %391 : vector<6x128xf32> to vector<1x6x128xf32>
    tpu.vector_store %arg6[%c0_160, %c18_161, %c0_162], %394 {strides = array<i32>} : memref<1x24x128xf32, #tpu.memory_space<vmem>>, vector<1x6x128xf32>,
    return
  }
  func.func @transform_0(%arg0: i32) -> (i32, i32, i32) {
    %c0_i32 = arith.constant 0 : i32
    %c0_i32_0 = arith.constant 0 : i32
    %c0_i32_1 = arith.constant 0 : i32
    return %arg0, %c0_i32, %c0_i32_0 : i32, i32, i32
  }
  func.func @transform_1(%arg0: i32) -> (i32, i32, i32) {
    %c0_i32 = arith.constant 0 : i32
    %c0_i32_0 = arith.constant 0 : i32
    %c0_i32_1 = arith.constant 0 : i32
    return %arg0, %c0_i32, %c0_i32_0 : i32, i32, i32
  }
  func.func @transform_2(%arg0: i32) -> (i32, i32, i32) {
    %c0_i32 = arith.constant 0 : i32
    %c0_i32_0 = arith.constant 0 : i32
    %c0_i32_1 = arith.constant 0 : i32
    return %arg0, %c0_i32, %c0_i32_0 : i32, i32, i32
  }
  func.func @transform_3(%arg0: i32) -> (i32, i32) {
    %c0_i32 = arith.constant 0 : i32
    %c0_i32_0 = arith.constant 0 : i32
    %c0_i32_1 = arith.constant 0 : i32
    return %c0_i32, %c0_i32_0 : i32, i32
  }
  func.func @transform_4(%arg0: i32) -> (i32, i32) {
    %c0_i32 = arith.constant 0 : i32
    %c0_i32_0 = arith.constant 0 : i32
    %c0_i32_1 = arith.constant 0 : i32
    return %c0_i32, %c0_i32_0 : i32, i32
  }
  func.func @transform_5(%arg0: i32) -> (i32, i32, i32) {
    %c0_i32 = arith.constant 0 : i32
    %c0_i32_0 = arith.constant 0 : i32
    %c0_i32_1 = arith.constant 0 : i32
    return %arg0, %c0_i32, %c0_i32_0 : i32, i32, i32
  }
}

</mosaic_0001>

<llo_original>
// kernel: _fused_call_impl.1
$region0: #{_fused_call_impl.1}
  #allocation0 [shape = 'u32[]', space=smem, size = 0x4, offset = 0x4, fixed_abs, tag = 'smem constant byte address 0x4 - core index']
  #allocation1 [shape = 'u32[144,128]{1,0:T(1,128)}', space=vmem, size = 0x12000, scoped, tag = 'internal scratch']
  %s0 = inlined_call_operand.vmem [shape: f32[1,16,128], index: 0, kind: input, shape index: {}]
  %s1 = inlined_call_operand.vmem [shape: f32[1,5,16], index: 1, kind: input, shape index: {}]
  %s2 = inlined_call_operand.vmem [shape: f32[1,16,4], index: 2, kind: input, shape index: {}]
  %s3 = inlined_call_operand.hbm [shape: bf16[2304,128], index: 3, kind: input, shape index: {}]
  %s4 = inlined_call_operand.vmem [shape: f32[24,128], index: 4, kind: input, shape index: {}]
  %s5 = inlined_call_operand.hbm [shape: f32[1,24,128], index: 5, kind: output, shape index: {}]
  %s6 = sld [smem:[#allocation0]]
  $region34: #{_fused_call_impl.1} parent=0
    _
  %s8 = ssub.s32 1, %s6
  %s9 = scalar_select 0, %s8, %s6
  $region1: #{_fused_call_impl.1} parent=0
    #allocation2 [shape = 'u8[589824]{0}', space=vmem, size = 0x90000, scoped, tag = 'input window, operand 3, single buffered']
    #allocation3 [shape = 's32[1]{0}', space=sflag, size = 0x4, scoped, tag = 'scoped memory for _fused_call_impl.1']
    #allocation4 [shape = 's32[1]{0}', space=sflag, size = 0x4, scoped, tag = 'scoped memory for _fused_call_impl.1']
    #allocation5 [shape = 'u8[12288]{0}', space=vmem, size = 0x3000, scoped, tag = 'output window, operand 0, single buffered']
    %10 = vsyncpa [#allocation3], 0
    %11 = vsyncpa [#allocation4], 0
    // Predicated region
    $region2: #{_fused_call_impl.1} parent=1 // pred_check
      _
    $region3: #{_fused_call_impl.1} parent=1 // pred_check_branch
      %13 = sbr.rel (0) target = $region5
    $region4: #{_fused_call_impl.1} parent=1 // pred_region
      _
    $region5: #{_fused_call_impl.1} parent=1 // pred_fallthru
      _
    // Predicated region
    $region6: #{_fused_call_impl.1} parent=1 // pred_check
      _
    $region7: #{_fused_call_impl.1} parent=1 // pred_check_branch
      %15 = sbr.rel (0) target = $region9
    $region8: #{_fused_call_impl.1} parent=1 // pred_region
      _
    $region9: #{_fused_call_impl.1} parent=1 // pred_fallthru
      _
    // Predicated region
    $region10: #{_fused_call_impl.1} parent=1 // pred_check
      _
    $region11: #{_fused_call_impl.1} parent=1 // pred_check_branch
      %17 = sbr.rel (0) target = $region13
    $region12: #{_fused_call_impl.1} parent=1 // pred_region
      _
    $region13: #{_fused_call_impl.1} parent=1 // pred_fallthru
      _
    // Predicated region
    $region14: #{_fused_call_impl.1} parent=1 // pred_check
      _
    $region15: #{_fused_call_impl.1} parent=1 // pred_check_branch
      %19 = sbr.rel (0) target = $region17
    $region16: #{_fused_call_impl.1} parent=1 // pred_region
      %s21 = ssub.s32 18432, 18432
      %22 = vsyncadd [#allocation3], %s21
      %s23 = sshll.u32 [#allocation2], 4
      %s24 = int_to_ptr.vmem [resolvable:$true] %s23
      %29 = dma.hbm_to_vmem [thread:$0]  %s3, 18432, %s24, [#allocation3], 64, 64, 4
    $region17: #{_fused_call_impl.1} parent=1 // pred_fallthru
      _
    // Predicated region
    $region18: #{_fused_call_impl.1} parent=1 // pred_check
      _
    $region19: #{_fused_call_impl.1} parent=1 // pred_check_branch
      %31 = sbr.rel (0) target = $region21
    $region20: #{_fused_call_impl.1} parent=1 // pred_region
      _
    $region21: #{_fused_call_impl.1} parent=1 // pred_fallthru
      _
    // Predicated region
    $region22: #{_fused_call_impl.1} parent=1 // pred_check
      _
    $region23: #{_fused_call_impl.1} parent=1 // pred_check_branch
      %33 = sbr.rel (0) target = $region25
    $region24: #{_fused_call_impl.1} parent=1 // pred_region
      %34 = dma.done [#allocation3], 18432
    $region25: #{_fused_call_impl.1} parent=1 // pred_fallthru
      _
    %v36 = vld [vmem:[%s0] sm:$0xff]
    %v37 = vld [vmem:[%s0 + $0x8] sm:$0xff]
    %v38 = vld [vmem:[#allocation2] sm:$0xf]
    %v39 = vld [vmem:[#allocation2 + $0x4] sm:$0xf]
    %v40 = vld [vmem:[#allocation2 + $0x8] sm:$0xf]
    %v41 = vld [vmem:[#allocation2 + $0xc] sm:$0xf]
    %v42 = vld [vmem:[#allocation2 + $0x10] sm:$0xf]
    %v43 = vld [vmem:[#allocation2 + $0x14] sm:$0xf]
    %v44 = vld [vmem:[#allocation2 + $0x18] sm:$0xf]
    %v45 = vld [vmem:[#allocation2 + $0x1c] sm:$0xf]
    %v46 = vld [vmem:[#allocation2 + $0x20] sm:$0xf]
    %v47 = vld [vmem:[#allocation2 + $0x24] sm:$0xf]
    %v48 = vld [vmem:[#allocation2 + $0x28] sm:$0xf]
    %v49 = vld [vmem:[#allocation2 + $0x2c] sm:$0xf]
    %v50 = vld [vmem:[#allocation2 + $0x30] sm:$0xf]
    %v51 = vld [vmem:[#allocation2 + $0x34] sm:$0xf]
    %v52 = vld [vmem:[#allocation2 + $0x38] sm:$0xf]
    %v53 = vld [vmem:[#allocation2 + $0x3c] sm:$0xf]
    %v54 = vpack.c.bf16 %v37, %v36
    %v55 = vld [vmem:[%s4] sm:$0x1]
    %v56 = vlaneseq
    %v57 = vshrl.u32 %v56, 7
    %v58 = vsub.s32 0, %v57
    %v59 = vrot.slane %v55, %v58
    %v76 = vunpack.c.l.b16 %v38
    %v77 = vunpack.c.l.b16 %v39
    %v78 = vunpack.c.l.b16 %v40
    %v79 = vunpack.c.l.b16 %v41
    %v80 = vunpack.c.l.b16 %v42
    %v81 = vunpack.c.l.b16 %v43
    %v82 = vunpack.c.l.b16 %v44
    %v83 = vunpack.c.l.b16 %v45
    %v84 = vunpack.c.l.b16 %v46
    %v85 = vunpack.c.l.b16 %v47
    %v86 = vunpack.c.l.b16 %v48
    %v87 = vunpack.c.l.b16 %v49
    %v88 = vunpack.c.l.b16 %v50
    %v89 = vunpack.c.l.b16 %v51
    %v90 = vunpack.c.l.b16 %v52
    %v91 = vunpack.c.l.b16 %v53
    %v92 = vpack.c.b16 %v77, %v76
    %v93 = vpack.c.b16 %v79, %v78
    %v94 = vpack.c.b16 %v81, %v80
    %v95 = vpack.c.b16 %v83, %v82
    %v96 = vpack.c.b16 %v85, %v84
    %v97 = vpack.c.b16 %v87, %v86
    %v98 = vpack.c.b16 %v89, %v88
    %v99 = vpack.c.b16 %v91, %v90
    %108 = vmatprep.subr.bf16.mxu0 0
    %109 = vmatpush1.bf16.msra.mxu0 %v99
    %110 = vmatprep.subr.bf16.mxu0 0
    %111 = vmatpush1.bf16.msra.mxu0 %v98
    %112 = vmatprep.subr.bf16.mxu0 0
    %113 = vmatpush1.bf16.msra.mxu0 %v97
    %114 = vmatprep.subr.bf16.mxu0 0
    %115 = vmatpush1.bf16.msra.mxu0 %v96
    %116 = vmatprep.subr.bf16.mxu0 0
    %117 = vmatpush1.bf16.msra.mxu0 %v95
    %118 = vmatprep.subr.bf16.mxu0 0
    %119 = vmatpush1.bf16.msra.mxu0 %v94
    %120 = vmatprep.subr.bf16.mxu0 0
    %121 = vmatpush1.bf16.msra.mxu0 %v93
    %122 = vmatprep.subr.bf16.mxu0 0
    %123 = vmatpush1.bf16.msra.mxu0 %v92
    %124 = vmatprep.subr.bf16.mxu0 0
    %125 = vmatpush2.bf16.msra.mxu0 0
    %126 = vmatprep.subr.bf16.mxu0 0
    %127 = vmatpush2.bf16.msra.mxu0 0
    %128 = vmatprep.subr.bf16.mxu0 0
    %129 = vmatpush2.bf16.msra.mxu0 0
    %130 = vmatprep.subr.bf16.mxu0 0
    %131 = vmatpush2.bf16.msra.mxu0 0
    %132 = vmatprep.subr.bf16.mxu0 0
    %133 = vmatpush2.bf16.msra.mxu0 0
    %134 = vmatprep.subr.bf16.mxu0 0
    %135 = vmatpush2.bf16.msra.mxu0 0
    %136 = vmatprep.subr.bf16.mxu0 0
    %137 = vmatpush2.bf16.msra.mxu0 0
    %138 = vmatprep.subr.bf16.mxu0 0
    %139 = vmatpush2.bf16.msra.mxu0 0
    %140 = vmatprep.mubr.bf16.mxu0 0
    %141 = vmatmul.mubr.bf16.gmra.mxu0 %v54
    %v142 = vpop.f32.mrf.mxu0
    %v143 = vadd.f32 %v59, %v142
    %v144 = vpop.f32.mrf.mxu0
    %v145 = vpop.f32.mrf.mxu0
    %v146 = vadd.f32 %v59, %v145
    %v147 = vpop.f32.mrf.mxu0
    %148 = vdwg.mxu0
    %v149 = vld [vmem:[#allocation2 + $0x40] sm:$0xf]
    %v150 = vld [vmem:[#allocation2 + $0x44] sm:$0xf]
    %v151 = vld [vmem:[#allocation2 + $0x48] sm:$0xf]
    %v152 = vld [vmem:[#allocation2 + $0x4c] sm:$0xf]
    %v153 = vld [vmem:[#allocation2 + $0x50] sm:$0xf]
    %v154 = vld [vmem:[#allocation2 + $0x54] sm:$0xf]
    %v155 = vld [vmem:[#allocation2 + $0x58] sm:$0xf]
    %v156 = vld [vmem:[#allocation2 + $0x5c] sm:$0xf]
    %v157 = vld [vmem:[#allocation2 + $0x60] sm:$0xf]
    %v158 = vld [vmem:[#allocation2 + $0x64] sm:$0xf]
    %v159 = vld [vmem:[#allocation2 + $0x68] sm:$0xf]
    %v160 = vld [vmem:[#allocation2 + $0x6c] sm:$0xf]
    %v161 = vld [vmem:[#allocation2 + $0x70] sm:$0xf]
    %v162 = vld [vmem:[#allocation2 + $0x74] sm:$0xf]
    %v163 = vld [vmem:[#allocation2 + $0x78] sm:$0xf]
    %v164 = vld [vmem:[#allocation2 + $0x7c] sm:$0xf]
    %v165 = vld [vmem:[%s4 + $0x1] sm:$0x1]
    %v166 = vlaneseq
    %v167 = vshrl.u32 %v166, 7
    %v168 = vsub.s32 0, %v167
    %v169 = vrot.slane %v165, %v168
    %v186 = vunpack.c.l.b16 %v149
    %v187 = vunpack.c.l.b16 %v150
    %v188 = vunpack.c.l.b16 %v151
    %v189 = vunpack.c.l.b16 %v152
    %v190 = vunpack.c.l.b16 %v153
    %v191 = vunpack.c.l.b16 %v154
    %v192 = vunpack.c.l.b16 %v155
    %v193 = vunpack.c.l.b16 %v156
    %v194 = vunpack.c.l.b16 %v157
    %v195 = vunpack.c.l.b16 %v158
    %v196 = vunpack.c.l.b16 %v159
    %v197 = vunpack.c.l.b16 %v160
    %v198 = vunpack.c.l.b16 %v161
    %v199 = vunpack.c.l.b16 %v162
    %v200 = vunpack.c.l.b16 %v163
    %v201 = vunpack.c.l.b16 %v164
    %v202 = vpack.c.b16 %v187, %v186
    %v203 = vpack.c.b16 %v189, %v188
    %v204 = vpack.c.b16 %v191, %v190
    %v205 = vpack.c.b16 %v193, %v192
    %v206 = vpack.c.b16 %v195, %v194
    %v207 = vpack.c.b16 %v197, %v196
    %v208 = vpack.c.b16 %v199, %v198
    %v209 = vpack.c.b16 %v201, %v200
    %218 = vmatprep.subr.bf16.mxu0 0
    %219 = vmatpush1.bf16.msra.mxu0 %v209
    %220 = vmatprep.subr.bf16.mxu0 0
    %221 = vmatpush1.bf16.msra.mxu0 %v208
    %222 = vmatprep.subr.bf16.mxu0 0
    %223 = vmatpush1.bf16.msra.mxu0 %v207
    %224 = vmatprep.subr.bf16.mxu0 0
    %225 = vmatpush1.bf16.msra.mxu0 %v206
    %226 = vmatprep.subr.bf16.mxu0 0
    %227 = vmatpush1.bf16.msra.mxu0 %v205
    %228 = vmatprep.subr.bf16.mxu0 0
    %229 = vmatpush1.bf16.msra.mxu0 %v204
    %230 = vmatprep.subr.bf16.mxu0 0
    %231 = vmatpush1.bf16.msra.mxu0 %v203
    %232 = vmatprep.subr.bf16.mxu0 0
    %233 = vmatpush1.bf16.msra.mxu0 %v202
    %234 = vmatprep.subr.bf16.mxu0 0
    %235 = vmatpush2.bf16.msra.mxu0 0
    %236 = vmatprep.subr.bf16.mxu0 0
    %237 = vmatpush2.bf16.msra.mxu0 0
    %238 = vmatprep.subr.bf16.mxu0 0
    %239 = vmatpush2.bf16.msra.mxu0 0
    %240 = vmatprep.subr.bf16.mxu0 0
    %241 = vmatpush2.bf16.msra.mxu0 0
    %242 = vmatprep.subr.bf16.mxu0 0
    %243 = vmatpush2.bf16.msra.mxu0 0
    %244 = vmatprep.subr.bf16.mxu0 0
    %245 = vmatpush2.bf16.msra.mxu0 0
    %246 = vmatprep.subr.bf16.mxu0 0
    %247 = vmatpush2.bf16.msra.mxu0 0
    %248 = vmatprep.subr.bf16.mxu0 0
    %249 = vmatpush2.bf16.msra.mxu0 0
    %250 = vmatprep.mubr.bf16.mxu0 0
    %251 = vmatmul.mubr.bf16.gmra.mxu0 %v54
    %v252 = vpop.f32.mrf.mxu0
    %v253 = vadd.f32 %v169, %v252
    %v254 = vpop.f32.mrf.mxu0
    %v255 = vpop.f32.mrf.mxu0
    %v256 = vadd.f32 %v169, %v255
    %v257 = vpop.f32.mrf.mxu0
    %258 = vdwg.mxu0
    %v259 = vld [vmem:[#allocation2 + $0x80] sm:$0xf]
    %v260 = vld [vmem:[#allocation2 + $0x84] sm:$0xf]
    %v261 = vld [vmem:[#allocation2 + $0x88] sm:$0xf]
    %v262 = vld [vmem:[#allocation2 + $0x8c] sm:$0xf]
    %v263 = vld [vmem:[#allocation2 + $0x90] sm:$0xf]
    %v264 = vld [vmem:[#allocation2 + $0x94] sm:$0xf]
    %v265 = vld [vmem:[#allocation2 + $0x98] sm:$0xf]
    %v266 = vld [vmem:[#allocation2 + $0x9c] sm:$0xf]
    %v267 = vld [vmem:[#allocation2 + $0xa0] sm:$0xf]
    %v268 = vld [vmem:[#allocation2 + $0xa4] sm:$0xf]
    %v269 = vld [vmem:[#allocation2 + $0xa8] sm:$0xf]
    %v270 = vld [vmem:[#allocation2 + $0xac] sm:$0xf]
    %v271 = vld [vmem:[#allocation2 + $0xb0] sm:$0xf]
    %v272 = vld [vmem:[#allocation2 + $0xb4] sm:$0xf]
    %v273 = vld [vmem:[#allocation2 + $0xb8] sm:$0xf]
    %v274 = vld [vmem:[#allocation2 + $0xbc] sm:$0xf]
    %v275 = vld [vmem:[%s4 + $0x2] sm:$0x1]
    %v276 = vlaneseq
    %v277 = vshrl.u32 %v276, 7
    %v278 = vsub.s32 0, %v277
    %v279 = vrot.slane %v275, %v278
    %v296 = vunpack.c.l.b16 %v259
    %v297 = vunpack.c.l.b16 %v260
    %v298 = vunpack.c.l.b16 %v261
    %v299 = vunpack.c.l.b16 %v262
    %v300 = vunpack.c.l.b16 %v263
    %v301 = vunpack.c.l.b16 %v264
    %v302 = vunpack.c.l.b16 %v265
    %v303 = vunpack.c.l.b16 %v266
    %v304 = vunpack.c.l.b16 %v267
    %v305 = vunpack.c.l.b16 %v268
    %v306 = vunpack.c.l.b16 %v269
    %v307 = vunpack.c.l.b16 %v270
    %v308 = vunpack.c.l.b16 %v271
    %v309 = vunpack.c.l.b16 %v272
    %v310 = vunpack.c.l.b16 %v273
    %v311 = vunpack.c.l.b16 %v274
    %v312 = vpack.c.b16 %v297, %v296
    %v313 = vpack.c.b16 %v299, %v298
    %v314 = vpack.c.b16 %v301, %v300
    %v315 = vpack.c.b16 %v303, %v302
    %v316 = vpack.c.b16 %v305, %v304
    %v317 = vpack.c.b16 %v307, %v306
    %v318 = vpack.c.b16 %v309, %v308
    %v319 = vpack.c.b16 %v311, %v310
    %328 = vmatprep.subr.bf16.mxu0 0
    %329 = vmatpush1.bf16.msra.mxu0 %v319
    %330 = vmatprep.subr.bf16.mxu0 0
    %331 = vmatpush1.bf16.msra.mxu0 %v318
    %332 = vmatprep.subr.bf16.mxu0 0
    %333 = vmatpush1.bf16.msra.mxu0 %v317
    %334 = vmatprep.subr.bf16.mxu0 0
    %335 = vmatpush1.bf16.msra.mxu0 %v316
    %336 = vmatprep.subr.bf16.mxu0 0
    %337 = vmatpush1.bf16.msra.mxu0 %v315
    %338 = vmatprep.subr.bf16.mxu0 0
    %339 = vmatpush1.bf16.msra.mxu0 %v314
    %340 = vmatprep.subr.bf16.mxu0 0
    %341 = vmatpush1.bf16.msra.mxu0 %v313
    %342 = vmatprep.subr.bf16.mxu0 0
    %343 = vmatpush1.bf16.msra.mxu0 %v312
    %344 = vmatprep.subr.bf16.mxu0 0
    %345 = vmatpush2.bf16.msra.mxu0 0
    %346 = vmatprep.subr.bf16.mxu0 0
    %347 = vmatpush2.bf16.msra.mxu0 0
    %348 = vmatprep.subr.bf16.mxu0 0
    %349 = vmatpush2.bf16.msra.mxu0 0
    %350 = vmatprep.subr.bf16.mxu0 0
    %351 = vmatpush2.bf16.msra.mxu0 0
    %352 = vmatprep.subr.bf16.mxu0 0
    %353 = vmatpush2.bf16.msra.mxu0 0
    %354 = vmatprep.subr.bf16.mxu0 0
    %355 = vmatpush2.bf16.msra.mxu0 0
    %356 = vmatprep.subr.bf16.mxu0 0
    %357 = vmatpush2.bf16.msra.mxu0 0
    %358 = vmatprep.subr.bf16.mxu0 0
    %359 = vmatpush2.bf16.msra.mxu0 0
    %360 = vmatprep.mubr.bf16.mxu0 0
    %361 = vmatmul.mubr.bf16.gmra.mxu0 %v54
    %v362 = vpop.f32.mrf.mxu0
    %v363 = vadd.f32 %v279, %v362
    %v364 = vpop.f32.mrf.mxu0
    %v365 = vpop.f32.mrf.mxu0
    %v366 = vadd.f32 %v279, %v365
    %v367 = vpop.f32.mrf.mxu0
    %368 = vdwg.mxu0
    %v369 = vpack.c.bf16 %v146, %v143
    %v370 = vpack.c.bf16 %v256, %v253
    %v371 = vld [vmem:[%s1] sm:$0x1]
    %v372 = vlaneseq
    %v373 = vshrl.u32 %v372, 7
    %v374 = vsub.s32 0, %v373
    %v375 = vrot.slane %v371, %v374
    %376 = vmatprep.subr.bf16.mxu0 0
    %377 = vmatpush1.bf16.xpose.msra.mxu0 0
    %378 = vmatprep.subr.bf16.mxu0 0
    %379 = vmatpush1.bf16.xpose.msra.mxu0 0
    %380 = vmatprep.subr.bf16.mxu0 0
    %381 = vmatpush1.bf16.xpose.msra.mxu0 0
    %382 = vmatprep.subr.bf16.mxu0 0
    %383 = vmatpush1.bf16.xpose.msra.mxu0 0
    %384 = vmatprep.subr.bf16.mxu0 0
    %385 = vmatpush1.bf16.xpose.msra.mxu0 0
    %386 = vmatprep.subr.bf16.mxu0 0
    %387 = vmatpush1.bf16.xpose.msra.mxu0 0
    %388 = vmatprep.subr.bf16.mxu0 0
    %389 = vmatpush1.bf16.xpose.msra.mxu0 0
    %390 = vmatprep.subr.bf16.mxu0 0
    %391 = vmatpush1.bf16.xpose.msra.mxu0 %v370
    %392 = vmatprep.subr.bf16.mxu0 0
    %393 = vmatpush2.bf16.xpose.msra.mxu0 0
    %394 = vmatprep.subr.bf16.mxu0 0
    %395 = vmatpush2.bf16.xpose.msra.mxu0 0
    %396 = vmatprep.subr.bf16.mxu0 0
    %397 = vmatpush2.bf16.xpose.msra.mxu0 0
    %398 = vmatprep.subr.bf16.mxu0 0
    %399 = vmatpush2.bf16.xpose.msra.mxu0 0
    %400 = vmatprep.subr.bf16.mxu0 0
    %401 = vmatpush2.bf16.xpose.msra.mxu0 0
    %402 = vmatprep.subr.bf16.mxu0 0
    %403 = vmatpush2.bf16.xpose.msra.mxu0 0
    %404 = vmatprep.subr.bf16.mxu0 0
    %405 = vmatpush2.bf16.xpose.msra.mxu0 0
    %406 = vmatprep.subr.bf16.mxu0 0
    %407 = vmatpush2.bf16.xpose.msra.mxu0 0
    %408 = vmatprep.mubr.bf16.mxu0 0
    %409 = vmatmul.mubr.bf16.gmra.mxu0 %v369
    %v410 = vpop.f32.mrf.mxu0
    %v411 = vadd.f32 %v375, %v410
    %v412 = vpop.f32.mrf.mxu0
    %v413 = vpop.f32.mrf.mxu0
    %v414 = vadd.f32 %v375, %v413
    %v415 = vpop.f32.mrf.mxu0
    %416 = vdwg.mxu0
    %vm417 = vcmask 130048
    %v418 = vsel %vm417, %v411, -inf
    %419 = vmax.xlane.f32.xlu0 %v418
    %v420 = vpop.xlane.xlu0 %419
    %v421 = vsel %vm417, %v414, -inf
    %422 = vmax.xlane.f32.xlu0 %v421
    %v423 = vpop.xlane.xlu0 %422
    %v424 = vsub.f32 %v411, %v420
    %v425 = vsub.f32 %v414, %v423
    %v426 = vmul.f32 %v424, 1.442695
    %v427 = vpow.pop %v426
    %v428 = vmul.f32 %v425, 1.442695
    %v429 = vpow.pop %v428
    %v430 = vsel %vm417, %v427, 0.0
    %431 = vadd.xlane.f32.xlu0 %v430
    %v432 = vpop.xlane.xlu0 %431
    %v433 = vsel %vm417, %v429, 0.0
    %434 = vadd.xlane.f32.xlu0 %v433
    %v435 = vpop.xlane.xlu0 %434
    %v436 = vrcp.pop %v432
    %v437 = vrcp.pop %v435
    %v438 = vmul.f32 %v427, %v436
    %v439 = vmul.f32 %v429, %v437
    %v440 = vpack.c.bf16 %v439, %v438
    %v441 = vpack.c.bf16 %v366, %v363
    %v443 = vsel %vm417, %v440, 0
    %445 = vmatprep.subr.bf16.mxu0 0
    %446 = vmatpush1.bf16.msra.mxu0 0
    %447 = vmatprep.subr.bf16.mxu0 0
    %448 = vmatpush1.bf16.msra.mxu0 0
    %449 = vmatprep.subr.bf16.mxu0 0
    %450 = vmatpush1.bf16.msra.mxu0 0
    %451 = vmatprep.subr.bf16.mxu0 0
    %452 = vmatpush1.bf16.msra.mxu0 0
    %453 = vmatprep.subr.bf16.mxu0 0
    %454 = vmatpush1.bf16.msra.mxu0 0
    %455 = vmatprep.subr.bf16.mxu0 0
    %456 = vmatpush1.bf16.msra.mxu0 0
    %457 = vmatprep.subr.bf16.mxu0 0
    %458 = vmatpush1.bf16.msra.mxu0 0
    %459 = vmatprep.subr.bf16.mxu0 0
    %460 = vmatpush1.bf16.msra.mxu0 %v441
    %461 = vmatprep.subr.bf16.mxu0 0
    %462 = vmatpush2.bf16.msra.mxu0 0
    %463 = vmatprep.subr.bf16.mxu0 0
    %464 = vmatpush2.bf16.msra.mxu0 0
    %465 = vmatprep.subr.bf16.mxu0 0
    %466 = vmatpush2.bf16.msra.mxu0 0
    %467 = vmatprep.subr.bf16.mxu0 0
    %468 = vmatpush2.bf16.msra.mxu0 0
    %469 = vmatprep.subr.bf16.mxu0 0
    %470 = vmatpush2.bf16.msra.mxu0 0
    %471 = vmatprep.subr.bf16.mxu0 0
    %472 = vmatpush2.bf16.msra.mxu0 0
    %473 = vmatprep.subr.bf16.mxu0 0
    %474 = vmatpush2.bf16.msra.mxu0 0
    %475 = vmatprep.subr.bf16.mxu0 0
    %476 = vmatpush2.bf16.msra.mxu0 0
    %477 = vmatprep.mubr.bf16.mxu0 0
    %478 = vmatmul.mubr.bf16.gmra.mxu0 %v443
    %v479 = vpop.f32.mrf.mxu0
    %v480 = vadd.f32 0.0, %v479
    %v481 = vpop.f32.mrf.mxu0
    %v482 = vpop.f32.mrf.mxu0
    %v483 = vadd.f32 0.0, %v482
    %v484 = vpop.f32.mrf.mxu0
    %485 = vdwg.mxu0
    %v486 = vld [vmem:[#allocation2 + $0xc0] sm:$0xf]
    %v487 = vld [vmem:[#allocation2 + $0xc4] sm:$0xf]
    %v488 = vld [vmem:[#allocation2 + $0xc8] sm:$0xf]
    %v489 = vld [vmem:[#allocation2 + $0xcc] sm:$0xf]
    %v490 = vld [vmem:[#allocation2 + $0xd0] sm:$0xf]
    %v491 = vld [vmem:[#allocation2 + $0xd4] sm:$0xf]
    %v492 = vld [vmem:[#allocation2 + $0xd8] sm:$0xf]
    %v493 = vld [vmem:[#allocation2 + $0xdc] sm:$0xf]
    %v494 = vld [vmem:[#allocation2 + $0xe0] sm:$0xf]
    %v495 = vld [vmem:[#allocation2 + $0xe4] sm:$0xf]
    %v496 = vld [vmem:[#allocation2 + $0xe8] sm:$0xf]
    %v497 = vld [vmem:[#allocation2 + $0xec] sm:$0xf]
    %v498 = vld [vmem:[#allocation2 + $0xf0] sm:$0xf]
    %v499 = vld [vmem:[#allocation2 + $0xf4] sm:$0xf]
    %v500 = vld [vmem:[#allocation2 + $0xf8] sm:$0xf]
    %v501 = vld [vmem:[#allocation2 + $0xfc] sm:$0xf]
    %v502 = vpack.c.bf16 %v483, %v480
    %v503 = vld [vmem:[%s4 + $0x3] sm:$0x1]
    %v504 = vlaneseq
    %v505 = vshrl.u32 %v504, 7
    %v506 = vsub.s32 0, %v505
    %v507 = vrot.slane %v503, %v506
    %v524 = vunpack.c.l.b16 %v486
    %v525 = vunpack.c.l.b16 %v487
    %v526 = vunpack.c.l.b16 %v488
    %v527 = vunpack.c.l.b16 %v489
    %v528 = vunpack.c.l.b16 %v490
    %v529 = vunpack.c.l.b16 %v491
    %v530 = vunpack.c.l.b16 %v492
    %v531 = vunpack.c.l.b16 %v493
    %v532 = vunpack.c.l.b16 %v494
    %v533 = vunpack.c.l.b16 %v495
    %v534 = vunpack.c.l.b16 %v496
    %v535 = vunpack.c.l.b16 %v497
    %v536 = vunpack.c.l.b16 %v498
    %v537 = vunpack.c.l.b16 %v499
    %v538 = vunpack.c.l.b16 %v500
    %v539 = vunpack.c.l.b16 %v501
    %v540 = vpack.c.b16 %v525, %v524
    %v541 = vpack.c.b16 %v527, %v526
    %v542 = vpack.c.b16 %v529, %v528
    %v543 = vpack.c.b16 %v531, %v530
    %v544 = vpack.c.b16 %v533, %v532
    %v545 = vpack.c.b16 %v535, %v534
    %v546 = vpack.c.b16 %v537, %v536
    %v547 = vpack.c.b16 %v539, %v538
    %556 = vmatprep.subr.bf16.mxu0 0
    %557 = vmatpush1.bf16.msra.mxu0 %v547
    %558 = vmatprep.subr.bf16.mxu0 0
    %559 = vmatpush1.bf16.msra.mxu0 %v546
    %560 = vmatprep.subr.bf16.mxu0 0
    %561 = vmatpush1.bf16.msra.mxu0 %v545
    %562 = vmatprep.subr.bf16.mxu0 0
    %563 = vmatpush1.bf16.msra.mxu0 %v544
    %564 = vmatprep.subr.bf16.mxu0 0
    %565 = vmatpush1.bf16.msra.mxu0 %v543
    %566 = vmatprep.subr.bf16.mxu0 0
    %567 = vmatpush1.bf16.msra.mxu0 %v542
    %568 = vmatprep.subr.bf16.mxu0 0
    %569 = vmatpush1.bf16.msra.mxu0 %v541
    %570 = vmatprep.subr.bf16.mxu0 0
    %571 = vmatpush1.bf16.msra.mxu0 %v540
    %572 = vmatprep.subr.bf16.mxu0 0
    %573 = vmatpush2.bf16.msra.mxu0 0
    %574 = vmatprep.subr.bf16.mxu0 0
    %575 = vmatpush2.bf16.msra.mxu0 0
    %576 = vmatprep.subr.bf16.mxu0 0
    %577 = vmatpush2.bf16.msra.mxu0 0
    %578 = vmatprep.subr.bf16.mxu0 0
    %579 = vmatpush2.bf16.msra.mxu0 0
    %580 = vmatprep.subr.bf16.mxu0 0
    %581 = vmatpush2.bf16.msra.mxu0 0
    %582 = vmatprep.subr.bf16.mxu0 0
    %583 = vmatpush2.bf16.msra.mxu0 0
    %584 = vmatprep.subr.bf16.mxu0 0
    %585 = vmatpush2.bf16.msra.mxu0 0
    %586 = vmatprep.subr.bf16.mxu0 0
    %587 = vmatpush2.bf16.msra.mxu0 0
    %588 = vmatprep.mubr.bf16.mxu0 0
    %589 = vmatmul.mubr.bf16.gmra.mxu0 %v502
    %v590 = vpop.f32.mrf.mxu0
    %v591 = vadd.f32 %v507, %v590
    %v592 = vpop.f32.mrf.mxu0
    %v593 = vpop.f32.mrf.mxu0
    %v594 = vadd.f32 %v507, %v593
    %v595 = vpop.f32.mrf.mxu0
    %596 = vdwg.mxu0
    %v597 = vadd.f32 %v36, %v591
    %v598 = vadd.f32 %v37, %v594
    %v599 = vld [vmem:[%s4 + $0x4] sm:$0x1]
    %v600 = vld [vmem:[%s4 + $0x5] sm:$0x1]
    %601 = vadd.xlane.f32.xlu0 %v597
    %v602 = vpop.xlane.xlu0 %601
    %603 = vadd.xlane.f32.xlu0 %v598
    %v604 = vpop.xlane.xlu0 %603
    %v605 = vrcp.pop 128.0
    %v606 = vmul.f32 %v602, %v605
    %v607 = vmul.f32 %v604, %v605
    %v608 = vsub.f32 %v597, %v606
    %v609 = vsub.f32 %v598, %v607
    %v610 = vmul.f32 %v608, %v608
    %v611 = vmul.f32 %v609, %v609
    %612 = vadd.xlane.f32.xlu0 %v610
    %v613 = vpop.xlane.xlu0 %612
    %614 = vadd.xlane.f32.xlu0 %v611
    %v615 = vpop.xlane.xlu0 %614
    %v616 = vmul.f32 %v613, %v605
    %v617 = vmul.f32 %v615, %v605
    %v618 = vadd.f32 %v616, 1e-05
    %v619 = vadd.f32 %v617, 1e-05
    %v620 = vrsqrt.pop %v618
    %v621 = vrsqrt.pop %v619
    %v622 = vmul.f32 %v608, %v620
    %v623 = vmul.f32 %v609, %v621
    %v624 = vlaneseq
    %v625 = vshrl.u32 %v624, 7
    %v626 = vsub.s32 0, %v625
    %v627 = vrot.slane %v599, %v626
    %v628 = vmul.f32 %v622, %v627
    %v629 = vmul.f32 %v623, %v627
    %v630 = vlaneseq
    %v631 = vshrl.u32 %v630, 7
    %v632 = vsub.s32 0, %v631
    %v633 = vrot.slane %v600, %v632
    %v634 = vadd.f32 %v628, %v633
    %v635 = vadd.f32 %v629, %v633
    %v636 = vpack.c.bf16 %v635, %v634
    %v637 = vld [vmem:[#allocation2 + $0x100] sm:$0xf]
    %v638 = vld [vmem:[#allocation2 + $0x104] sm:$0xf]
    %v639 = vld [vmem:[#allocation2 + $0x108] sm:$0xf]
    %v640 = vld [vmem:[#allocation2 + $0x10c] sm:$0xf]
    %v641 = vld [vmem:[#allocation2 + $0x110] sm:$0xf]
    %v642 = vld [vmem:[#allocation2 + $0x114] sm:$0xf]
    %v643 = vld [vmem:[#allocation2 + $0x118] sm:$0xf]
    %v644 = vld [vmem:[#allocation2 + $0x11c] sm:$0xf]
    %v645 = vld [vmem:[#allocation2 + $0x120] sm:$0xf]
    %v646 = vld [vmem:[#allocation2 + $0x124] sm:$0xf]
    %v647 = vld [vmem:[#allocation2 + $0x128] sm:$0xf]
    %v648 = vld [vmem:[#allocation2 + $0x12c] sm:$0xf]
    %v649 = vld [vmem:[#allocation2 + $0x130] sm:$0xf]
    %v650 = vld [vmem:[#allocation2 + $0x134] sm:$0xf]
    %v651 = vld [vmem:[#allocation2 + $0x138] sm:$0xf]
    %v652 = vld [vmem:[#allocation2 + $0x13c] sm:$0xf]
    %v653 = vld [vmem:[%s4 + $0x6] sm:$0x1]
    %v654 = vlaneseq
    %v655 = vshrl.u32 %v654, 7
    %v656 = vsub.s32 0, %v655
    %v657 = vrot.slane %v653, %v656
    %v674 = vunpack.c.l.b16 %v637
    %v675 = vunpack.c.l.b16 %v638
    %v676 = vunpack.c.l.b16 %v639
    %v677 = vunpack.c.l.b16 %v640
    %v678 = vunpack.c.l.b16 %v641
    %v679 = vunpack.c.l.b16 %v642
    %v680 = vunpack.c.l.b16 %v643
    %v681 = vunpack.c.l.b16 %v644
    %v682 = vunpack.c.l.b16 %v645
    %v683 = vunpack.c.l.b16 %v646
    %v684 = vunpack.c.l.b16 %v647
    %v685 = vunpack.c.l.b16 %v648
    %v686 = vunpack.c.l.b16 %v649
    %v687 = vunpack.c.l.b16 %v650
    %v688 = vunpack.c.l.b16 %v651
    %v689 = vunpack.c.l.b16 %v652
    %v690 = vpack.c.b16 %v675, %v674
    %v691 = vpack.c.b16 %v677, %v676
    %v692 = vpack.c.b16 %v679, %v678
    %v693 = vpack.c.b16 %v681, %v680
    %v694 = vpack.c.b16 %v683, %v682
    %v695 = vpack.c.b16 %v685, %v684
    %v696 = vpack.c.b16 %v687, %v686
    %v697 = vpack.c.b16 %v689, %v688
    %706 = vmatprep.subr.bf16.mxu0 0
    %707 = vmatpush1.bf16.msra.mxu0 %v697
    %708 = vmatprep.subr.bf16.mxu0 0
    %709 = vmatpush1.bf16.msra.mxu0 %v696
    %710 = vmatprep.subr.bf16.mxu0 0
    %711 = vmatpush1.bf16.msra.mxu0 %v695
    %712 = vmatprep.subr.bf16.mxu0 0
    %713 = vmatpush1.bf16.msra.mxu0 %v694
    %714 = vmatprep.subr.bf16.mxu0 0
    %715 = vmatpush1.bf16.msra.mxu0 %v693
    %716 = vmatprep.subr.bf16.mxu0 0
    %717 = vmatpush1.bf16.msra.mxu0 %v692
    %718 = vmatprep.subr.bf16.mxu0 0
    %719 = vmatpush1.bf16.msra.mxu0 %v691
    %720 = vmatprep.subr.bf16.mxu0 0
    %721 = vmatpush1.bf16.msra.mxu0 %v690
    %722 = vmatprep.subr.bf16.mxu0 0
    %723 = vmatpush2.bf16.msra.mxu0 0
    %724 = vmatprep.subr.bf16.mxu0 0
    %725 = vmatpush2.bf16.msra.mxu0 0
    %726 = vmatprep.subr.bf16.mxu0 0
    %727 = vmatpush2.bf16.msra.mxu0 0
    %728 = vmatprep.subr.bf16.mxu0 0
    %729 = vmatpush2.bf16.msra.mxu0 0
    %730 = vmatprep.subr.bf16.mxu0 0
    %731 = vmatpush2.bf16.msra.mxu0 0
    %732 = vmatprep.subr.bf16.mxu0 0
    %733 = vmatpush2.bf16.msra.mxu0 0
    %734 = vmatprep.subr.bf16.mxu0 0
    %735 = vmatpush2.bf16.msra.mxu0 0
    %736 = vmatprep.subr.bf16.mxu0 0
    %737 = vmatpush2.bf16.msra.mxu0 0
    %738 = vmatprep.mubr.bf16.mxu0 0
    %739 = vmatmul.mubr.bf16.gmra.mxu0 %v636
    %v740 = vpop.f32.mrf.mxu0
    %v741 = vadd.f32 %v657, %v740
    %v742 = vpop.f32.mrf.mxu0
    %v743 = vpop.f32.mrf.mxu0
    %v744 = vadd.f32 %v657, %v743
    %v745 = vpop.f32.mrf.mxu0
    %746 = vdwg.mxu0
    %v747 = vmul.f32 %v741, 0.5
    %v748 = vmul.f32 %v744, 0.5
    %v749 = vmul.f32 %v741, 0.044715
    %v750 = vmul.f32 %v744, 0.044715
    %v751 = vmul.f32 %v749, %v741
    %v752 = vmul.f32 %v750, %v744
    %v753 = vmul.f32 %v751, %v741
    %v754 = vmul.f32 %v752, %v744
    %v755 = vadd.f32 %v741, %v753
    %v756 = vadd.f32 %v744, %v754
    %v757 = vmul.f32 %v755, 0.7978846
    %v758 = vmul.f32 %v756, 0.7978846
    %v759 = vtanh.pop %v757
    %v760 = vtanh.pop %v758
    %v761 = vadd.f32 %v759, 1.0
    %v762 = vadd.f32 %v760, 1.0
    %v763 = vmul.f32 %v747, %v761
    %v764 = vmul.f32 %v748, %v762
    %v765 = vpack.c.bf16 %v764, %v763
    %v766 = vld [vmem:[#allocation2 + $0x200] sm:$0xf]
    %v767 = vld [vmem:[#allocation2 + $0x204] sm:$0xf]
    %v768 = vld [vmem:[#allocation2 + $0x208] sm:$0xf]
    %v769 = vld [vmem:[#allocation2 + $0x20c] sm:$0xf]
    %v770 = vld [vmem:[#allocation2 + $0x210] sm:$0xf]
    %v771 = vld [vmem:[#allocation2 + $0x214] sm:$0xf]
    %v772 = vld [vmem:[#allocation2 + $0x218] sm:$0xf]
    %v773 = vld [vmem:[#allocation2 + $0x21c] sm:$0xf]
    %v774 = vld [vmem:[#allocation2 + $0x220] sm:$0xf]
    %v775 = vld [vmem:[#allocation2 + $0x224] sm:$0xf]
    %v776 = vld [vmem:[#allocation2 + $0x228] sm:$0xf]
    %v777 = vld [vmem:[#allocation2 + $0x22c] sm:$0xf]
    %v778 = vld [vmem:[#allocation2 + $0x230] sm:$0xf]
    %v779 = vld [vmem:[#allocation2 + $0x234] sm:$0xf]
    %v780 = vld [vmem:[#allocation2 + $0x238] sm:$0xf]
    %v781 = vld [vmem:[#allocation2 + $0x23c] sm:$0xf]
    %v782 = vld [vmem:[#allocation2 + $0x140] sm:$0xf]
    %v783 = vld [vmem:[#allocation2 + $0x144] sm:$0xf]
    %v784 = vld [vmem:[#allocation2 + $0x148] sm:$0xf]
    %v785 = vld [vmem:[#allocation2 + $0x14c] sm:$0xf]
    %v786 = vld [vmem:[#allocation2 + $0x150] sm:$0xf]
    %v787 = vld [vmem:[#allocation2 + $0x154] sm:$0xf]
    %v788 = vld [vmem:[#allocation2 + $0x158] sm:$0xf]
    %v789 = vld [vmem:[#allocation2 + $0x15c] sm:$0xf]
    %v790 = vld [vmem:[#allocation2 + $0x160] sm:$0xf]
    %v791 = vld [vmem:[#allocation2 + $0x164] sm:$0xf]
    %v792 = vld [vmem:[#allocation2 + $0x168] sm:$0xf]
    %v793 = vld [vmem:[#allocation2 + $0x16c] sm:$0xf]
    %v794 = vld [vmem:[#allocation2 + $0x170] sm:$0xf]
    %v795 = vld [vmem:[#allocation2 + $0x174] sm:$0xf]
    %v796 = vld [vmem:[#allocation2 + $0x178] sm:$0xf]
    %v797 = vld [vmem:[#allocation2 + $0x17c] sm:$0xf]
    %v798 = vld [vmem:[%s4 + $0x7] sm:$0x1]
    %v799 = vlaneseq
    %v800 = vshrl.u32 %v799, 7
    %v801 = vsub.s32 0, %v800
    %v802 = vrot.slane %v798, %v801
    %v819 = vunpack.c.l.b16 %v782
    %v820 = vunpack.c.l.b16 %v783
    %v821 = vunpack.c.l.b16 %v784
    %v822 = vunpack.c.l.b16 %v785
    %v823 = vunpack.c.l.b16 %v786
    %v824 = vunpack.c.l.b16 %v787
    %v825 = vunpack.c.l.b16 %v788
    %v826 = vunpack.c.l.b16 %v789
    %v827 = vunpack.c.l.b16 %v790
    %v828 = vunpack.c.l.b16 %v791
    %v829 = vunpack.c.l.b16 %v792
    %v830 = vunpack.c.l.b16 %v793
    %v831 = vunpack.c.l.b16 %v794
    %v832 = vunpack.c.l.b16 %v795
    %v833 = vunpack.c.l.b16 %v796
    %v834 = vunpack.c.l.b16 %v797
    %v835 = vpack.c.b16 %v820, %v819
    %v836 = vpack.c.b16 %v822, %v821
    %v837 = vpack.c.b16 %v824, %v823
    %v838 = vpack.c.b16 %v826, %v825
    %v839 = vpack.c.b16 %v828, %v827
    %v840 = vpack.c.b16 %v830, %v829
    %v841 = vpack.c.b16 %v832, %v831
    %v842 = vpack.c.b16 %v834, %v833
    %851 = vmatprep.subr.bf16.mxu0 0
    %852 = vmatpush1.bf16.msra.mxu0 %v842
    %853 = vmatprep.subr.bf16.mxu0 0
    %854 = vmatpush1.bf16.msra.mxu0 %v841
    %855 = vmatprep.subr.bf16.mxu0 0
    %856 = vmatpush1.bf16.msra.mxu0 %v840
    %857 = vmatprep.subr.bf16.mxu0 0
    %858 = vmatpush1.bf16.msra.mxu0 %v839
    %859 = vmatprep.subr.bf16.mxu0 0
    %860 = vmatpush1.bf16.msra.mxu0 %v838
    %861 = vmatprep.subr.bf16.mxu0 0
    %862 = vmatpush1.bf16.msra.mxu0 %v837
    %863 = vmatprep.subr.bf16.mxu0 0
    %864 = vmatpush1.bf16.msra.mxu0 %v836
    %865 = vmatprep.subr.bf16.mxu0 0
    %866 = vmatpush1.bf16.msra.mxu0 %v835
    %867 = vmatprep.subr.bf16.mxu0 0
    %868 = vmatpush2.bf16.msra.mxu0 0
    %869 = vmatprep.subr.bf16.mxu0 0
    %870 = vmatpush2.bf16.msra.mxu0 0
    %871 = vmatprep.subr.bf16.mxu0 0
    %872 = vmatpush2.bf16.msra.mxu0 0
    %873 = vmatprep.subr.bf16.mxu0 0
    %874 = vmatpush2.bf16.msra.mxu0 0
    %875 = vmatprep.subr.bf16.mxu0 0
    %876 = vmatpush2.bf16.msra.mxu0 0
    %877 = vmatprep.subr.bf16.mxu0 0
    %878 = vmatpush2.bf16.msra.mxu0 0
    %879 = vmatprep.subr.bf16.mxu0 0
    %880 = vmatpush2.bf16.msra.mxu0 0
    %881 = vmatprep.subr.bf16.mxu0 0
    %882 = vmatpush2.bf16.msra.mxu0 0
    %883 = vmatprep.mubr.bf16.mxu0 0
    %884 = vmatmul.mubr.bf16.gmra.mxu0 %v636
    %v885 = vpop.f32.mrf.mxu0
    %v886 = vadd.f32 %v802, %v885
    %v887 = vpop.f32.mrf.mxu0
    %v888 = vpop.f32.mrf.mxu0
    %v889 = vadd.f32 %v802, %v888
    %v890 = vpop.f32.mrf.mxu0
    %891 = vdwg.mxu0
    %v892 = vmul.f32 %v886, 0.5
    %v893 = vmul.f32 %v889, 0.5
    %v894 = vmul.f32 %v886, 0.044715
    %v895 = vmul.f32 %v889, 0.044715
    %v896 = vmul.f32 %v894, %v886
    %v897 = vmul.f32 %v895, %v889
    %v898 = vmul.f32 %v896, %v886
    %v899 = vmul.f32 %v897, %v889
    %v900 = vadd.f32 %v886, %v898
    %v901 = vadd.f32 %v889, %v899
    %v902 = vmul.f32 %v900, 0.7978846
    %v903 = vmul.f32 %v901, 0.7978846
    %v904 = vtanh.pop %v902
    %v905 = vtanh.pop %v903
    %v906 = vadd.f32 %v904, 1.0
    %v907 = vadd.f32 %v905, 1.0
    %v908 = vmul.f32 %v892, %v906
    %v909 = vmul.f32 %v893, %v907
    %v910 = vpack.c.bf16 %v909, %v908
    %v911 = vld [vmem:[#allocation2 + $0x240] sm:$0xf]
    %v912 = vld [vmem:[#allocation2 + $0x244] sm:$0xf]
    %v913 = vld [vmem:[#allocation2 + $0x248] sm:$0xf]
    %v914 = vld [vmem:[#allocation2 + $0x24c] sm:$0xf]
    %v915 = vld [vmem:[#allocation2 + $0x250] sm:$0xf]
    %v916 = vld [vmem:[#allocation2 + $0x254] sm:$0xf]
    %v917 = vld [vmem:[#allocation2 + $0x258] sm:$0xf]
    %v918 = vld [vmem:[#allocation2 + $0x25c] sm:$0xf]
    %v919 = vld [vmem:[#allocation2 + $0x260] sm:$0xf]
    %v920 = vld [vmem:[#allocation2 + $0x264] sm:$0xf]
    %v921 = vld [vmem:[#allocation2 + $0x268] sm:$0xf]
    %v922 = vld [vmem:[#allocation2 + $0x26c] sm:$0xf]
    %v923 = vld [vmem:[#allocation2 + $0x270] sm:$0xf]
    %v924 = vld [vmem:[#allocation2 + $0x274] sm:$0xf]
    %v925 = vld [vmem:[#allocation2 + $0x278] sm:$0xf]
    %v926 = vld [vmem:[#allocation2 + $0x27c] sm:$0xf]
    %v943 = vunpack.c.l.b16 %v911
    %v944 = vunpack.c.l.b16 %v912
    %v945 = vunpack.c.l.b16 %v913
    %v946 = vunpack.c.l.b16 %v914
    %v947 = vunpack.c.l.b16 %v915
    %v948 = vunpack.c.l.b16 %v916
    %v949 = vunpack.c.l.b16 %v917
    %v950 = vunpack.c.l.b16 %v918
    %v951 = vunpack.c.l.b16 %v919
    %v952 = vunpack.c.l.b16 %v920
    %v953 = vunpack.c.l.b16 %v921
    %v954 = vunpack.c.l.b16 %v922
    %v955 = vunpack.c.l.b16 %v923
    %v956 = vunpack.c.l.b16 %v924
    %v957 = vunpack.c.l.b16 %v925
    %v958 = vunpack.c.l.b16 %v926
    %v959 = vpack.c.b16 %v944, %v943
    %v960 = vpack.c.b16 %v946, %v945
    %v961 = vpack.c.b16 %v948, %v947
    %v962 = vpack.c.b16 %v950, %v949
    %v963 = vpack.c.b16 %v952, %v951
    %v964 = vpack.c.b16 %v954, %v953
    %v965 = vpack.c.b16 %v956, %v955
    %v966 = vpack.c.b16 %v958, %v957
    %975 = vmatprep.subr.bf16.mxu0 0
    %976 = vmatpush1.bf16.msra.mxu0 %v966
    %977 = vmatprep.subr.bf16.mxu0 0
    %978 = vmatpush1.bf16.msra.mxu0 %v965
    %979 = vmatprep.subr.bf16.mxu0 0
    %980 = vmatpush1.bf16.msra.mxu0 %v964
    %981 = vmatprep.subr.bf16.mxu0 0
    %982 = vmatpush1.bf16.msra.mxu0 %v963
    %983 = vmatprep.subr.bf16.mxu0 0
    %984 = vmatpush1.bf16.msra.mxu0 %v962
    %985 = vmatprep.subr.bf16.mxu0 0
    %986 = vmatpush1.bf16.msra.mxu0 %v961
    %987 = vmatprep.subr.bf16.mxu0 0
    %988 = vmatpush1.bf16.msra.mxu0 %v960
    %989 = vmatprep.subr.bf16.mxu0 0
    %990 = vmatpush1.bf16.msra.mxu0 %v959
    %991 = vmatprep.subr.bf16.mxu0 0
    %992 = vmatpush2.bf16.msra.mxu0 0
    %993 = vmatprep.subr.bf16.mxu0 0
    %994 = vmatpush2.bf16.msra.mxu0 0
    %995 = vmatprep.subr.bf16.mxu0 0
    %996 = vmatpush2.bf16.msra.mxu0 0
    %997 = vmatprep.subr.bf16.mxu0 0
    %998 = vmatpush2.bf16.msra.mxu0 0
    %999 = vmatprep.subr.bf16.mxu0 0
    %1000 = vmatpush2.bf16.msra.mxu0 0
    %1001 = vmatprep.subr.bf16.mxu0 0
    %1002 = vmatpush2.bf16.msra.mxu0 0
    %1003 = vmatprep.subr.bf16.mxu0 0
    %1004 = vmatpush2.bf16.msra.mxu0 0
    %1005 = vmatprep.subr.bf16.mxu0 0
    %1006 = vmatpush2.bf16.msra.mxu0 0
    %1007 = vmatprep.mubr.bf16.mxu0 0
    %1008 = vmatmul.mubr.bf16.gmra.mxu0 %v910
    %v1009 = vpop.f32.mrf.mxu0
    %v1010 = vadd.f32 0.0, %v1009
    %v1011 = vpop.f32.mrf.mxu0
    %v1012 = vpop.f32.mrf.mxu0
    %v1013 = vadd.f32 0.0, %v1012
    %v1014 = vpop.f32.mrf.mxu0
    %1015 = vdwg.mxu0
    %v1032 = vunpack.c.l.b16 %v766
    %v1033 = vunpack.c.l.b16 %v767
    %v1034 = vunpack.c.l.b16 %v768
    %v1035 = vunpack.c.l.b16 %v769
    %v1036 = vunpack.c.l.b16 %v770
    %v1037 = vunpack.c.l.b16 %v771
    %v1038 = vunpack.c.l.b16 %v772
    %v1039 = vunpack.c.l.b16 %v773
    %v1040 = vunpack.c.l.b16 %v774
    %v1041 = vunpack.c.l.b16 %v775
    %v1042 = vunpack.c.l.b16 %v776
    %v1043 = vunpack.c.l.b16 %v777
    %v1044 = vunpack.c.l.b16 %v778
    %v1045 = vunpack.c.l.b16 %v779
    %v1046 = vunpack.c.l.b16 %v780
    %v1047 = vunpack.c.l.b16 %v781
    %v1048 = vpack.c.b16 %v1033, %v1032
    %v1049 = vpack.c.b16 %v1035, %v1034
    %v1050 = vpack.c.b16 %v1037, %v1036
    %v1051 = vpack.c.b16 %v1039, %v1038
    %v1052 = vpack.c.b16 %v1041, %v1040
    %v1053 = vpack.c.b16 %v1043, %v1042
    %v1054 = vpack.c.b16 %v1045, %v1044
    %v1055 = vpack.c.b16 %v1047, %v1046
    %1064 = vmatprep.subr.bf16.mxu0 0
    %1065 = vmatpush1.bf16.msra.mxu0 %v1055
    %1066 = vmatprep.subr.bf16.mxu0 0
    %1067 = vmatpush1.bf16.msra.mxu0 %v1054
    %1068 = vmatprep.subr.bf16.mxu0 0
    %1069 = vmatpush1.bf16.msra.mxu0 %v1053
    %1070 = vmatprep.subr.bf16.mxu0 0
    %1071 = vmatpush1.bf16.msra.mxu0 %v1052
    %1072 = vmatprep.subr.bf16.mxu0 0
    %1073 = vmatpush1.bf16.msra.mxu0 %v1051
    %1074 = vmatprep.subr.bf16.mxu0 0
    %1075 = vmatpush1.bf16.msra.mxu0 %v1050
    %1076 = vmatprep.subr.bf16.mxu0 0
    %1077 = vmatpush1.bf16.msra.mxu0 %v1049
    %1078 = vmatprep.subr.bf16.mxu0 0
    %1079 = vmatpush1.bf16.msra.mxu0 %v1048
    %1080 = vmatprep.subr.bf16.mxu0 0
    %1081 = vmatpush2.bf16.msra.mxu0 0
    %1082 = vmatprep.subr.bf16.mxu0 0
    %1083 = vmatpush2.bf16.msra.mxu0 0
    %1084 = vmatprep.subr.bf16.mxu0 0
    %1085 = vmatpush2.bf16.msra.mxu0 0
    %1086 = vmatprep.subr.bf16.mxu0 0
    %1087 = vmatpush2.bf16.msra.mxu0 0
    %1088 = vmatprep.subr.bf16.mxu0 0
    %1089 = vmatpush2.bf16.msra.mxu0 0
    %1090 = vmatprep.subr.bf16.mxu0 0
    %1091 = vmatpush2.bf16.msra.mxu0 0
    %1092 = vmatprep.subr.bf16.mxu0 0
    %1093 = vmatpush2.bf16.msra.mxu0 0
    %1094 = vmatprep.subr.bf16.mxu0 0
    %1095 = vmatpush2.bf16.msra.mxu0 0
    %1096 = vmatprep.mubr.bf16.mxu0 0
    %1097 = vmatmul.mubr.bf16.gmra.mxu0 %v765
    %v1098 = vpop.f32.mrf.mxu0
    %v1099 = vadd.f32 %v1010, %v1098
    %v1100 = vpop.f32.mrf.mxu0
    %v1101 = vpop.f32.mrf.mxu0
    %v1102 = vadd.f32 %v1013, %v1101
    %v1103 = vpop.f32.mrf.mxu0
    %1104 = vdwg.mxu0
    %v1105 = vld [vmem:[#allocation2 + $0x180] sm:$0xf]
    %v1106 = vld [vmem:[#allocation2 + $0x184] sm:$0xf]
    %v1107 = vld [vmem:[#allocation2 + $0x188] sm:$0xf]
    %v1108 = vld [vmem:[#allocation2 + $0x18c] sm:$0xf]
    %v1109 = vld [vmem:[#allocation2 + $0x190] sm:$0xf]
    %v1110 = vld [vmem:[#allocation2 + $0x194] sm:$0xf]
    %v1111 = vld [vmem:[#allocation2 + $0x198] sm:$0xf]
    %v1112 = vld [vmem:[#allocation2 + $0x19c] sm:$0xf]
    %v1113 = vld [vmem:[#allocation2 + $0x1a0] sm:$0xf]
    %v1114 = vld [vmem:[#allocation2 + $0x1a4] sm:$0xf]
    %v1115 = vld [vmem:[#allocation2 + $0x1a8] sm:$0xf]
    %v1116 = vld [vmem:[#allocation2 + $0x1ac] sm:$0xf]
    %v1117 = vld [vmem:[#allocation2 + $0x1b0] sm:$0xf]
    %v1118 = vld [vmem:[#allocation2 + $0x1b4] sm:$0xf]
    %v1119 = vld [vmem:[#allocation2 + $0x1b8] sm:$0xf]
    %v1120 = vld [vmem:[#allocation2 + $0x1bc] sm:$0xf]
    %v1121 = vld [vmem:[%s4 + $0x8] sm:$0x1]
    %v1122 = vlaneseq
    %v1123 = vshrl.u32 %v1122, 7
    %v1124 = vsub.s32 0, %v1123
    %v1125 = vrot.slane %v1121, %v1124
    %v1142 = vunpack.c.l.b16 %v1105
    %v1143 = vunpack.c.l.b16 %v1106
    %v1144 = vunpack.c.l.b16 %v1107
    %v1145 = vunpack.c.l.b16 %v1108
    %v1146 = vunpack.c.l.b16 %v1109
    %v1147 = vunpack.c.l.b16 %v1110
    %v1148 = vunpack.c.l.b16 %v1111
    %v1149 = vunpack.c.l.b16 %v1112
    %v1150 = vunpack.c.l.b16 %v1113
    %v1151 = vunpack.c.l.b16 %v1114
    %v1152 = vunpack.c.l.b16 %v1115
    %v1153 = vunpack.c.l.b16 %v1116
    %v1154 = vunpack.c.l.b16 %v1117
    %v1155 = vunpack.c.l.b16 %v1118
    %v1156 = vunpack.c.l.b16 %v1119
    %v1157 = vunpack.c.l.b16 %v1120
    %v1158 = vpack.c.b16 %v1143, %v1142
    %v1159 = vpack.c.b16 %v1145, %v1144
    %v1160 = vpack.c.b16 %v1147, %v1146
    %v1161 = vpack.c.b16 %v1149, %v1148
    %v1162 = vpack.c.b16 %v1151, %v1150
    %v1163 = vpack.c.b16 %v1153, %v1152
    %v1164 = vpack.c.b16 %v1155, %v1154
    %v1165 = vpack.c.b16 %v1157, %v1156
    %1174 = vmatprep.subr.bf16.mxu0 0
    %1175 = vmatpush1.bf16.msra.mxu0 %v1165
    %1176 = vmatprep.subr.bf16.mxu0 0
    %1177 = vmatpush1.bf16.msra.mxu0 %v1164
    %1178 = vmatprep.subr.bf16.mxu0 0
    %1179 = vmatpush1.bf16.msra.mxu0 %v1163
    %1180 = vmatprep.subr.bf16.mxu0 0
    %1181 = vmatpush1.bf16.msra.mxu0 %v1162
    %1182 = vmatprep.subr.bf16.mxu0 0
    %1183 = vmatpush1.bf16.msra.mxu0 %v1161
    %1184 = vmatprep.subr.bf16.mxu0 0
    %1185 = vmatpush1.bf16.msra.mxu0 %v1160
    %1186 = vmatprep.subr.bf16.mxu0 0
    %1187 = vmatpush1.bf16.msra.mxu0 %v1159
    %1188 = vmatprep.subr.bf16.mxu0 0
    %1189 = vmatpush1.bf16.msra.mxu0 %v1158
    %1190 = vmatprep.subr.bf16.mxu0 0
    %1191 = vmatpush2.bf16.msra.mxu0 0
    %1192 = vmatprep.subr.bf16.mxu0 0
    %1193 = vmatpush2.bf16.msra.mxu0 0
    %1194 = vmatprep.subr.bf16.mxu0 0
    %1195 = vmatpush2.bf16.msra.mxu0 0
    %1196 = vmatprep.subr.bf16.mxu0 0
    %1197 = vmatpush2.bf16.msra.mxu0 0
    %1198 = vmatprep.subr.bf16.mxu0 0
    %1199 = vmatpush2.bf16.msra.mxu0 0
    %1200 = vmatprep.subr.bf16.mxu0 0
    %1201 = vmatpush2.bf16.msra.mxu0 0
    %1202 = vmatprep.subr.bf16.mxu0 0
    %1203 = vmatpush2.bf16.msra.mxu0 0
    %1204 = vmatprep.subr.bf16.mxu0 0
    %1205 = vmatpush2.bf16.msra.mxu0 0
    %1206 = vmatprep.mubr.bf16.mxu0 0
    %1207 = vmatmul.mubr.bf16.gmra.mxu0 %v636
    %v1208 = vpop.f32.mrf.mxu0
    %v1209 = vadd.f32 %v1125, %v1208
    %v1210 = vpop.f32.mrf.mxu0
    %v1211 = vpop.f32.mrf.mxu0
    %v1212 = vadd.f32 %v1125, %v1211
    %v1213 = vpop.f32.mrf.mxu0
    %1214 = vdwg.mxu0
    %v1215 = vmul.f32 %v1209, 0.5
    %v1216 = vmul.f32 %v1212, 0.5
    %v1217 = vmul.f32 %v1209, 0.044715
    %v1218 = vmul.f32 %v1212, 0.044715
    %v1219 = vmul.f32 %v1217, %v1209
    %v1220 = vmul.f32 %v1218, %v1212
    %v1221 = vmul.f32 %v1219, %v1209
    %v1222 = vmul.f32 %v1220, %v1212
    %v1223 = vadd.f32 %v1209, %v1221
    %v1224 = vadd.f32 %v1212, %v1222
    %v1225 = vmul.f32 %v1223, 0.7978846
    %v1226 = vmul.f32 %v1224, 0.7978846
    %v1227 = vtanh.pop %v1225
    %v1228 = vtanh.pop %v1226
    %v1229 = vadd.f32 %v1227, 1.0
    %v1230 = vadd.f32 %v1228, 1.0
    %v1231 = vmul.f32 %v1215, %v1229
    %v1232 = vmul.f32 %v1216, %v1230
    %v1233 = vpack.c.bf16 %v1232, %v1231
    %v1234 = vld [vmem:[#allocation2 + $0x280] sm:$0xf]
    %v1235 = vld [vmem:[#allocation2 + $0x284] sm:$0xf]
    %v1236 = vld [vmem:[#allocation2 + $0x288] sm:$0xf]
    %v1237 = vld [vmem:[#allocation2 + $0x28c] sm:$0xf]
    %v1238 = vld [vmem:[#allocation2 + $0x290] sm:$0xf]
    %v1239 = vld [vmem:[#allocation2 + $0x294] sm:$0xf]
    %v1240 = vld [vmem:[#allocation2 + $0x298] sm:$0xf]
    %v1241 = vld [vmem:[#allocation2 + $0x29c] sm:$0xf]
    %v1242 = vld [vmem:[#allocation2 + $0x2a0] sm:$0xf]
    %v1243 = vld [vmem:[#allocation2 + $0x2a4] sm:$0xf]
    %v1244 = vld [vmem:[#allocation2 + $0x2a8] sm:$0xf]
    %v1245 = vld [vmem:[#allocation2 + $0x2ac] sm:$0xf]
    %v1246 = vld [vmem:[#allocation2 + $0x2b0] sm:$0xf]
    %v1247 = vld [vmem:[#allocation2 + $0x2b4] sm:$0xf]
    %v1248 = vld [vmem:[#allocation2 + $0x2b8] sm:$0xf]
    %v1249 = vld [vmem:[#allocation2 + $0x2bc] sm:$0xf]
    %v1266 = vunpack.c.l.b16 %v1234
    %v1267 = vunpack.c.l.b16 %v1235
    %v1268 = vunpack.c.l.b16 %v1236
    %v1269 = vunpack.c.l.b16 %v1237
    %v1270 = vunpack.c.l.b16 %v1238
    %v1271 = vunpack.c.l.b16 %v1239
    %v1272 = vunpack.c.l.b16 %v1240
    %v1273 = vunpack.c.l.b16 %v1241
    %v1274 = vunpack.c.l.b16 %v1242
    %v1275 = vunpack.c.l.b16 %v1243
    %v1276 = vunpack.c.l.b16 %v1244
    %v1277 = vunpack.c.l.b16 %v1245
    %v1278 = vunpack.c.l.b16 %v1246
    %v1279 = vunpack.c.l.b16 %v1247
    %v1280 = vunpack.c.l.b16 %v1248
    %v1281 = vunpack.c.l.b16 %v1249
    %v1282 = vpack.c.b16 %v1267, %v1266
    %v1283 = vpack.c.b16 %v1269, %v1268
    %v1284 = vpack.c.b16 %v1271, %v1270
    %v1285 = vpack.c.b16 %v1273, %v1272
    %v1286 = vpack.c.b16 %v1275, %v1274
    %v1287 = vpack.c.b16 %v1277, %v1276
    %v1288 = vpack.c.b16 %v1279, %v1278
    %v1289 = vpack.c.b16 %v1281, %v1280
    %1298 = vmatprep.subr.bf16.mxu0 0
    %1299 = vmatpush1.bf16.msra.mxu0 %v1289
    %1300 = vmatprep.subr.bf16.mxu0 0
    %1301 = vmatpush1.bf16.msra.mxu0 %v1288
    %1302 = vmatprep.subr.bf16.mxu0 0
    %1303 = vmatpush1.bf16.msra.mxu0 %v1287
    %1304 = vmatprep.subr.bf16.mxu0 0
    %1305 = vmatpush1.bf16.msra.mxu0 %v1286
    %1306 = vmatprep.subr.bf16.mxu0 0
    %1307 = vmatpush1.bf16.msra.mxu0 %v1285
    %1308 = vmatprep.subr.bf16.mxu0 0
    %1309 = vmatpush1.bf16.msra.mxu0 %v1284
    %1310 = vmatprep.subr.bf16.mxu0 0
    %1311 = vmatpush1.bf16.msra.mxu0 %v1283
    %1312 = vmatprep.subr.bf16.mxu0 0
    %1313 = vmatpush1.bf16.msra.mxu0 %v1282
    %1314 = vmatprep.subr.bf16.mxu0 0
    %1315 = vmatpush2.bf16.msra.mxu0 0
    %1316 = vmatprep.subr.bf16.mxu0 0
    %1317 = vmatpush2.bf16.msra.mxu0 0
    %1318 = vmatprep.subr.bf16.mxu0 0
    %1319 = vmatpush2.bf16.msra.mxu0 0
    %1320 = vmatprep.subr.bf16.mxu0 0
    %1321 = vmatpush2.bf16.msra.mxu0 0
    %1322 = vmatprep.subr.bf16.mxu0 0
    %1323 = vmatpush2.bf16.msra.mxu0 0
    %1324 = vmatprep.subr.bf16.mxu0 0
    %1325 = vmatpush2.bf16.msra.mxu0 0
    %1326 = vmatprep.subr.bf16.mxu0 0
    %1327 = vmatpush2.bf16.msra.mxu0 0
    %1328 = vmatprep.subr.bf16.mxu0 0
    %1329 = vmatpush2.bf16.msra.mxu0 0
    %1330 = vmatprep.mubr.bf16.mxu0 0
    %1331 = vmatmul.mubr.bf16.gmra.mxu0 %v1233
    %v1332 = vpop.f32.mrf.mxu0
    %v1333 = vadd.f32 0.0, %v1332
    %v1334 = vpop.f32.mrf.mxu0
    %v1335 = vpop.f32.mrf.mxu0
    %v1336 = vadd.f32 0.0, %v1335
    %v1337 = vpop.f32.mrf.mxu0
    %1338 = vdwg.mxu0
    %v1339 = vadd.f32 %v1099, %v1333
    %v1340 = vadd.f32 %v1102, %v1336
    %v1341 = vld [vmem:[#allocation2 + $0x1c0] sm:$0xf]
    %v1342 = vld [vmem:[#allocation2 + $0x1c4] sm:$0xf]
    %v1343 = vld [vmem:[#allocation2 + $0x1c8] sm:$0xf]
    %v1344 = vld [vmem:[#allocation2 + $0x1cc] sm:$0xf]
    %v1345 = vld [vmem:[#allocation2 + $0x1d0] sm:$0xf]
    %v1346 = vld [vmem:[#allocation2 + $0x1d4] sm:$0xf]
    %v1347 = vld [vmem:[#allocation2 + $0x1d8] sm:$0xf]
    %v1348 = vld [vmem:[#allocation2 + $0x1dc] sm:$0xf]
    %v1349 = vld [vmem:[#allocation2 + $0x1e0] sm:$0xf]
    %v1350 = vld [vmem:[#allocation2 + $0x1e4] sm:$0xf]
    %v1351 = vld [vmem:[#allocation2 + $0x1e8] sm:$0xf]
    %v1352 = vld [vmem:[#allocation2 + $0x1ec] sm:$0xf]
    %v1353 = vld [vmem:[#allocation2 + $0x1f0] sm:$0xf]
    %v1354 = vld [vmem:[#allocation2 + $0x1f4] sm:$0xf]
    %v1355 = vld [vmem:[#allocation2 + $0x1f8] sm:$0xf]
    %v1356 = vld [vmem:[#allocation2 + $0x1fc] sm:$0xf]
    %v1357 = vld [vmem:[%s4 + $0x9] sm:$0x1]
    %v1358 = vlaneseq
    %v1359 = vshrl.u32 %v1358, 7
    %v1360 = vsub.s32 0, %v1359
    %v1361 = vrot.slane %v1357, %v1360
    %v1378 = vunpack.c.l.b16 %v1341
    %v1379 = vunpack.c.l.b16 %v1342
    %v1380 = vunpack.c.l.b16 %v1343
    %v1381 = vunpack.c.l.b16 %v1344
    %v1382 = vunpack.c.l.b16 %v1345
    %v1383 = vunpack.c.l.b16 %v1346
    %v1384 = vunpack.c.l.b16 %v1347
    %v1385 = vunpack.c.l.b16 %v1348
    %v1386 = vunpack.c.l.b16 %v1349
    %v1387 = vunpack.c.l.b16 %v1350
    %v1388 = vunpack.c.l.b16 %v1351
    %v1389 = vunpack.c.l.b16 %v1352
    %v1390 = vunpack.c.l.b16 %v1353
    %v1391 = vunpack.c.l.b16 %v1354
    %v1392 = vunpack.c.l.b16 %v1355
    %v1393 = vunpack.c.l.b16 %v1356
    %v1394 = vpack.c.b16 %v1379, %v1378
    %v1395 = vpack.c.b16 %v1381, %v1380
    %v1396 = vpack.c.b16 %v1383, %v1382
    %v1397 = vpack.c.b16 %v1385, %v1384
    %v1398 = vpack.c.b16 %v1387, %v1386
    %v1399 = vpack.c.b16 %v1389, %v1388
    %v1400 = vpack.c.b16 %v1391, %v1390
    %v1401 = vpack.c.b16 %v1393, %v1392
    %1410 = vmatprep.subr.bf16.mxu0 0
    %1411 = vmatpush1.bf16.msra.mxu0 %v1401
    %1412 = vmatprep.subr.bf16.mxu0 0
    %1413 = vmatpush1.bf16.msra.mxu0 %v1400
    %1414 = vmatprep.subr.bf16.mxu0 0
    %1415 = vmatpush1.bf16.msra.mxu0 %v1399
    %1416 = vmatprep.subr.bf16.mxu0 0
    %1417 = vmatpush1.bf16.msra.mxu0 %v1398
    %1418 = vmatprep.subr.bf16.mxu0 0
    %1419 = vmatpush1.bf16.msra.mxu0 %v1397
    %1420 = vmatprep.subr.bf16.mxu0 0
    %1421 = vmatpush1.bf16.msra.mxu0 %v1396
    %1422 = vmatprep.subr.bf16.mxu0 0
    %1423 = vmatpush1.bf16.msra.mxu0 %v1395
    %1424 = vmatprep.subr.bf16.mxu0 0
    %1425 = vmatpush1.bf16.msra.mxu0 %v1394
    %1426 = vmatprep.subr.bf16.mxu0 0
    %1427 = vmatpush2.bf16.msra.mxu0 0
    %1428 = vmatprep.subr.bf16.mxu0 0
    %1429 = vmatpush2.bf16.msra.mxu0 0
    %1430 = vmatprep.subr.bf16.mxu0 0
    %1431 = vmatpush2.bf16.msra.mxu0 0
    %1432 = vmatprep.subr.bf16.mxu0 0
    %1433 = vmatpush2.bf16.msra.mxu0 0
    %1434 = vmatprep.subr.bf16.mxu0 0
    %1435 = vmatpush2.bf16.msra.mxu0 0
    %1436 = vmatprep.subr.bf16.mxu0 0
    %1437 = vmatpush2.bf16.msra.mxu0 0
    %1438 = vmatprep.subr.bf16.mxu0 0
    %1439 = vmatpush2.bf16.msra.mxu0 0
    %1440 = vmatprep.subr.bf16.mxu0 0
    %1441 = vmatpush2.bf16.msra.mxu0 0
    %1442 = vmatprep.mubr.bf16.mxu0 0
    %1443 = vmatmul.mubr.bf16.gmra.mxu0 %v636
    %v1444 = vpop.f32.mrf.mxu0
    %v1445 = vadd.f32 %v1361, %v1444
    %v1446 = vpop.f32.mrf.mxu0
    %v1447 = vpop.f32.mrf.mxu0
    %v1448 = vadd.f32 %v1361, %v1447
    %v1449 = vpop.f32.mrf.mxu0
    %1450 = vdwg.mxu0
    %v1451 = vmul.f32 %v1445, 0.5
    %v1452 = vmul.f32 %v1448, 0.5
    %v1453 = vmul.f32 %v1445, 0.044715
    %v1454 = vmul.f32 %v1448, 0.044715
    %v1455 = vmul.f32 %v1453, %v1445
    %v1456 = vmul.f32 %v1454, %v1448
    %v1457 = vmul.f32 %v1455, %v1445
    %v1458 = vmul.f32 %v1456, %v1448
    %v1459 = vadd.f32 %v1445, %v1457
    %v1460 = vadd.f32 %v1448, %v1458
    %v1461 = vmul.f32 %v1459, 0.7978846
    %v1462 = vmul.f32 %v1460, 0.7978846
    %v1463 = vtanh.pop %v1461
    %v1464 = vtanh.pop %v1462
    %v1465 = vadd.f32 %v1463, 1.0
    %v1466 = vadd.f32 %v1464, 1.0
    %v1467 = vmul.f32 %v1451, %v1465
    %v1468 = vmul.f32 %v1452, %v1466
    %v1469 = vpack.c.bf16 %v1468, %v1467
    %v1470 = vld [vmem:[#allocation2 + $0x2c0] sm:$0xf]
    %v1471 = vld [vmem:[#allocation2 + $0x2c4] sm:$0xf]
    %v1472 = vld [vmem:[#allocation2 + $0x2c8] sm:$0xf]
    %v1473 = vld [vmem:[#allocation2 + $0x2cc] sm:$0xf]
    %v1474 = vld [vmem:[#allocation2 + $0x2d0] sm:$0xf]
    %v1475 = vld [vmem:[#allocation2 + $0x2d4] sm:$0xf]
    %v1476 = vld [vmem:[#allocation2 + $0x2d8] sm:$0xf]
    %v1477 = vld [vmem:[#allocation2 + $0x2dc] sm:$0xf]
    %v1478 = vld [vmem:[#allocation2 + $0x2e0] sm:$0xf]
    %v1479 = vld [vmem:[#allocation2 + $0x2e4] sm:$0xf]
    %v1480 = vld [vmem:[#allocation2 + $0x2e8] sm:$0xf]
    %v1481 = vld [vmem:[#allocation2 + $0x2ec] sm:$0xf]
    %v1482 = vld [vmem:[#allocation2 + $0x2f0] sm:$0xf]
    %v1483 = vld [vmem:[#allocation2 + $0x2f4] sm:$0xf]
    %v1484 = vld [vmem:[#allocation2 + $0x2f8] sm:$0xf]
    %v1485 = vld [vmem:[#allocation2 + $0x2fc] sm:$0xf]
    %v1502 = vunpack.c.l.b16 %v1470
    %v1503 = vunpack.c.l.b16 %v1471
    %v1504 = vunpack.c.l.b16 %v1472
    %v1505 = vunpack.c.l.b16 %v1473
    %v1506 = vunpack.c.l.b16 %v1474
    %v1507 = vunpack.c.l.b16 %v1475
    %v1508 = vunpack.c.l.b16 %v1476
    %v1509 = vunpack.c.l.b16 %v1477
    %v1510 = vunpack.c.l.b16 %v1478
    %v1511 = vunpack.c.l.b16 %v1479
    %v1512 = vunpack.c.l.b16 %v1480
    %v1513 = vunpack.c.l.b16 %v1481
    %v1514 = vunpack.c.l.b16 %v1482
    %v1515 = vunpack.c.l.b16 %v1483
    %v1516 = vunpack.c.l.b16 %v1484
    %v1517 = vunpack.c.l.b16 %v1485
    %v1518 = vpack.c.b16 %v1503, %v1502
    %v1519 = vpack.c.b16 %v1505, %v1504
    %v1520 = vpack.c.b16 %v1507, %v1506
    %v1521 = vpack.c.b16 %v1509, %v1508
    %v1522 = vpack.c.b16 %v1511, %v1510
    %v1523 = vpack.c.b16 %v1513, %v1512
    %v1524 = vpack.c.b16 %v1515, %v1514
    %v1525 = vpack.c.b16 %v1517, %v1516
    %1534 = vmatprep.subr.bf16.mxu0 0
    %1535 = vmatpush1.bf16.msra.mxu0 %v1525
    %1536 = vmatprep.subr.bf16.mxu0 0
    %1537 = vmatpush1.bf16.msra.mxu0 %v1524
    %1538 = vmatprep.subr.bf16.mxu0 0
    %1539 = vmatpush1.bf16.msra.mxu0 %v1523
    %1540 = vmatprep.subr.bf16.mxu0 0
    %1541 = vmatpush1.bf16.msra.mxu0 %v1522
    %1542 = vmatprep.subr.bf16.mxu0 0
    %1543 = vmatpush1.bf16.msra.mxu0 %v1521
    %1544 = vmatprep.subr.bf16.mxu0 0
    %1545 = vmatpush1.bf16.msra.mxu0 %v1520
    %1546 = vmatprep.subr.bf16.mxu0 0
    %1547 = vmatpush1.bf16.msra.mxu0 %v1519
    %1548 = vmatprep.subr.bf16.mxu0 0
    %1549 = vmatpush1.bf16.msra.mxu0 %v1518
    %1550 = vmatprep.subr.bf16.mxu0 0
    %1551 = vmatpush2.bf16.msra.mxu0 0
    %1552 = vmatprep.subr.bf16.mxu0 0
    %1553 = vmatpush2.bf16.msra.mxu0 0
    %1554 = vmatprep.subr.bf16.mxu0 0
    %1555 = vmatpush2.bf16.msra.mxu0 0
    %1556 = vmatprep.subr.bf16.mxu0 0
    %1557 = vmatpush2.bf16.msra.mxu0 0
    %1558 = vmatprep.subr.bf16.mxu0 0
    %1559 = vmatpush2.bf16.msra.mxu0 0
    %1560 = vmatprep.subr.bf16.mxu0 0
    %1561 = vmatpush2.bf16.msra.mxu0 0
    %1562 = vmatprep.subr.bf16.mxu0 0
    %1563 = vmatpush2.bf16.msra.mxu0 0
    %1564 = vmatprep.subr.bf16.mxu0 0
    %1565 = vmatpush2.bf16.msra.mxu0 0
    %1566 = vmatprep.mubr.bf16.mxu0 0
    %1567 = vmatmul.mubr.bf16.gmra.mxu0 %v1469
    %v1568 = vpop.f32.mrf.mxu0
    %v1569 = vadd.f32 0.0, %v1568
    %v1570 = vpop.f32.mrf.mxu0
    %v1571 = vpop.f32.mrf.mxu0
    %v1572 = vadd.f32 0.0, %v1571
    %v1573 = vpop.f32.mrf.mxu0
    %1574 = vdwg.mxu0
    %v1575 = vadd.f32 %v1339, %v1569
    %v1576 = vadd.f32 %v1340, %v1572
    %v1577 = vld [vmem:[%s4 + $0xa] sm:$0x1]
    %v1578 = vlaneseq
    %v1579 = vshrl.u32 %v1578, 7
    %v1580 = vsub.s32 0, %v1579
    %v1581 = vrot.slane %v1577, %v1580
    %v1582 = vadd.f32 %v1575, %v1581
    %v1583 = vadd.f32 %v1576, %v1581
    %v1584 = vadd.f32 %v634, %v1582
    %v1585 = vadd.f32 %v635, %v1583
    %v1586 = vld [vmem:[%s4 + $0xb] sm:$0x1]
    %v1587 = vld [vmem:[%s4 + $0xc] sm:$0x1]
    %1588 = vadd.xlane.f32.xlu0 %v1584
    %v1589 = vpop.xlane.xlu0 %1588
    %1590 = vadd.xlane.f32.xlu0 %v1585
    %v1591 = vpop.xlane.xlu0 %1590
    %v1592 = vmul.f32 %v1589, %v605
    %v1593 = vmul.f32 %v1591, %v605
    %v1594 = vsub.f32 %v1584, %v1592
    %v1595 = vsub.f32 %v1585, %v1593
    %v1596 = vmul.f32 %v1594, %v1594
    %v1597 = vmul.f32 %v1595, %v1595
    %1598 = vadd.xlane.f32.xlu0 %v1596
    %v1599 = vpop.xlane.xlu0 %1598
    %1600 = vadd.xlane.f32.xlu0 %v1597
    %v1601 = vpop.xlane.xlu0 %1600
    %v1602 = vmul.f32 %v1599, %v605
    %v1603 = vmul.f32 %v1601, %v605
    %v1604 = vadd.f32 %v1602, 1e-05
    %v1605 = vadd.f32 %v1603, 1e-05
    %v1606 = vrsqrt.pop %v1604
    %v1607 = vrsqrt.pop %v1605
    %v1608 = vmul.f32 %v1594, %v1606
    %v1609 = vmul.f32 %v1595, %v1607
    %v1610 = vlaneseq
    %v1611 = vshrl.u32 %v1610, 7
    %v1612 = vsub.s32 0, %v1611
    %v1613 = vrot.slane %v1586, %v1612
    %v1614 = vmul.f32 %v1608, %v1613
    %v1615 = vmul.f32 %v1609, %v1613
    %v1616 = vlaneseq
    %v1617 = vshrl.u32 %v1616, 7
    %v1618 = vsub.s32 0, %v1617
    %v1619 = vrot.slane %v1587, %v1618
    %v1620 = vadd.f32 %v1614, %v1619
    %v1621 = vadd.f32 %v1615, %v1619
    %1622 = vst [vmem:[#allocation5] sm:$0xff] %v1620
    %1623 = vst [vmem:[#allocation5 + $0x8] sm:$0xff] %v1621
    %v1624 = vld [vmem:[#allocation2 + $0x300] sm:$0xf]
    %v1625 = vld [vmem:[#allocation2 + $0x304] sm:$0xf]
    %v1626 = vld [vmem:[#allocation2 + $0x308] sm:$0xf]
    %v1627 = vld [vmem:[#allocation2 + $0x30c] sm:$0xf]
    %v1628 = vld [vmem:[#allocation2 + $0x310] sm:$0xf]
    %v1629 = vld [vmem:[#allocation2 + $0x314] sm:$0xf]
    %v1630 = vld [vmem:[#allocation2 + $0x318] sm:$0xf]
    %v1631 = vld [vmem:[#allocation2 + $0x31c] sm:$0xf]
    %v1632 = vld [vmem:[#allocation2 + $0x320] sm:$0xf]
    %v1633 = vld [vmem:[#allocation2 + $0x324] sm:$0xf]
    %v1634 = vld [vmem:[#allocation2 + $0x328] sm:$0xf]
    %v1635 = vld [vmem:[#allocation2 + $0x32c] sm:$0xf]
    %v1636 = vld [vmem:[#allocation2 + $0x330] sm:$0xf]
    %v1637 = vld [vmem:[#allocation2 + $0x334] sm:$0xf]
    %v1638 = vld [vmem:[#allocation2 + $0x338] sm:$0xf]
    %v1639 = vld [vmem:[#allocation2 + $0x33c] sm:$0xf]
    %v1640 = vpack.c.bf16 %v1620, %v1620
    %v1641 = vld [vmem:[%s4 + $0xd] sm:$0x1]
    %v1658 = vunpack.c.l.b16 %v1624
    %v1659 = vunpack.c.l.b16 %v1625
    %v1660 = vunpack.c.l.b16 %v1626
    %v1661 = vunpack.c.l.b16 %v1627
    %v1662 = vunpack.c.l.b16 %v1628
    %v1663 = vunpack.c.l.b16 %v1629
    %v1664 = vunpack.c.l.b16 %v1630
    %v1665 = vunpack.c.l.b16 %v1631
    %v1666 = vunpack.c.l.b16 %v1632
    %v1667 = vunpack.c.l.b16 %v1633
    %v1668 = vunpack.c.l.b16 %v1634
    %v1669 = vunpack.c.l.b16 %v1635
    %v1670 = vunpack.c.l.b16 %v1636
    %v1671 = vunpack.c.l.b16 %v1637
    %v1672 = vunpack.c.l.b16 %v1638
    %v1673 = vunpack.c.l.b16 %v1639
    %v1674 = vpack.c.b16 %v1659, %v1658
    %v1675 = vpack.c.b16 %v1661, %v1660
    %v1676 = vpack.c.b16 %v1663, %v1662
    %v1677 = vpack.c.b16 %v1665, %v1664
    %v1678 = vpack.c.b16 %v1667, %v1666
    %v1679 = vpack.c.b16 %v1669, %v1668
    %v1680 = vpack.c.b16 %v1671, %v1670
    %v1681 = vpack.c.b16 %v1673, %v1672
    %1690 = vmatprep.subr.bf16.mxu0 0
    %1691 = vmatpush1.bf16.msra.mxu0 %v1681
    %1692 = vmatprep.subr.bf16.mxu0 0
    %1693 = vmatpush1.bf16.msra.mxu0 %v1680
    %1694 = vmatprep.subr.bf16.mxu0 0
    %1695 = vmatpush1.bf16.msra.mxu0 %v1679
    %1696 = vmatprep.subr.bf16.mxu0 0
    %1697 = vmatpush1.bf16.msra.mxu0 %v1678
    %1698 = vmatprep.subr.bf16.mxu0 0
    %1699 = vmatpush1.bf16.msra.mxu0 %v1677
    %1700 = vmatprep.subr.bf16.mxu0 0
    %1701 = vmatpush1.bf16.msra.mxu0 %v1676
    %1702 = vmatprep.subr.bf16.mxu0 0
    %1703 = vmatpush1.bf16.msra.mxu0 %v1675
    %1704 = vmatprep.subr.bf16.mxu0 0
    %1705 = vmatpush1.bf16.msra.mxu0 %v1674
    %1706 = vmatprep.subr.bf16.mxu0 0
    %1707 = vmatpush2.bf16.msra.mxu0 0
    %1708 = vmatprep.subr.bf16.mxu0 0
    %1709 = vmatpush2.bf16.msra.mxu0 0
    %1710 = vmatprep.subr.bf16.mxu0 0
    %1711 = vmatpush2.bf16.msra.mxu0 0
    %1712 = vmatprep.subr.bf16.mxu0 0
    %1713 = vmatpush2.bf16.msra.mxu0 0
    %1714 = vmatprep.subr.bf16.mxu0 0
    %1715 = vmatpush2.bf16.msra.mxu0 0
    %1716 = vmatprep.subr.bf16.mxu0 0
    %1717 = vmatpush2.bf16.msra.mxu0 0
    %1718 = vmatprep.subr.bf16.mxu0 0
    %1719 = vmatpush2.bf16.msra.mxu0 0
    %1720 = vmatprep.subr.bf16.mxu0 0
    %1721 = vmatpush2.bf16.msra.mxu0 0
    %1722 = vmatprep.mubr.bf16.mxu0 0
    %1723 = vmatmul.mubr.bf16.gmra.mxu0 %v1640
    %v1724 = vpop.f32.mrf.mxu0
    %v1725 = vadd.f32 %v1641, %v1724
    %v1726 = vpop.f32.mrf.mxu0
    %v1727 = vpop.f32.mrf.mxu0
    %v1728 = vpop.f32.mrf.mxu0
    %1729 = vdwg.mxu0
    %v1730 = vtanh.pop %v1725
    %1731 = vst [vmem:[#allocation5 + $0x10] sm:$0x1] %v1730
    %v1732 = vld [vmem:[%s1 + $0x1] sm:$0xf]
    %vm1733 = vcmask 125952
    %v1734 = vsel %vm1733, %v1732, 0.0
    %1735 = vadd.xlane.f32.xlu0 %v1734
    %v1736 = vpop.xlane.xlu0 %1735
    %vm1737 = vcmp.gt.f32.partialorder %v1736, 0.5
    %v1738 = vsel %vm1737, 1, 0
    %v1739 = vcvt.s32.f32 %v1738
    %v1740 = vpack.c.bf16 %v1732, %v1732
    %v1741 = vpack.c.bf16 %v1621, %v1620
    %v1743 = vsel %vm417, %v1740, 0
    %1745 = vmatprep.subr.bf16.mxu0 0
    %1746 = vmatpush1.bf16.msra.mxu0 0
    %1747 = vmatprep.subr.bf16.mxu0 0
    %1748 = vmatpush1.bf16.msra.mxu0 0
    %1749 = vmatprep.subr.bf16.mxu0 0
    %1750 = vmatpush1.bf16.msra.mxu0 0
    %1751 = vmatprep.subr.bf16.mxu0 0
    %1752 = vmatpush1.bf16.msra.mxu0 0
    %1753 = vmatprep.subr.bf16.mxu0 0
    %1754 = vmatpush1.bf16.msra.mxu0 0
    %1755 = vmatprep.subr.bf16.mxu0 0
    %1756 = vmatpush1.bf16.msra.mxu0 0
    %1757 = vmatprep.subr.bf16.mxu0 0
    %1758 = vmatpush1.bf16.msra.mxu0 0
    %1759 = vmatprep.subr.bf16.mxu0 0
    %1760 = vmatpush1.bf16.msra.mxu0 %v1741
    %1761 = vmatprep.subr.bf16.mxu0 0
    %1762 = vmatpush2.bf16.msra.mxu0 0
    %1763 = vmatprep.subr.bf16.mxu0 0
    %1764 = vmatpush2.bf16.msra.mxu0 0
    %1765 = vmatprep.subr.bf16.mxu0 0
    %1766 = vmatpush2.bf16.msra.mxu0 0
    %1767 = vmatprep.subr.bf16.mxu0 0
    %1768 = vmatpush2.bf16.msra.mxu0 0
    %1769 = vmatprep.subr.bf16.mxu0 0
    %1770 = vmatpush2.bf16.msra.mxu0 0
    %1771 = vmatprep.subr.bf16.mxu0 0
    %1772 = vmatpush2.bf16.msra.mxu0 0
    %1773 = vmatprep.subr.bf16.mxu0 0
    %1774 = vmatpush2.bf16.msra.mxu0 0
    %1775 = vmatprep.subr.bf16.mxu0 0
    %1776 = vmatpush2.bf16.msra.mxu0 0
    %1777 = vmatprep.mubr.bf16.mxu0 0
    %1778 = vmatmul.mubr.bf16.gmra.mxu0 %v1743
    %v1779 = vpop.f32.mrf.mxu0
    %v1780 = vadd.f32 0.0, %v1779
    %v1781 = vpop.f32.mrf.mxu0
    %v1782 = vpop.f32.mrf.mxu0
    %v1783 = vpop.f32.mrf.mxu0
    %1784 = vdwg.mxu0
    %v1785 = vld [vmem:[#allocation2 + $0x340] sm:$0xf]
    %v1786 = vld [vmem:[#allocation2 + $0x344] sm:$0xf]
    %v1787 = vld [vmem:[#allocation2 + $0x348] sm:$0xf]
    %v1788 = vld [vmem:[#allocation2 + $0x34c] sm:$0xf]
    %v1789 = vld [vmem:[#allocation2 + $0x350] sm:$0xf]
    %v1790 = vld [vmem:[#allocation2 + $0x354] sm:$0xf]
    %v1791 = vld [vmem:[#allocation2 + $0x358] sm:$0xf]
    %v1792 = vld [vmem:[#allocation2 + $0x35c] sm:$0xf]
    %v1793 = vld [vmem:[#allocation2 + $0x360] sm:$0xf]
    %v1794 = vld [vmem:[#allocation2 + $0x364] sm:$0xf]
    %v1795 = vld [vmem:[#allocation2 + $0x368] sm:$0xf]
    %v1796 = vld [vmem:[#allocation2 + $0x36c] sm:$0xf]
    %v1797 = vld [vmem:[#allocation2 + $0x370] sm:$0xf]
    %v1798 = vld [vmem:[#allocation2 + $0x374] sm:$0xf]
    %v1799 = vld [vmem:[#allocation2 + $0x378] sm:$0xf]
    %v1800 = vld [vmem:[#allocation2 + $0x37c] sm:$0xf]
    %v1801 = vpack.c.bf16 %v1780, %v1780
    %v1802 = vld [vmem:[%s4 + $0xe] sm:$0x1]
    %v1803 = vlaneseq
    %v1804 = vshrl.u32 %v1803, 7
    %v1805 = vsub.s32 0, %v1804
    %v1806 = vrot.slane %v1802, %v1805
    %v1823 = vunpack.c.l.b16 %v1785
    %v1824 = vunpack.c.l.b16 %v1786
    %v1825 = vunpack.c.l.b16 %v1787
    %v1826 = vunpack.c.l.b16 %v1788
    %v1827 = vunpack.c.l.b16 %v1789
    %v1828 = vunpack.c.l.b16 %v1790
    %v1829 = vunpack.c.l.b16 %v1791
    %v1830 = vunpack.c.l.b16 %v1792
    %v1831 = vunpack.c.l.b16 %v1793
    %v1832 = vunpack.c.l.b16 %v1794
    %v1833 = vunpack.c.l.b16 %v1795
    %v1834 = vunpack.c.l.b16 %v1796
    %v1835 = vunpack.c.l.b16 %v1797
    %v1836 = vunpack.c.l.b16 %v1798
    %v1837 = vunpack.c.l.b16 %v1799
    %v1838 = vunpack.c.l.b16 %v1800
    %v1839 = vpack.c.b16 %v1824, %v1823
    %v1840 = vpack.c.b16 %v1826, %v1825
    %v1841 = vpack.c.b16 %v1828, %v1827
    %v1842 = vpack.c.b16 %v1830, %v1829
    %v1843 = vpack.c.b16 %v1832, %v1831
    %v1844 = vpack.c.b16 %v1834, %v1833
    %v1845 = vpack.c.b16 %v1836, %v1835
    %v1846 = vpack.c.b16 %v1838, %v1837
    %1855 = vmatprep.subr.bf16.mxu0 0
    %1856 = vmatpush1.bf16.msra.mxu0 %v1846
    %1857 = vmatprep.subr.bf16.mxu0 0
    %1858 = vmatpush1.bf16.msra.mxu0 %v1845
    %1859 = vmatprep.subr.bf16.mxu0 0
    %1860 = vmatpush1.bf16.msra.mxu0 %v1844
    %1861 = vmatprep.subr.bf16.mxu0 0
    %1862 = vmatpush1.bf16.msra.mxu0 %v1843
    %1863 = vmatprep.subr.bf16.mxu0 0
    %1864 = vmatpush1.bf16.msra.mxu0 %v1842
    %1865 = vmatprep.subr.bf16.mxu0 0
    %1866 = vmatpush1.bf16.msra.mxu0 %v1841
    %1867 = vmatprep.subr.bf16.mxu0 0
    %1868 = vmatpush1.bf16.msra.mxu0 %v1840
    %1869 = vmatprep.subr.bf16.mxu0 0
    %1870 = vmatpush1.bf16.msra.mxu0 %v1839
    %1871 = vmatprep.subr.bf16.mxu0 0
    %1872 = vmatpush2.bf16.msra.mxu0 0
    %1873 = vmatprep.subr.bf16.mxu0 0
    %1874 = vmatpush2.bf16.msra.mxu0 0
    %1875 = vmatprep.subr.bf16.mxu0 0
    %1876 = vmatpush2.bf16.msra.mxu0 0
    %1877 = vmatprep.subr.bf16.mxu0 0
    %1878 = vmatpush2.bf16.msra.mxu0 0
    %1879 = vmatprep.subr.bf16.mxu0 0
    %1880 = vmatpush2.bf16.msra.mxu0 0
    %1881 = vmatprep.subr.bf16.mxu0 0
    %1882 = vmatpush2.bf16.msra.mxu0 0
    %1883 = vmatprep.subr.bf16.mxu0 0
    %1884 = vmatpush2.bf16.msra.mxu0 0
    %1885 = vmatprep.subr.bf16.mxu0 0
    %1886 = vmatpush2.bf16.msra.mxu0 0
    %1887 = vmatprep.mubr.bf16.mxu0 0
    %1888 = vmatmul.mubr.bf16.gmra.mxu0 %v1801
    %v1889 = vpop.f32.mrf.mxu0
    %v1890 = vadd.f32 %v1806, %v1889
    %v1891 = vpop.f32.mrf.mxu0
    %v1892 = vpop.f32.mrf.mxu0
    %v1893 = vpop.f32.mrf.mxu0
    %1894 = vdwg.mxu0
    %v1895 = vld [vmem:[#allocation2 + $0x380] sm:$0xf]
    %v1896 = vld [vmem:[#allocation2 + $0x384] sm:$0xf]
    %v1897 = vld [vmem:[#allocation2 + $0x388] sm:$0xf]
    %v1898 = vld [vmem:[#allocation2 + $0x38c] sm:$0xf]
    %v1899 = vld [vmem:[#allocation2 + $0x390] sm:$0xf]
    %v1900 = vld [vmem:[#allocation2 + $0x394] sm:$0xf]
    %v1901 = vld [vmem:[#allocation2 + $0x398] sm:$0xf]
    %v1902 = vld [vmem:[#allocation2 + $0x39c] sm:$0xf]
    %v1903 = vld [vmem:[#allocation2 + $0x3a0] sm:$0xf]
    %v1904 = vld [vmem:[#allocation2 + $0x3a4] sm:$0xf]
    %v1905 = vld [vmem:[#allocation2 + $0x3a8] sm:$0xf]
    %v1906 = vld [vmem:[#allocation2 + $0x3ac] sm:$0xf]
    %v1907 = vld [vmem:[#allocation2 + $0x3b0] sm:$0xf]
    %v1908 = vld [vmem:[#allocation2 + $0x3b4] sm:$0xf]
    %v1909 = vld [vmem:[#allocation2 + $0x3b8] sm:$0xf]
    %v1910 = vld [vmem:[#allocation2 + $0x3bc] sm:$0xf]
    %v1911 = vld [vmem:[%s2] sm:$0xff]
    %v1912 = vld [vmem:[%s2 + $0x8] sm:$0xff]
    %1914 = vset.pattern.permute.xlu0 0
    %1915 = vperm.xlu0 %1914, %v1911
    %v1916 = vpop.permute.xlu0 %1915
    %1919 = vset.pattern.permute.xlu0 0
    %1920 = vperm.xlu0 %1919, %v1912
    %v1921 = vpop.permute.xlu0 %1920
    %v1923 = vadd.f32 %v1620, %v1916
    %v1924 = vadd.f32 %v1621, %v1921
    %v1925 = vmax.f32 %v1923, %v1924
    %v1926 = vrot.slane %v1925, 4
    %v1927 = vmax.f32 %v1925, %v1926
    %v1928 = vrot.slane %v1927, 2
    %v1929 = vmax.f32 %v1927, %v1928
    %v1930 = vrot.slane %v1929, 1
    %v1931 = vmax.f32 %v1929, %v1930
    %v1932 = vpack.c.bf16 %v1931, %v1931
    %v1949 = vunpack.c.l.b16 %v1895
    %v1950 = vunpack.c.l.b16 %v1896
    %v1951 = vunpack.c.l.b16 %v1897
    %v1952 = vunpack.c.l.b16 %v1898
    %v1953 = vunpack.c.l.b16 %v1899
    %v1954 = vunpack.c.l.b16 %v1900
    %v1955 = vunpack.c.l.b16 %v1901
    %v1956 = vunpack.c.l.b16 %v1902
    %v1957 = vunpack.c.l.b16 %v1903
    %v1958 = vunpack.c.l.b16 %v1904
    %v1959 = vunpack.c.l.b16 %v1905
    %v1960 = vunpack.c.l.b16 %v1906
    %v1961 = vunpack.c.l.b16 %v1907
    %v1962 = vunpack.c.l.b16 %v1908
    %v1963 = vunpack.c.l.b16 %v1909
    %v1964 = vunpack.c.l.b16 %v1910
    %v1965 = vpack.c.b16 %v1950, %v1949
    %v1966 = vpack.c.b16 %v1952, %v1951
    %v1967 = vpack.c.b16 %v1954, %v1953
    %v1968 = vpack.c.b16 %v1956, %v1955
    %v1969 = vpack.c.b16 %v1958, %v1957
    %v1970 = vpack.c.b16 %v1960, %v1959
    %v1971 = vpack.c.b16 %v1962, %v1961
    %v1972 = vpack.c.b16 %v1964, %v1963
    %1981 = vmatprep.subr.bf16.mxu0 0
    %1982 = vmatpush1.bf16.msra.mxu0 %v1972
    %1983 = vmatprep.subr.bf16.mxu0 0
    %1984 = vmatpush1.bf16.msra.mxu0 %v1971
    %1985 = vmatprep.subr.bf16.mxu0 0
    %1986 = vmatpush1.bf16.msra.mxu0 %v1970
    %1987 = vmatprep.subr.bf16.mxu0 0
    %1988 = vmatpush1.bf16.msra.mxu0 %v1969
    %1989 = vmatprep.subr.bf16.mxu0 0
    %1990 = vmatpush1.bf16.msra.mxu0 %v1968
    %1991 = vmatprep.subr.bf16.mxu0 0
    %1992 = vmatpush1.bf16.msra.mxu0 %v1967
    %1993 = vmatprep.subr.bf16.mxu0 0
    %1994 = vmatpush1.bf16.msra.mxu0 %v1966
    %1995 = vmatprep.subr.bf16.mxu0 0
    %1996 = vmatpush1.bf16.msra.mxu0 %v1965
    %1997 = vmatprep.subr.bf16.mxu0 0
    %1998 = vmatpush2.bf16.msra.mxu0 0
    %1999 = vmatprep.subr.bf16.mxu0 0
    %2000 = vmatpush2.bf16.msra.mxu0 0
    %2001 = vmatprep.subr.bf16.mxu0 0
    %2002 = vmatpush2.bf16.msra.mxu0 0
    %2003 = vmatprep.subr.bf16.mxu0 0
    %2004 = vmatpush2.bf16.msra.mxu0 0
    %2005 = vmatprep.subr.bf16.mxu0 0
    %2006 = vmatpush2.bf16.msra.mxu0 0
    %2007 = vmatprep.subr.bf16.mxu0 0
    %2008 = vmatpush2.bf16.msra.mxu0 0
    %2009 = vmatprep.subr.bf16.mxu0 0
    %2010 = vmatpush2.bf16.msra.mxu0 0
    %2011 = vmatprep.subr.bf16.mxu0 0
    %2012 = vmatpush2.bf16.msra.mxu0 0
    %2013 = vmatprep.mubr.bf16.mxu0 0
    %2014 = vmatmul.mubr.bf16.gmra.mxu0 %v1932
    %v2015 = vpop.f32.mrf.mxu0
    %v2016 = vadd.f32 0.0, %v2015
    %v2017 = vpop.f32.mrf.mxu0
    %v2018 = vpop.f32.mrf.mxu0
    %v2019 = vpop.f32.mrf.mxu0
    %2020 = vdwg.mxu0
    %v2021 = vadd.f32 %v1890, %v2016
    %vm2022 = vcmp.gt.f32.partialorder %v2021, 0.0
    %v2023 = vmin.f32 %v2021, 0.0
    %v2024 = vmul.f32 %v2023, 1.442695
    %v2025 = vpow.pop %v2024
    %v2026 = vsub.f32 %v2025, 1.0
    %v2027 = vsel %vm2022, %v2021, %v2026
    %v2028 = vmul.f32 %v2027, %v1739
    %v2029 = vadd.f32 %v1620, %v2028
    %vm2030 = vcmp.gt.f32.partialorder %v1739, 0.5
    %v2031 = vsel %vm2030, 1, 0
    %vm2032 = vcmp.eq.s32.totalorder %v2031, 1
    %v2033 = vsel %vm2032, %v2027, -1e+30
    %v2034 = vmax.f32 %v1620, %v2033
    %2035 = vset.pattern.permute.xlu0 1
    %2036 = vperm.xlu0 %2035, %v1911
    %v2037 = vpop.permute.xlu0 %2036
    %2039 = vset.pattern.permute.xlu0 1
    %2040 = vperm.xlu0 %2039, %v1912
    %v2041 = vpop.permute.xlu0 %2040
    %v2043 = vadd.f32 %v1620, %v2037
    %v2044 = vadd.f32 %v1621, %v2041
    %v2045 = vmax.f32 %v2043, %v2044
    %v2046 = vrot.slane %v2045, 4
    %v2047 = vmax.f32 %v2045, %v2046
    %v2048 = vrot.slane %v2047, 2
    %v2049 = vmax.f32 %v2047, %v2048
    %v2050 = vrot.slane %v2049, 1
    %v2051 = vmax.f32 %v2049, %v2050
    %v2052 = vpack.c.bf16 %v2051, %v2051
    %2053 = vmatprep.subr.bf16.mxu0 0
    %2054 = vmatpush1.bf16.msra.mxu0 %v1972
    %2055 = vmatprep.subr.bf16.mxu0 0
    %2056 = vmatpush1.bf16.msra.mxu0 %v1971
    %2057 = vmatprep.subr.bf16.mxu0 0
    %2058 = vmatpush1.bf16.msra.mxu0 %v1970
    %2059 = vmatprep.subr.bf16.mxu0 0
    %2060 = vmatpush1.bf16.msra.mxu0 %v1969
    %2061 = vmatprep.subr.bf16.mxu0 0
    %2062 = vmatpush1.bf16.msra.mxu0 %v1968
    %2063 = vmatprep.subr.bf16.mxu0 0
    %2064 = vmatpush1.bf16.msra.mxu0 %v1967
    %2065 = vmatprep.subr.bf16.mxu0 0
    %2066 = vmatpush1.bf16.msra.mxu0 %v1966
    %2067 = vmatprep.subr.bf16.mxu0 0
    %2068 = vmatpush1.bf16.msra.mxu0 %v1965
    %2069 = vmatprep.subr.bf16.mxu0 0
    %2070 = vmatpush2.bf16.msra.mxu0 0
    %2071 = vmatprep.subr.bf16.mxu0 0
    %2072 = vmatpush2.bf16.msra.mxu0 0
    %2073 = vmatprep.subr.bf16.mxu0 0
    %2074 = vmatpush2.bf16.msra.mxu0 0
    %2075 = vmatprep.subr.bf16.mxu0 0
    %2076 = vmatpush2.bf16.msra.mxu0 0
    %2077 = vmatprep.subr.bf16.mxu0 0
    %2078 = vmatpush2.bf16.msra.mxu0 0
    %2079 = vmatprep.subr.bf16.mxu0 0
    %2080 = vmatpush2.bf16.msra.mxu0 0
    %2081 = vmatprep.subr.bf16.mxu0 0
    %2082 = vmatpush2.bf16.msra.mxu0 0
    %2083 = vmatprep.subr.bf16.mxu0 0
    %2084 = vmatpush2.bf16.msra.mxu0 0
    %2085 = vmatprep.mubr.bf16.mxu0 0
    %2086 = vmatmul.mubr.bf16.gmra.mxu0 %v2052
    %v2087 = vpop.f32.mrf.mxu0
    %v2088 = vadd.f32 0.0, %v2087
    %v2089 = vpop.f32.mrf.mxu0
    %v2090 = vpop.f32.mrf.mxu0
    %v2091 = vpop.f32.mrf.mxu0
    %2092 = vdwg.mxu0
    %v2094 = vrot.slane %v2088, 7
    %v2096 = vadd.f32 %v1890, %v2094
    %vm2097 = vcmp.gt.f32.partialorder %v2096, 0.0
    %v2098 = vmin.f32 %v2096, 0.0
    %v2099 = vmul.f32 %v2098, 1.442695
    %v2100 = vpow.pop %v2099
    %v2101 = vsub.f32 %v2100, 1.0
    %v2102 = vsel %vm2097, %v2096, %v2101
    %v2103 = vmul.f32 %v2102, %v1739
    %v2105 = vrot.slane %v2103, 1
    %v2107 = vadd.f32 %v2029, %v2105
    %v2108 = vsel %vm2032, %v2102, -1e+30
    %v2110 = vrot.slane %v2108, 1
    %v2112 = vmax.f32 %v2034, %v2110
    %2113 = vset.pattern.permute.xlu0 2
    %2114 = vperm.xlu0 %2113, %v1911
    %v2115 = vpop.permute.xlu0 %2114
    %2117 = vset.pattern.permute.xlu0 2
    %2118 = vperm.xlu0 %2117, %v1912
    %v2119 = vpop.permute.xlu0 %2118
    %v2121 = vadd.f32 %v1620, %v2115
    %v2122 = vadd.f32 %v1621, %v2119
    %v2123 = vmax.f32 %v2121, %v2122
    %v2124 = vrot.slane %v2123, 4
    %v2125 = vmax.f32 %v2123, %v2124
    %v2126 = vrot.slane %v2125, 2
    %v2127 = vmax.f32 %v2125, %v2126
    %v2128 = vrot.slane %v2127, 1
    %v2129 = vmax.f32 %v2127, %v2128
    %v2130 = vpack.c.bf16 %v2129, %v2129
    %2131 = vmatprep.subr.bf16.mxu0 0
    %2132 = vmatpush1.bf16.msra.mxu0 %v1972
    %2133 = vmatprep.subr.bf16.mxu0 0
    %2134 = vmatpush1.bf16.msra.mxu0 %v1971
    %2135 = vmatprep.subr.bf16.mxu0 0
    %2136 = vmatpush1.bf16.msra.mxu0 %v1970
    %2137 = vmatprep.subr.bf16.mxu0 0
    %2138 = vmatpush1.bf16.msra.mxu0 %v1969
    %2139 = vmatprep.subr.bf16.mxu0 0
    %2140 = vmatpush1.bf16.msra.mxu0 %v1968
    %2141 = vmatprep.subr.bf16.mxu0 0
    %2142 = vmatpush1.bf16.msra.mxu0 %v1967
    %2143 = vmatprep.subr.bf16.mxu0 0
    %2144 = vmatpush1.bf16.msra.mxu0 %v1966
    %2145 = vmatprep.subr.bf16.mxu0 0
    %2146 = vmatpush1.bf16.msra.mxu0 %v1965
    %2147 = vmatprep.subr.bf16.mxu0 0
    %2148 = vmatpush2.bf16.msra.mxu0 0
    %2149 = vmatprep.subr.bf16.mxu0 0
    %2150 = vmatpush2.bf16.msra.mxu0 0
    %2151 = vmatprep.subr.bf16.mxu0 0
    %2152 = vmatpush2.bf16.msra.mxu0 0
    %2153 = vmatprep.subr.bf16.mxu0 0
    %2154 = vmatpush2.bf16.msra.mxu0 0
    %2155 = vmatprep.subr.bf16.mxu0 0
    %2156 = vmatpush2.bf16.msra.mxu0 0
    %2157 = vmatprep.subr.bf16.mxu0 0
    %2158 = vmatpush2.bf16.msra.mxu0 0
    %2159 = vmatprep.subr.bf16.mxu0 0
    %2160 = vmatpush2.bf16.msra.mxu0 0
    %2161 = vmatprep.subr.bf16.mxu0 0
    %2162 = vmatpush2.bf16.msra.mxu0 0
    %2163 = vmatprep.mubr.bf16.mxu0 0
    %2164 = vmatmul.mubr.bf16.gmra.mxu0 %v2130
    %v2165 = vpop.f32.mrf.mxu0
    %v2166 = vadd.f32 0.0, %v2165
    %v2167 = vpop.f32.mrf.mxu0
    %v2168 = vpop.f32.mrf.mxu0
    %v2169 = vpop.f32.mrf.mxu0
    %2170 = vdwg.mxu0
    %v2172 = vrot.slane %v2166, 6
    %v2174 = vadd.f32 %v1890, %v2172
    %vm2175 = vcmp.gt.f32.partialorder %v2174, 0.0
    %v2176 = vmin.f32 %v2174, 0.0
    %v2177 = vmul.f32 %v2176, 1.442695
    %v2178 = vpow.pop %v2177
    %v2179 = vsub.f32 %v2178, 1.0
    %v2180 = vsel %vm2175, %v2174, %v2179
    %v2181 = vmul.f32 %v2180, %v1739
    %v2183 = vrot.slane %v2181, 2
    %v2185 = vadd.f32 %v2107, %v2183
    %v2186 = vsel %vm2032, %v2180, -1e+30
    %v2188 = vrot.slane %v2186, 2
    %v2190 = vmax.f32 %v2112, %v2188
    %2191 = vset.pattern.permute.xlu0 3
    %2192 = vperm.xlu0 %2191, %v1911
    %v2193 = vpop.permute.xlu0 %2192
    %2195 = vset.pattern.permute.xlu0 3
    %2196 = vperm.xlu0 %2195, %v1912
    %v2197 = vpop.permute.xlu0 %2196
    %v2199 = vadd.f32 %v1620, %v2193
    %v2200 = vadd.f32 %v1621, %v2197
    %v2201 = vmax.f32 %v2199, %v2200
    %v2202 = vrot.slane %v2201, 4
    %v2203 = vmax.f32 %v2201, %v2202
    %v2204 = vrot.slane %v2203, 2
    %v2205 = vmax.f32 %v2203, %v2204
    %v2206 = vrot.slane %v2205, 1
    %v2207 = vmax.f32 %v2205, %v2206
    %v2208 = vpack.c.bf16 %v2207, %v2207
    %2209 = vmatprep.subr.bf16.mxu0 0
    %2210 = vmatpush1.bf16.msra.mxu0 %v1972
    %2211 = vmatprep.subr.bf16.mxu0 0
    %2212 = vmatpush1.bf16.msra.mxu0 %v1971
    %2213 = vmatprep.subr.bf16.mxu0 0
    %2214 = vmatpush1.bf16.msra.mxu0 %v1970
    %2215 = vmatprep.subr.bf16.mxu0 0
    %2216 = vmatpush1.bf16.msra.mxu0 %v1969
    %2217 = vmatprep.subr.bf16.mxu0 0
    %2218 = vmatpush1.bf16.msra.mxu0 %v1968
    %2219 = vmatprep.subr.bf16.mxu0 0
    %2220 = vmatpush1.bf16.msra.mxu0 %v1967
    %2221 = vmatprep.subr.bf16.mxu0 0
    %2222 = vmatpush1.bf16.msra.mxu0 %v1966
    %2223 = vmatprep.subr.bf16.mxu0 0
    %2224 = vmatpush1.bf16.msra.mxu0 %v1965
    %2225 = vmatprep.subr.bf16.mxu0 0
    %2226 = vmatpush2.bf16.msra.mxu0 0
    %2227 = vmatprep.subr.bf16.mxu0 0
    %2228 = vmatpush2.bf16.msra.mxu0 0
    %2229 = vmatprep.subr.bf16.mxu0 0
    %2230 = vmatpush2.bf16.msra.mxu0 0
    %2231 = vmatprep.subr.bf16.mxu0 0
    %2232 = vmatpush2.bf16.msra.mxu0 0
    %2233 = vmatprep.subr.bf16.mxu0 0
    %2234 = vmatpush2.bf16.msra.mxu0 0
    %2235 = vmatprep.subr.bf16.mxu0 0
    %2236 = vmatpush2.bf16.msra.mxu0 0
    %2237 = vmatprep.subr.bf16.mxu0 0
    %2238 = vmatpush2.bf16.msra.mxu0 0
    %2239 = vmatprep.subr.bf16.mxu0 0
    %2240 = vmatpush2.bf16.msra.mxu0 0
    %2241 = vmatprep.mubr.bf16.mxu0 0
    %2242 = vmatmul.mubr.bf16.gmra.mxu0 %v2208
    %v2243 = vpop.f32.mrf.mxu0
    %v2244 = vadd.f32 0.0, %v2243
    %v2245 = vpop.f32.mrf.mxu0
    %v2246 = vpop.f32.mrf.mxu0
    %v2247 = vpop.f32.mrf.mxu0
    %2248 = vdwg.mxu0
    %v2250 = vrot.slane %v2244, 5
    %v2252 = vadd.f32 %v1890, %v2250
    %vm2253 = vcmp.gt.f32.partialorder %v2252, 0.0
    %v2254 = vmin.f32 %v2252, 0.0
    %v2255 = vmul.f32 %v2254, 1.442695
    %v2256 = vpow.pop %v2255
    %v2257 = vsub.f32 %v2256, 1.0
    %v2258 = vsel %vm2253, %v2252, %v2257
    %v2259 = vmul.f32 %v2258, %v1739
    %v2261 = vrot.slane %v2259, 3
    %v2263 = vadd.f32 %v2185, %v2261
    %v2264 = vsel %vm2032, %v2258, -1e+30
    %v2266 = vrot.slane %v2264, 3
    %v2268 = vmax.f32 %v2190, %v2266
    %vm2269 = vcmask 1043456
    %v2270 = vsel %vm2269, %v1739, 0.0
    %v2271 = vrot.slane %v2270, 4
    %v2272 = vadd.f32 %v2270, %v2271
    %v2273 = vrot.slane %v2272, 2
    %v2274 = vadd.f32 %v2272, %v2273
    %v2275 = vrot.slane %v2274, 1
    %v2276 = vadd.f32 %v2274, %v2275
    %v2277 = vadd.f32 %v2276, 1.0
    %v2278 = vrcp.pop %v2277
    %v2279 = vmul.f32 %v2263, %v2278
    %v2280 = vld [vmem:[#allocation2 + $0x3c0] sm:$0xf]
    %v2281 = vld [vmem:[#allocation2 + $0x3c4] sm:$0xf]
    %v2282 = vld [vmem:[#allocation2 + $0x3c8] sm:$0xf]
    %v2283 = vld [vmem:[#allocation2 + $0x3cc] sm:$0xf]
    %v2284 = vld [vmem:[#allocation2 + $0x3d0] sm:$0xf]
    %v2285 = vld [vmem:[#allocation2 + $0x3d4] sm:$0xf]
    %v2286 = vld [vmem:[#allocation2 + $0x3d8] sm:$0xf]
    %v2287 = vld [vmem:[#allocation2 + $0x3dc] sm:$0xf]
    %v2288 = vld [vmem:[#allocation2 + $0x3e0] sm:$0xf]
    %v2289 = vld [vmem:[#allocation2 + $0x3e4] sm:$0xf]
    %v2290 = vld [vmem:[#allocation2 + $0x3e8] sm:$0xf]
    %v2291 = vld [vmem:[#allocation2 + $0x3ec] sm:$0xf]
    %v2292 = vld [vmem:[#allocation2 + $0x3f0] sm:$0xf]
    %v2293 = vld [vmem:[#allocation2 + $0x3f4] sm:$0xf]
    %v2294 = vld [vmem:[#allocation2 + $0x3f8] sm:$0xf]
    %v2295 = vld [vmem:[#allocation2 + $0x3fc] sm:$0xf]
    %v2296 = vpack.c.bf16 %v2279, %v2279
    %v2297 = vld [vmem:[#allocation2 + $0x400] sm:$0xf]
    %v2298 = vld [vmem:[#allocation2 + $0x404] sm:$0xf]
    %v2299 = vld [vmem:[#allocation2 + $0x408] sm:$0xf]
    %v2300 = vld [vmem:[#allocation2 + $0x40c] sm:$0xf]
    %v2301 = vld [vmem:[#allocation2 + $0x410] sm:$0xf]
    %v2302 = vld [vmem:[#allocation2 + $0x414] sm:$0xf]
    %v2303 = vld [vmem:[#allocation2 + $0x418] sm:$0xf]
    %v2304 = vld [vmem:[#allocation2 + $0x41c] sm:$0xf]
    %v2305 = vld [vmem:[#allocation2 + $0x420] sm:$0xf]
    %v2306 = vld [vmem:[#allocation2 + $0x424] sm:$0xf]
    %v2307 = vld [vmem:[#allocation2 + $0x428] sm:$0xf]
    %v2308 = vld [vmem:[#allocation2 + $0x42c] sm:$0xf]
    %v2309 = vld [vmem:[#allocation2 + $0x430] sm:$0xf]
    %v2310 = vld [vmem:[#allocation2 + $0x434] sm:$0xf]
    %v2311 = vld [vmem:[#allocation2 + $0x438] sm:$0xf]
    %v2312 = vld [vmem:[#allocation2 + $0x43c] sm:$0xf]
    %v2313 = vpack.c.bf16 %v2268, %v2268
    %v2330 = vunpack.c.l.b16 %v2297
    %v2331 = vunpack.c.l.b16 %v2298
    %v2332 = vunpack.c.l.b16 %v2299
    %v2333 = vunpack.c.l.b16 %v2300
    %v2334 = vunpack.c.l.b16 %v2301
    %v2335 = vunpack.c.l.b16 %v2302
    %v2336 = vunpack.c.l.b16 %v2303
    %v2337 = vunpack.c.l.b16 %v2304
    %v2338 = vunpack.c.l.b16 %v2305
    %v2339 = vunpack.c.l.b16 %v2306
    %v2340 = vunpack.c.l.b16 %v2307
    %v2341 = vunpack.c.l.b16 %v2308
    %v2342 = vunpack.c.l.b16 %v2309
    %v2343 = vunpack.c.l.b16 %v2310
    %v2344 = vunpack.c.l.b16 %v2311
    %v2345 = vunpack.c.l.b16 %v2312
    %v2346 = vpack.c.b16 %v2331, %v2330
    %v2347 = vpack.c.b16 %v2333, %v2332
    %v2348 = vpack.c.b16 %v2335, %v2334
    %v2349 = vpack.c.b16 %v2337, %v2336
    %v2350 = vpack.c.b16 %v2339, %v2338
    %v2351 = vpack.c.b16 %v2341, %v2340
    %v2352 = vpack.c.b16 %v2343, %v2342
    %v2353 = vpack.c.b16 %v2345, %v2344
    %2362 = vmatprep.subr.bf16.mxu0 0
    %2363 = vmatpush1.bf16.msra.mxu0 %v2353
    %2364 = vmatprep.subr.bf16.mxu0 0
    %2365 = vmatpush1.bf16.msra.mxu0 %v2352
    %2366 = vmatprep.subr.bf16.mxu0 0
    %2367 = vmatpush1.bf16.msra.mxu0 %v2351
    %2368 = vmatprep.subr.bf16.mxu0 0
    %2369 = vmatpush1.bf16.msra.mxu0 %v2350
    %2370 = vmatprep.subr.bf16.mxu0 0
    %2371 = vmatpush1.bf16.msra.mxu0 %v2349
    %2372 = vmatprep.subr.bf16.mxu0 0
    %2373 = vmatpush1.bf16.msra.mxu0 %v2348
    %2374 = vmatprep.subr.bf16.mxu0 0
    %2375 = vmatpush1.bf16.msra.mxu0 %v2347
    %2376 = vmatprep.subr.bf16.mxu0 0
    %2377 = vmatpush1.bf16.msra.mxu0 %v2346
    %2378 = vmatprep.subr.bf16.mxu0 0
    %2379 = vmatpush2.bf16.msra.mxu0 0
    %2380 = vmatprep.subr.bf16.mxu0 0
    %2381 = vmatpush2.bf16.msra.mxu0 0
    %2382 = vmatprep.subr.bf16.mxu0 0
    %2383 = vmatpush2.bf16.msra.mxu0 0
    %2384 = vmatprep.subr.bf16.mxu0 0
    %2385 = vmatpush2.bf16.msra.mxu0 0
    %2386 = vmatprep.subr.bf16.mxu0 0
    %2387 = vmatpush2.bf16.msra.mxu0 0
    %2388 = vmatprep.subr.bf16.mxu0 0
    %2389 = vmatpush2.bf16.msra.mxu0 0
    %2390 = vmatprep.subr.bf16.mxu0 0
    %2391 = vmatpush2.bf16.msra.mxu0 0
    %2392 = vmatprep.subr.bf16.mxu0 0
    %2393 = vmatpush2.bf16.msra.mxu0 0
    %2394 = vmatprep.mubr.bf16.mxu0 0
    %2395 = vmatmul.mubr.bf16.gmra.mxu0 %v2313
    %v2396 = vpop.f32.mrf.mxu0
    %v2397 = vadd.f32 0.0, %v2396
    %v2398 = vpop.f32.mrf.mxu0
    %v2399 = vpop.f32.mrf.mxu0
    %v2400 = vpop.f32.mrf.mxu0
    %2401 = vdwg.mxu0
    %v2418 = vunpack.c.l.b16 %v2280
    %v2419 = vunpack.c.l.b16 %v2281
    %v2420 = vunpack.c.l.b16 %v2282
    %v2421 = vunpack.c.l.b16 %v2283
    %v2422 = vunpack.c.l.b16 %v2284
    %v2423 = vunpack.c.l.b16 %v2285
    %v2424 = vunpack.c.l.b16 %v2286
    %v2425 = vunpack.c.l.b16 %v2287
    %v2426 = vunpack.c.l.b16 %v2288
    %v2427 = vunpack.c.l.b16 %v2289
    %v2428 = vunpack.c.l.b16 %v2290
    %v2429 = vunpack.c.l.b16 %v2291
    %v2430 = vunpack.c.l.b16 %v2292
    %v2431 = vunpack.c.l.b16 %v2293
    %v2432 = vunpack.c.l.b16 %v2294
    %v2433 = vunpack.c.l.b16 %v2295
    %v2434 = vpack.c.b16 %v2419, %v2418
    %v2435 = vpack.c.b16 %v2421, %v2420
    %v2436 = vpack.c.b16 %v2423, %v2422
    %v2437 = vpack.c.b16 %v2425, %v2424
    %v2438 = vpack.c.b16 %v2427, %v2426
    %v2439 = vpack.c.b16 %v2429, %v2428
    %v2440 = vpack.c.b16 %v2431, %v2430
    %v2441 = vpack.c.b16 %v2433, %v2432
    %2450 = vmatprep.subr.bf16.mxu0 0
    %2451 = vmatpush1.bf16.msra.mxu0 %v2441
    %2452 = vmatprep.subr.bf16.mxu0 0
    %2453 = vmatpush1.bf16.msra.mxu0 %v2440
    %2454 = vmatprep.subr.bf16.mxu0 0
    %2455 = vmatpush1.bf16.msra.mxu0 %v2439
    %2456 = vmatprep.subr.bf16.mxu0 0
    %2457 = vmatpush1.bf16.msra.mxu0 %v2438
    %2458 = vmatprep.subr.bf16.mxu0 0
    %2459 = vmatpush1.bf16.msra.mxu0 %v2437
    %2460 = vmatprep.subr.bf16.mxu0 0
    %2461 = vmatpush1.bf16.msra.mxu0 %v2436
    %2462 = vmatprep.subr.bf16.mxu0 0
    %2463 = vmatpush1.bf16.msra.mxu0 %v2435
    %2464 = vmatprep.subr.bf16.mxu0 0
    %2465 = vmatpush1.bf16.msra.mxu0 %v2434
    %2466 = vmatprep.subr.bf16.mxu0 0
    %2467 = vmatpush2.bf16.msra.mxu0 0
    %2468 = vmatprep.subr.bf16.mxu0 0
    %2469 = vmatpush2.bf16.msra.mxu0 0
    %2470 = vmatprep.subr.bf16.mxu0 0
    %2471 = vmatpush2.bf16.msra.mxu0 0
    %2472 = vmatprep.subr.bf16.mxu0 0
    %2473 = vmatpush2.bf16.msra.mxu0 0
    %2474 = vmatprep.subr.bf16.mxu0 0
    %2475 = vmatpush2.bf16.msra.mxu0 0
    %2476 = vmatprep.subr.bf16.mxu0 0
    %2477 = vmatpush2.bf16.msra.mxu0 0
    %2478 = vmatprep.subr.bf16.mxu0 0
    %2479 = vmatpush2.bf16.msra.mxu0 0
    %2480 = vmatprep.subr.bf16.mxu0 0
    %2481 = vmatpush2.bf16.msra.mxu0 0
    %2482 = vmatprep.mubr.bf16.mxu0 0
    %2483 = vmatmul.mubr.bf16.gmra.mxu0 %v2296
    %v2484 = vpop.f32.mrf.mxu0
    %v2485 = vadd.f32 %v2397, %v2484
    %v2486 = vpop.f32.mrf.mxu0
    %v2487 = vpop.f32.mrf.mxu0
    %v2488 = vpop.f32.mrf.mxu0
    %2489 = vdwg.mxu0
    %v2490 = vld [vmem:[%s4 + $0xf] sm:$0x1]
    %v2491 = vadd.f32 %v2485, %v2490
    %vm2492 = vcmp.gt.f32.partialorder %v2491, 0.0
    %v2493 = vmin.f32 %v2491, 0.0
    %v2494 = vmul.f32 %v2493, 1.442695
    %v2495 = vpow.pop %v2494
    %v2496 = vsub.f32 %v2495, 1.0
    %v2497 = vsel %vm2492, %v2491, %v2496
    %v2498 = vld [vmem:[#allocation2 + $0x440] sm:$0xf]
    %v2499 = vld [vmem:[#allocation2 + $0x444] sm:$0xf]
    %v2500 = vld [vmem:[#allocation2 + $0x448] sm:$0xf]
    %v2501 = vld [vmem:[#allocation2 + $0x44c] sm:$0xf]
    %v2502 = vld [vmem:[#allocation2 + $0x450] sm:$0xf]
    %v2503 = vld [vmem:[#allocation2 + $0x454] sm:$0xf]
    %v2504 = vld [vmem:[#allocation2 + $0x458] sm:$0xf]
    %v2505 = vld [vmem:[#allocation2 + $0x45c] sm:$0xf]
    %v2506 = vld [vmem:[#allocation2 + $0x460] sm:$0xf]
    %v2507 = vld [vmem:[#allocation2 + $0x464] sm:$0xf]
    %v2508 = vld [vmem:[#allocation2 + $0x468] sm:$0xf]
    %v2509 = vld [vmem:[#allocation2 + $0x46c] sm:$0xf]
    %v2510 = vld [vmem:[#allocation2 + $0x470] sm:$0xf]
    %v2511 = vld [vmem:[#allocation2 + $0x474] sm:$0xf]
    %v2512 = vld [vmem:[#allocation2 + $0x478] sm:$0xf]
    %v2513 = vld [vmem:[#allocation2 + $0x47c] sm:$0xf]
    %v2514 = vpack.c.bf16 %v2497, %v2497
    %v2515 = vld [vmem:[%s4 + $0x10] sm:$0x1]
    %v2532 = vunpack.c.l.b16 %v2498
    %v2533 = vunpack.c.l.b16 %v2499
    %v2534 = vunpack.c.l.b16 %v2500
    %v2535 = vunpack.c.l.b16 %v2501
    %v2536 = vunpack.c.l.b16 %v2502
    %v2537 = vunpack.c.l.b16 %v2503
    %v2538 = vunpack.c.l.b16 %v2504
    %v2539 = vunpack.c.l.b16 %v2505
    %v2540 = vunpack.c.l.b16 %v2506
    %v2541 = vunpack.c.l.b16 %v2507
    %v2542 = vunpack.c.l.b16 %v2508
    %v2543 = vunpack.c.l.b16 %v2509
    %v2544 = vunpack.c.l.b16 %v2510
    %v2545 = vunpack.c.l.b16 %v2511
    %v2546 = vunpack.c.l.b16 %v2512
    %v2547 = vunpack.c.l.b16 %v2513
    %v2548 = vpack.c.b16 %v2533, %v2532
    %v2549 = vpack.c.b16 %v2535, %v2534
    %v2550 = vpack.c.b16 %v2537, %v2536
    %v2551 = vpack.c.b16 %v2539, %v2538
    %v2552 = vpack.c.b16 %v2541, %v2540
    %v2553 = vpack.c.b16 %v2543, %v2542
    %v2554 = vpack.c.b16 %v2545, %v2544
    %v2555 = vpack.c.b16 %v2547, %v2546
    %2564 = vmatprep.subr.bf16.mxu0 0
    %2565 = vmatpush1.bf16.msra.mxu0 %v2555
    %2566 = vmatprep.subr.bf16.mxu0 0
    %2567 = vmatpush1.bf16.msra.mxu0 %v2554
    %2568 = vmatprep.subr.bf16.mxu0 0
    %2569 = vmatpush1.bf16.msra.mxu0 %v2553
    %2570 = vmatprep.subr.bf16.mxu0 0
    %2571 = vmatpush1.bf16.msra.mxu0 %v2552
    %2572 = vmatprep.subr.bf16.mxu0 0
    %2573 = vmatpush1.bf16.msra.mxu0 %v2551
    %2574 = vmatprep.subr.bf16.mxu0 0
    %2575 = vmatpush1.bf16.msra.mxu0 %v2550
    %2576 = vmatprep.subr.bf16.mxu0 0
    %2577 = vmatpush1.bf16.msra.mxu0 %v2549
    %2578 = vmatprep.subr.bf16.mxu0 0
    %2579 = vmatpush1.bf16.msra.mxu0 %v2548
    %2580 = vmatprep.subr.bf16.mxu0 0
    %2581 = vmatpush2.bf16.msra.mxu0 0
    %2582 = vmatprep.subr.bf16.mxu0 0
    %2583 = vmatpush2.bf16.msra.mxu0 0
    %2584 = vmatprep.subr.bf16.mxu0 0
    %2585 = vmatpush2.bf16.msra.mxu0 0
    %2586 = vmatprep.subr.bf16.mxu0 0
    %2587 = vmatpush2.bf16.msra.mxu0 0
    %2588 = vmatprep.subr.bf16.mxu0 0
    %2589 = vmatpush2.bf16.msra.mxu0 0
    %2590 = vmatprep.subr.bf16.mxu0 0
    %2591 = vmatpush2.bf16.msra.mxu0 0
    %2592 = vmatprep.subr.bf16.mxu0 0
    %2593 = vmatpush2.bf16.msra.mxu0 0
    %2594 = vmatprep.subr.bf16.mxu0 0
    %2595 = vmatpush2.bf16.msra.mxu0 0
    %2596 = vmatprep.mubr.bf16.mxu0 0
    %2597 = vmatmul.mubr.bf16.gmra.mxu0 %v2514
    %v2598 = vpop.f32.mrf.mxu0
    %v2599 = vadd.f32 %v2515, %v2598
    %v2600 = vpop.f32.mrf.mxu0
    %v2601 = vpop.f32.mrf.mxu0
    %v2602 = vpop.f32.mrf.mxu0
    %2603 = vdwg.mxu0
    %vm2604 = vcmp.gt.f32.partialorder %v2599, 0.0
    %v2605 = vmin.f32 %v2599, 0.0
    %v2606 = vmul.f32 %v2605, 1.442695
    %v2607 = vpow.pop %v2606
    %v2608 = vsub.f32 %v2607, 1.0
    %v2609 = vsel %vm2604, %v2599, %v2608
    %v2610 = vld [vmem:[%s4 + $0x11] sm:$0x1]
    %v2611 = vmul.f32 %v2609, %v2610
    %vm2612 = vcmask 1040384
    %v2613 = vsel %vm2612, %v2611, 0.0
    %2614 = vadd.xlane.f32.xlu0 %v2613
    %v2615 = vpop.xlane.xlu0 %2614
    %v2616 = vld [vmem:[%s4 + $0x12] sm:$0x1]
    %v2617 = vadd.f32 %v2615, %v2616
    %v2618 = vsub.f32 0.0, %v2617
    %v2619 = vmul.f32 %v2618, 1.442695
    %v2620 = vpow.pop %v2619
    %v2621 = vadd.f32 %v2620, 1.0
    %v2622 = vrcp.pop %v2621
    %v2623 = vmul.f32 1.0, %v2622
    %2625 = vset.pattern.permute.xlu0 0
    %2626 = vperm.xlu0 %2625, %v2623
    %v2627 = vpop.permute.xlu0 %2626
    %2629 = vst [vmem:[#allocation5 + $0x11] sm:$0x1] %v2627
    %2630 = vst [vmem:[#allocation5 + $0x12] sm:$0x3f] 0.0
    // Predicated region
    $region26: #{_fused_call_impl.1} parent=1 // pred_check
      _
    $region27: #{_fused_call_impl.1} parent=1 // pred_check_branch
      %2632 = sbr.rel (0) target = $region29
    $region28: #{_fused_call_impl.1} parent=1 // pred_region
      %s2634 = ssub.s32 384, 384
      %2635 = vsyncadd [#allocation4], %s2634
      %s2636 = sshll.u32 [#allocation5], 4
      %s2637 = int_to_ptr.vmem [resolvable:$true] %s2636
      %2642 = dma.vmem_to_hbm [thread:$0]  %s2637, 384, %s5, [#allocation4], 128, 128, 8
    $region29: #{_fused_call_impl.1} parent=1 // pred_fallthru
      _
    // Predicated region
    $region30: #{_fused_call_impl.1} parent=1 // pred_check
      _
    $region31: #{_fused_call_impl.1} parent=1 // pred_check_branch
      %2644 = sbr.rel (0) target = $region33
    $region32: #{_fused_call_impl.1} parent=1 // pred_region
      %2645 = dma.done [#allocation4], 384
    $region33: #{_fused_call_impl.1} parent=1 // pred_fallthru
      _
    %2646 = vsyncpa [#allocation3], 1
    %2647 = vsyncpa [#allocation4], 1

</llo_original>
